<compile_context>
chip_gen: v7x
topology: tpu7x:2x2x1
jax: 0.10.0
libtpu: 0.0.40
codegen_flags: <defaults>
</compile_context>

<pallas_src>
import functools
import math

import jax
import jax.numpy as jnp
from jax.experimental import pallas as pl
from jax.experimental.pallas import tpu as pltpu

# Operand dtype fed to the MXU.  Switch to jnp.bfloat16 for 2x MXU rate on
# v6e/v7x (accumulation stays f32); kept f32 here to match PyTorch numerics.
MATMUL_DTYPE = jnp.float32


# ------------------------------ small helpers ------------------------------ #

def _round_up(x, m):
    return ((x + m - 1) // m) * m


def _fit_tile(dim, desired):
    """Return (padded_dim, tile). Small dims use one full-extent tile (always a
    legal block shape); large dims use `desired`-sized (8/128-aligned) tiles."""
    if dim <= desired:
        return dim, dim
    return _round_up(dim, desired), desired


def _pad2(a, rows, cols):
    r, c = a.shape
    if r == rows and c == cols:
        return a
    return jnp.pad(a, ((0, rows - r), (0, cols - c)))


# ----------------------------- Pallas kernels ------------------------------ #

def _matmul_kernel(*refs, n_k, has_residual):
    """K-tiled (x @ w + b [+ residual]) with an f32 VMEM accumulator."""
    if has_residual:
        x_ref, w_ref, b_ref, r_ref, o_ref, acc_ref = refs
    else:
        x_ref, w_ref, b_ref, o_ref, acc_ref = refs
        r_ref = None

    @pl.when(pl.program_id(2) == 0)
    def _():
        acc_ref[...] = jnp.zeros_like(acc_ref)

    acc_ref[...] += jnp.dot(
        x_ref[...].astype(MATMUL_DTYPE),
        w_ref[...].astype(MATMUL_DTYPE),
        preferred_element_type=jnp.float32)

    @pl.when(pl.program_id(2) == n_k - 1)
    def _():
        y = acc_ref[...] + b_ref[...].astype(jnp.float32)
        if has_residual:
            y = y + r_ref[...].astype(jnp.float32)
        o_ref[...] = y.astype(o_ref.dtype)


def pallas_linear(x, w, b, residual=None, *, tm=256, tn=256, tk=512):
    """Tiled linear: x @ w + b (+ residual), grid (M, N, K)."""
    M, K = x.shape
    N = w.shape[1]
    Mp, bm = _fit_tile(M, tm)
    Np, bn = _fit_tile(N, tn)
    Kp, bk = _fit_tile(K, tk)
    n_k = Kp // bk

    xp = _pad2(x, Mp, Kp)
    wp = _pad2(w, Kp, Np)
    bp = _pad2(b.reshape(1, N), 1, Np)

    in_specs = [
        pl.BlockSpec((bm, bk), lambda i, j, k: (i, k)),
        pl.BlockSpec((bk, bn), lambda i, j, k: (k, j)),
        pl.BlockSpec((1, bn), lambda i, j, k: (0, j)),
    ]
    args = [xp, wp, bp]
    if residual is not None:
        in_specs.append(pl.BlockSpec((bm, bn), lambda i, j, k: (i, j)))
        args.append(_pad2(residual, Mp, Np))

    out = pl.pallas_call(
        functools.partial(_matmul_kernel, n_k=n_k,
                          has_residual=residual is not None),
        out_shape=jax.ShapeDtypeStruct((Mp, Np), x.dtype),
        grid=(Mp // bm, Np // bn, n_k),
        in_specs=in_specs,
        out_specs=pl.BlockSpec((bm, bn), lambda i, j, k: (i, j)),
        scratch_shapes=[pltpu.VMEM((bm, bn), jnp.float32)],
        compiler_params=pltpu.CompilerParams(
            dimension_semantics=("parallel", "parallel", "arbitrary")),
    )(*args)
    if (Mp, Np) != (M, N):
        out = out[:M, :N]
    return out


def _ln_matmul_kernel(x_ref, g_ref, bln_ref, w_ref, b_ref, o_ref, *, eps):
    """LayerNorm(x) @ w + b, full feature dim per block (stats in f32)."""
    x = x_ref[...].astype(jnp.float32)
    mean = jnp.mean(x, axis=-1, keepdims=True)
    var = jnp.mean(jnp.square(x - mean), axis=-1, keepdims=True)
    xn = (x - mean) * jax.lax.rsqrt(var + eps)
    xn = xn * g_ref[...].astype(jnp.float32) + bln_ref[...].astype(jnp.float32)
    y = jnp.dot(xn.astype(MATMUL_DTYPE), w_ref[...].astype(MATMUL_DTYPE),
                preferred_element_type=jnp.float32)
    o_ref[...] = (y + b_ref[...].astype(jnp.float32)).astype(o_ref.dtype)


def pallas_ln_linear(x, g, bln, w, b, *, tm=256, tn=256, eps=1e-5):
    """Fused LayerNorm + Linear, grid (M, N).  K (= the normalized feature dim)
    is kept whole per block so the LN statistics are exact."""
    M, D = x.shape
    N = w.shape[1]
    Mp, bm = _fit_tile(M, tm)
    Np, bn = _fit_tile(N, tn)

    xp = _pad2(x, Mp, D)
    wp = _pad2(w, D, Np)
    bp = _pad2(b.reshape(1, N), 1, Np)

    out = pl.pallas_call(
        functools.partial(_ln_matmul_kernel, eps=eps),
        out_shape=jax.ShapeDtypeStruct((Mp, Np), x.dtype),
        grid=(Mp // bm, Np // bn),
        in_specs=[
            pl.BlockSpec((bm, D), lambda i, j: (i, 0)),
            pl.BlockSpec((1, D), lambda i, j: (0, 0)),
            pl.BlockSpec((1, D), lambda i, j: (0, 0)),
            pl.BlockSpec((D, bn), lambda i, j: (0, j)),
            pl.BlockSpec((1, bn), lambda i, j: (0, j)),
        ],
        out_specs=pl.BlockSpec((bm, bn), lambda i, j: (i, j)),
        compiler_params=pltpu.CompilerParams(
            dimension_semantics=("parallel", "parallel")),
    )(xp, g.reshape(1, D), bln.reshape(1, D), wp, bp)
    if (Mp, Np) != (M, N):
        out = out[:M, :N]
    return out


def _attention_kernel(qkv_ref, o_ref, *, n_heads, scale, seq_len, seq_pad):
    """All heads of one batch element per grid step.

    qkv block: (1, S_pad, 3*D) with q | k | v concatenated on the feature axis
    (head h of q occupies columns h*Dh:(h+1)*Dh, etc.).  Output block is the
    lane-dense (1, S_pad, D) context in (seq, head*Dh) order, ready for the
    output projection without any transpose.
    """
    qkv = qkv_ref[0].astype(jnp.float32)            # (S_pad, 3*D)
    d = qkv.shape[-1] // 3
    dh = d // n_heads

    need_mask = seq_len < seq_pad
    if need_mask:
        key_ok = jax.lax.broadcasted_iota(jnp.int32, (seq_pad, seq_pad), 1) < seq_len

    ctx_heads = []
    for h in range(n_heads):                        # static unroll over heads
        qh = qkv[:, h * dh:(h + 1) * dh] * scale
        kh = qkv[:, d + h * dh:d + (h + 1) * dh]
        vh = qkv[:, 2 * d + h * dh:2 * d + (h + 1) * dh]
        # contract on the head dim of both operands -> no materialized k^T
        s = jax.lax.dot_general(qh, kh, (((1,), (1,)), ((), ())),
                                preferred_element_type=jnp.float32)
        if need_mask:
            s = jnp.where(key_ok, s, -1e30)         # mask padded keys
        m = jnp.max(s, axis=-1, keepdims=True)
        p = jnp.exp(s - m)
        denom = jnp.sum(p, axis=-1, keepdims=True)
        p = p * pl.reciprocal(denom, approx=True)   # EUP slot, frees VALU
        ctx_heads.append(jnp.dot(p, vh, preferred_element_type=jnp.float32))
    o_ref[0] = jnp.concatenate(ctx_heads, axis=-1).astype(o_ref.dtype)


def pallas_attention(qkv, n_heads, seq_len):
    """qkv: (B, S_pad, 3*D).  Returns context (B, S_pad, D)."""
    B, S_pad, threeD = qkv.shape
    D = threeD // 3
    scale = 1.0 / math.sqrt(D // n_heads)
    kernel = functools.partial(_attention_kernel, n_heads=n_heads, scale=scale,
                               seq_len=seq_len, seq_pad=S_pad)
    return pl.pallas_call(
        kernel,
        out_shape=jax.ShapeDtypeStruct((B, S_pad, D), qkv.dtype),
        grid=(B,),
        in_specs=[pl.BlockSpec((1, S_pad, threeD), lambda b: (b, 0, 0))],
        out_specs=pl.BlockSpec((1, S_pad, D), lambda b: (b, 0, 0)),
        compiler_params=pltpu.CompilerParams(dimension_semantics=("parallel",)),
    )(qkv)


# ------------------------------ parameters --------------------------------- #

def init_params(key, *, patch_size, image_size, in_channels, n_classes,
                embed_dim, n_encoder, n_heads):
    del n_heads  # head split is a reshape; no extra params
    n_patches = (image_size // patch_size) ** 2
    patch_dim = in_channels * patch_size * patch_size
    keys = jax.random.split(key, n_encoder + 4)

    def dense(k, fan_in, fan_out):
        return jax.random.normal(k, (fan_in, fan_out), jnp.float32) / math.sqrt(fan_in)

    params = {
        "patch_w": dense(keys[0], patch_dim, embed_dim),   # conv weight as (C*ps*ps, D)
        "patch_b": jnp.zeros((embed_dim,), jnp.float32),
        "cls": jax.random.normal(keys[1], (1, 1, embed_dim), jnp.float32) * 0.02,
        "pos": jax.random.normal(keys[2], (1, n_patches + 1, embed_dim), jnp.float32) * 0.02,
        "head_ln_g": jnp.ones((embed_dim,), jnp.float32),
        "head_ln_b": jnp.zeros((embed_dim,), jnp.float32),
        "head_w": dense(keys[3 + n_encoder], embed_dim, n_classes),
        "head_b": jnp.zeros((n_classes,), jnp.float32),
    }
    layers = []
    for li in range(n_encoder):
        lk = jax.random.split(keys[3 + li], 4)
        layers.append(dict(
            ln1_g=jnp.ones((embed_dim,), jnp.float32),
            ln1_b=jnp.zeros((embed_dim,), jnp.float32),
            w_qkv=dense(lk[0], embed_dim, 3 * embed_dim),
            b_qkv=jnp.zeros((3 * embed_dim,), jnp.float32),
            w_o=dense(lk[1], embed_dim, embed_dim),
            b_o=jnp.zeros((embed_dim,), jnp.float32),
            ln2_g=jnp.ones((embed_dim,), jnp.float32),
            ln2_b=jnp.zeros((embed_dim,), jnp.float32),
            w1=dense(lk[2], embed_dim, 4 * embed_dim),
            b1=jnp.zeros((4 * embed_dim,), jnp.float32),
            w2=dense(lk[3], 4 * embed_dim, embed_dim),
            b2=jnp.zeros((embed_dim,), jnp.float32),
        ))
    params["layers"] = layers
    return params


# ------------------------------- forward ----------------------------------- #

def vit_forward(x, params, *, patch_size, n_heads):
    B, C, H, W = x.shape
    ps = patch_size
    nh, nw = H // ps, W // ps
    D = params["patch_w"].shape[1]

    # Patch embedding: Conv2d(kernel=stride=ps) == matmul over flattened (c,i,j)
    # patches.  (Note: matches weight.reshape(D, C*ps*ps).T if porting weights.)
    patches = x.reshape(B, C, nh, ps, nw, ps)
    patches = patches.transpose(0, 2, 4, 1, 3, 5).reshape(B * nh * nw, C * ps * ps)
    emb = pallas_linear(patches, params["patch_w"], params["patch_b"])
    emb = emb.reshape(B, nh * nw, D)

    cls = jnp.broadcast_to(params["cls"], (B, 1, D))
    tokens = jnp.concatenate([cls, emb], axis=1) + params["pos"]    # (B, S, D)
    S = nh * nw + 1

    # Pad the sequence once to a multiple of 8 (sublane aligned rows everywhere);
    # attention masks the padded keys, padded rows are never read at the end.
    S_pad = _round_up(S, 8)
    if S_pad != S:
        tokens = jnp.pad(tokens, ((0, 0), (0, S_pad - S), (0, 0)))
    M = B * S_pad
    tokens2d = tokens.reshape(M, D)

    # Dropout layers (mlp_dropout_p / attn_dropout_p) are identity in eval mode.
    for layer in params["layers"]:
        # --- pre-norm multi-head self-attention + residual ---
        qkv = pallas_ln_linear(tokens2d, layer["ln1_g"], layer["ln1_b"],
                               layer["w_qkv"], layer["b_qkv"])       # (M, 3D)
        ctx = pallas_attention(qkv.reshape(B, S_pad, 3 * D), n_heads, S)
        tokens2d = pallas_linear(ctx.reshape(M, D), layer["w_o"], layer["b_o"],
                                 residual=tokens2d)                  # +bias+residual fused

        # --- pre-norm MLP (Linear -> GELU -> Linear) + residual ---
        h = pallas_ln_linear(tokens2d, layer["ln2_g"], layer["ln2_b"],
                             layer["w1"], layer["b1"])               # (M, 4D)
        # TODO(synk): fold the exact erf-GELU into the kernel once Mosaic
        # exposes an erf lowering; kept in XLA to preserve nn.GELU() numerics.
        h = 0.5 * h * (1.0 + jax.lax.erf(h * (1.0 / math.sqrt(2.0))))
        tokens2d = pallas_linear(h, layer["w2"], layer["b2"],
                                 residual=tokens2d)                  # +bias+residual fused

    # MLP head on the class token (index 0): LayerNorm -> Linear, fused.
    cls_tok = tokens2d.reshape(B, S_pad, D)[:, 0]                    # (B, D)
    logits = pallas_ln_linear(cls_tok, params["head_ln_g"], params["head_ln_b"],
                              params["head_w"], params["head_b"])    # (B, n_classes)
    return logits


# --------------------------------- main ------------------------------------ #

if __name__ == "__main__":
    patch_size, image_size, in_channels = 4, 16, 4
    n_classes, embed_dim, n_encoder, n_heads = 8, 32, 2, 4
    batch = 2

    key = jax.random.PRNGKey(0)
    pkey, xkey = jax.random.split(key)
    params = init_params(
        pkey,
        patch_size=patch_size, image_size=image_size, in_channels=in_channels,
        n_classes=n_classes, embed_dim=embed_dim, n_encoder=n_encoder,
        n_heads=n_heads,
    )
    x = jax.random.normal(xkey, (batch, in_channels, image_size, image_size), jnp.float32)

    fwd = jax.jit(functools.partial(vit_forward, patch_size=patch_size, n_heads=n_heads))
    logits = fwd(x, params)
    jax.block_until_ready(logits)
    assert logits.shape == (batch, n_classes)
    assert bool(jnp.all(jnp.isfinite(logits)))
    print("KERNEL_OK")
</pallas_src>

<mosaic_0001>
module attributes {stable_mosaic.version = 11 : i64} {
  func.func @_matmul_kernel(%arg0: i32, %arg1: i32, %arg2: i32, %arg3: memref<32x64xf32, #tpu.memory_space<vmem>>, %arg4: memref<64x32xf32, #tpu.memory_space<vmem>>, %arg5: memref<1x32xf32, #tpu.memory_space<vmem>>, %arg6: memref<32x32xf32, #tpu.memory_space<vmem>>, %arg7: memref<32x32xf32, #tpu.memory_space<vmem>>) attributes {dimension_semantics = [#tpu.dimension_semantics<parallel>, #tpu.dimension_semantics<parallel>, #tpu.dimension_semantics<arbitrary>], iteration_bounds = array<i64: 1, 1, 1>, scalar_prefetch = 0 : i64, scratch_operands = 1 : i64, tpu.core_type = #tpu.core_type<tc>, window_params = [{transform_indices = @transform_0, window_bounds = array<i64: 32, 64>}, {transform_indices = @transform_1, window_bounds = array<i64: 64, 32>}, {transform_indices = @transform_2, window_bounds = array<i64: 1, 32>}, {transform_indices = @transform_3, window_bounds = array<i64: 32, 32>}]} {
    %c0_i32 = arith.constant 0 : i32
    %0 = arith.cmpi eq, %arg2, %c0_i32 : i32
    %1 = arith.extui %0 : i1 to i32
    %c0_i32_0 = arith.constant 0 : i32
    %2 = arith.cmpi ne, %1, %c0_i32_0 : i32
    scf.if %2 {
      %cst_10 = arith.constant 0.000000e+00 : f32
      %12 = vector.broadcast %cst_10 : f32 to vector<32x32xf32>
      %c0_11 = arith.constant 0 : index
      %c0_12 = arith.constant 0 : index
      %13 = vector.load %arg7[%c0_11, %c0_12] : memref<32x32xf32, #tpu.memory_space<vmem>>, vector<32x32xf32>
      tpu.vector_store %arg7[%c0_11, %c0_12], %12 {strides = array<i32>} : memref<32x32xf32, #tpu.memory_space<vmem>>, vector<32x32xf32>,
    } else {
    }
    %c0 = arith.constant 0 : index
    %c0_1 = arith.constant 0 : index
    %3 = vector.load %arg7[%c0, %c0_1] : memref<32x32xf32, #tpu.memory_space<vmem>>, vector<32x32xf32>
    %c0_2 = arith.constant 0 : index
    %c0_3 = arith.constant 0 : index
    %4 = vector.load %arg3[%c0_2, %c0_3] : memref<32x64xf32, #tpu.memory_space<vmem>>, vector<32x64xf32>
    %c0_4 = arith.constant 0 : index
    %c0_5 = arith.constant 0 : index
    %5 = vector.load %arg4[%c0_4, %c0_5] : memref<64x32xf32, #tpu.memory_space<vmem>>, vector<64x32xf32>
    %cst = arith.constant dense<0.000000e+00> : vector<32x32xf32>
    %6 = tpu.matmul %4, %5, %cst {dimension_numbers = #tpu.dot_dimension_numbers<[1], [0], [0], [1], [0, 0, 1, 1], [], []>} : vector<32x64xf32>, vector<64x32xf32>, vector<32x32xf32> -> vector<32x32xf32>
    %7 = arith.addf %3, %6 : vector<32x32xf32>
    %c0_6 = arith.constant 0 : index
    %c0_7 = arith.constant 0 : index
    %8 = vector.load %arg7[%c0_6, %c0_7] : memref<32x32xf32, #tpu.memory_space<vmem>>, vector<32x32xf32>
    tpu.vector_store %arg7[%c0_6, %c0_7], %7 {strides = array<i32>} : memref<32x32xf32, #tpu.memory_space<vmem>>, vector<32x32xf32>,
    %c0_i32_8 = arith.constant 0 : i32
    %9 = arith.cmpi eq, %arg2, %c0_i32_8 : i32
    %10 = arith.extui %9 : i1 to i32
    %c0_i32_9 = arith.constant 0 : i32
    %11 = arith.cmpi ne, %10, %c0_i32_9 : i32
    scf.if %11 {
      %c0_10 = arith.constant 0 : index
      %c0_11 = arith.constant 0 : index
      %12 = vector.load %arg7[%c0_10, %c0_11] : memref<32x32xf32, #tpu.memory_space<vmem>>, vector<32x32xf32>
      %c0_12 = arith.constant 0 : index
      %c0_13 = arith.constant 0 : index
      %13 = vector.load %arg5[%c0_12, %c0_13] : memref<1x32xf32, #tpu.memory_space<vmem>>, vector<1x32xf32>
      %14 = vector.broadcast %13 : vector<1x32xf32> to vector<32x32xf32>
      %15 = arith.addf %12, %14 : vector<32x32xf32>
      %c0_14 = arith.constant 0 : index
      %c0_15 = arith.constant 0 : index
      %16 = vector.load %arg6[%c0_14, %c0_15] : memref<32x32xf32, #tpu.memory_space<vmem>>, vector<32x32xf32>
      tpu.vector_store %arg6[%c0_14, %c0_15], %15 {strides = array<i32>} : memref<32x32xf32, #tpu.memory_space<vmem>>, vector<32x32xf32>,
    } else {
    }
    return
  }
  func.func @transform_0(%arg0: i32, %arg1: i32, %arg2: i32) -> (i32, i32) {
    %c0_i32 = arith.constant 0 : i32
    return %arg0, %arg2 : i32, i32
  }
  func.func @transform_1(%arg0: i32, %arg1: i32, %arg2: i32) -> (i32, i32) {
    %c0_i32 = arith.constant 0 : i32
    return %arg2, %arg1 : i32, i32
  }
  func.func @transform_2(%arg0: i32, %arg1: i32, %arg2: i32) -> (i32, i32) {
    %c0_i32 = arith.constant 0 : i32
    %c0_i32_0 = arith.constant 0 : i32
    return %c0_i32, %arg1 : i32, i32
  }
  func.func @transform_3(%arg0: i32, %arg1: i32, %arg2: i32) -> (i32, i32) {
    %c0_i32 = arith.constant 0 : i32
    return %arg0, %arg1 : i32, i32
  }
}

module attributes {stable_mosaic.version = 11 : i64} {
  func.func @_ln_matmul_kernel(%arg0: i32, %arg1: i32, %arg2: memref<48x32xf32, #tpu.memory_space<vmem>>, %arg3: memref<1x32xf32, #tpu.memory_space<vmem>>, %arg4: memref<1x32xf32, #tpu.memory_space<vmem>>, %arg5: memref<32x96xf32, #tpu.memory_space<vmem>>, %arg6: memref<1x96xf32, #tpu.memory_space<vmem>>, %arg7: memref<48x96xf32, #tpu.memory_space<vmem>>) attributes {dimension_semantics = [#tpu.dimension_semantics<parallel>, #tpu.dimension_semantics<parallel>], iteration_bounds = array<i64: 1, 1>, scalar_prefetch = 0 : i64, scratch_operands = 0 : i64, tpu.core_type = #tpu.core_type<tc>, window_params = [{transform_indices = @transform_0, window_bounds = array<i64: 48, 32>}, {pipeline_mode = #tpu.pipeline_mode<synchronous>, transform_indices = @transform_1, window_bounds = array<i64: 1, 32>}, {pipeline_mode = #tpu.pipeline_mode<synchronous>, transform_indices = @transform_2, window_bounds = array<i64: 1, 32>}, {transform_indices = @transform_3, window_bounds = array<i64: 32, 96>}, {transform_indices = @transform_4, window_bounds = array<i64: 1, 96>}, {transform_indices = @transform_5, window_bounds = array<i64: 48, 96>}]} {
    %c0 = arith.constant 0 : index
    %c0_0 = arith.constant 0 : index
    %0 = vector.load %arg2[%c0, %c0_0] : memref<48x32xf32, #tpu.memory_space<vmem>>, vector<48x32xf32>
    %cst = arith.constant dense<0.000000e+00> : vector<48xf32>
    %1 = vector.multi_reduction <add>, %0, %cst [1] : vector<48x32xf32> to vector<48xf32>
    %2 = vector.shape_cast %1 : vector<48xf32> to vector<48x1xf32>
    %cst_1 = arith.constant 3.200000e+01 : f32
    %3 = vector.broadcast %cst_1 : f32 to vector<48x1xf32>
    %4 = arith.divf %2, %3 : vector<48x1xf32>
    %5 = vector.broadcast %4 : vector<48x1xf32> to vector<48x32xf32>
    %6 = arith.subf %0, %5 : vector<48x32xf32>
    %7 = arith.mulf %6, %6 : vector<48x32xf32>
    %cst_2 = arith.constant dense<0.000000e+00> : vector<48xf32>
    %8 = vector.multi_reduction <add>, %7, %cst_2 [1] : vector<48x32xf32> to vector<48xf32>
    %9 = vector.shape_cast %8 : vector<48xf32> to vector<48x1xf32>
    %cst_3 = arith.constant 3.200000e+01 : f32
    %10 = vector.broadcast %cst_3 : f32 to vector<48x1xf32>
    %11 = arith.divf %9, %10 : vector<48x1xf32>
    %12 = vector.broadcast %4 : vector<48x1xf32> to vector<48x32xf32>
    %13 = arith.subf %0, %12 : vector<48x32xf32>
    %cst_4 = arith.constant 9.99999974E-6 : f32
    %14 = vector.broadcast %cst_4 : f32 to vector<48x1xf32>
    %15 = arith.addf %11, %14 : vector<48x1xf32>
    %16 = math.rsqrt %15 : vector<48x1xf32>
    %17 = vector.broadcast %16 : vector<48x1xf32> to vector<48x32xf32>
    %18 = arith.mulf %13, %17 : vector<48x32xf32>
    %c0_5 = arith.constant 0 : index
    %c0_6 = arith.constant 0 : index
    %19 = vector.load %arg3[%c0_5, %c0_6] : memref<1x32xf32, #tpu.memory_space<vmem>>, vector<1x32xf32>
    %20 = vector.broadcast %19 : vector<1x32xf32> to vector<48x32xf32>
    %21 = arith.mulf %18, %20 : vector<48x32xf32>
    %c0_7 = arith.constant 0 : index
    %c0_8 = arith.constant 0 : index
    %22 = vector.load %arg4[%c0_7, %c0_8] : memref<1x32xf32, #tpu.memory_space<vmem>>, vector<1x32xf32>
    %23 = vector.broadcast %22 : vector<1x32xf32> to vector<48x32xf32>
    %24 = arith.addf %21, %23 : vector<48x32xf32>
    %c0_9 = arith.constant 0 : index
    %c0_10 = arith.constant 0 : index
    %25 = vector.load %arg5[%c0_9, %c0_10] : memref<32x96xf32, #tpu.memory_space<vmem>>, vector<32x96xf32>
    %cst_11 = arith.constant dense<0.000000e+00> : vector<48x96xf32>
    %26 = tpu.matmul %24, %25, %cst_11 {dimension_numbers = #tpu.dot_dimension_numbers<[1], [0], [0], [1], [0, 0, 1, 1], [], []>} : vector<48x32xf32>, vector<32x96xf32>, vector<48x96xf32> -> vector<48x96xf32>
    %c0_12 = arith.constant 0 : index
    %c0_13 = arith.constant 0 : index
    %27 = vector.load %arg6[%c0_12, %c0_13] : memref<1x96xf32, #tpu.memory_space<vmem>>, vector<1x96xf32>
    %28 = vector.broadcast %27 : vector<1x96xf32> to vector<48x96xf32>
    %29 = arith.addf %26, %28 : vector<48x96xf32>
    %c0_14 = arith.constant 0 : index
    %c0_15 = arith.constant 0 : index
    %30 = vector.load %arg7[%c0_14, %c0_15] : memref<48x96xf32, #tpu.memory_space<vmem>>, vector<48x96xf32>
    tpu.vector_store %arg7[%c0_14, %c0_15], %29 {strides = array<i32>} : memref<48x96xf32, #tpu.memory_space<vmem>>, vector<48x96xf32>,
    return
  }
  func.func @transform_0(%arg0: i32, %arg1: i32) -> (i32, i32) {
    %c0_i32 = arith.constant 0 : i32
    %c0_i32_0 = arith.constant 0 : i32
    return %arg0, %c0_i32 : i32, i32
  }
  func.func @transform_1(%arg0: i32, %arg1: i32) -> (i32, i32) {
    %c0_i32 = arith.constant 0 : i32
    %c0_i32_0 = arith.constant 0 : i32
    %c0_i32_1 = arith.constant 0 : i32
    return %c0_i32, %c0_i32_0 : i32, i32
  }
  func.func @transform_2(%arg0: i32, %arg1: i32) -> (i32, i32) {
    %c0_i32 = arith.constant 0 : i32
    %c0_i32_0 = arith.constant 0 : i32
    %c0_i32_1 = arith.constant 0 : i32
    return %c0_i32, %c0_i32_0 : i32, i32
  }
  func.func @transform_3(%arg0: i32, %arg1: i32) -> (i32, i32) {
    %c0_i32 = arith.constant 0 : i32
    %c0_i32_0 = arith.constant 0 : i32
    return %c0_i32, %arg1 : i32, i32
  }
  func.func @transform_4(%arg0: i32, %arg1: i32) -> (i32, i32) {
    %c0_i32 = arith.constant 0 : i32
    %c0_i32_0 = arith.constant 0 : i32
    return %c0_i32, %arg1 : i32, i32
  }
  func.func @transform_5(%arg0: i32, %arg1: i32) -> (i32, i32) {
    %c0_i32 = arith.constant 0 : i32
    return %arg0, %arg1 : i32, i32
  }
}

module attributes {stable_mosaic.version = 11 : i64} {
  func.func @_attention_kernel(%arg0: i32, %arg1: memref<1x24x96xf32, #tpu.memory_space<vmem>>, %arg2: memref<1x24x32xf32, #tpu.memory_space<vmem>>) attributes {dimension_semantics = [#tpu.dimension_semantics<parallel>], iteration_bounds = array<i64: 2>, scalar_prefetch = 0 : i64, scratch_operands = 0 : i64, tpu.core_type = #tpu.core_type<tc>, window_params = [{transform_indices = @transform_0, window_bounds = array<i64: 1, 24, 96>}, {transform_indices = @transform_1, window_bounds = array<i64: 1, 24, 32>}]} {
    %c0 = arith.constant 0 : index
    %c0_0 = arith.constant 0 : index
    %c0_1 = arith.constant 0 : index
    %0 = vector.load %arg1[%c0, %c0_0, %c0_1] : memref<1x24x96xf32, #tpu.memory_space<vmem>>, vector<1x24x96xf32>
    %1 = vector.shape_cast %0 : vector<1x24x96xf32> to vector<24x96xf32>
    %2 = tpu.iota {dimensions = array<i32: 1>} : vector<24x24xi32>
    %c17_i32 = arith.constant 17 : i32
    %3 = vector.broadcast %c17_i32 : i32 to vector<24x24xi32>
    %4 = arith.cmpi slt, %2, %3 : vector<24x24xi32>
    %5 = vector.extract_strided_slice %1 {offsets = [0, 0], sizes = [24, 8], strides = [1, 1]} : vector<24x96xf32> to vector<24x8xf32>
    %cst = arith.constant 0.353553385 : f32
    %6 = vector.broadcast %cst : f32 to vector<24x8xf32>
    %7 = arith.mulf %5, %6 : vector<24x8xf32>
    %8 = vector.extract_strided_slice %1 {offsets = [0, 32], sizes = [24, 8], strides = [1, 1]} : vector<24x96xf32> to vector<24x8xf32>
    %9 = vector.extract_strided_slice %1 {offsets = [0, 64], sizes = [24, 8], strides = [1, 1]} : vector<24x96xf32> to vector<24x8xf32>
    %cst_2 = arith.constant dense<0.000000e+00> : vector<24x24xf32>
    %10 = tpu.matmul %7, %8, %cst_2 {dimension_numbers = #tpu.dot_dimension_numbers<[1], [1], [0], [0], [0, 0, 1, 0], [], []>} : vector<24x8xf32>, vector<24x8xf32>, vector<24x24xf32> -> vector<24x24xf32>
    %cst_3 = arith.constant -1.000000e+30 : f32
    %11 = vector.broadcast %cst_3 : f32 to vector<24x24xf32>
    %12 = arith.select %4, %10, %11 : vector<24x24xi1>, vector<24x24xf32>
    %cst_4 = arith.constant dense<0xFF800000> : vector<24xf32>
    %13 = vector.multi_reduction <maximumf>, %12, %cst_4 [1] : vector<24x24xf32> to vector<24xf32>
    %14 = vector.shape_cast %13 : vector<24xf32> to vector<24x1xf32>
    %15 = vector.broadcast %14 : vector<24x1xf32> to vector<24x24xf32>
    %16 = arith.subf %12, %15 : vector<24x24xf32>
    %17 = math.exp %16 : vector<24x24xf32>
    %cst_5 = arith.constant dense<0.000000e+00> : vector<24xf32>
    %18 = vector.multi_reduction <add>, %17, %cst_5 [1] : vector<24x24xf32> to vector<24xf32>
    %19 = vector.shape_cast %18 : vector<24xf32> to vector<24x1xf32>
    %20 = tpu.reciprocal %19 {approx = true} : vector<24x1xf32> -> vector<24x1xf32>
    %21 = vector.broadcast %20 : vector<24x1xf32> to vector<24x24xf32>
    %22 = arith.mulf %17, %21 : vector<24x24xf32>
    %cst_6 = arith.constant dense<0.000000e+00> : vector<24x8xf32>
    %23 = tpu.matmul %22, %9, %cst_6 {dimension_numbers = #tpu.dot_dimension_numbers<[1], [0], [0], [1], [0, 0, 1, 1], [], []>} : vector<24x24xf32>, vector<24x8xf32>, vector<24x8xf32> -> vector<24x8xf32>
    %24 = vector.extract_strided_slice %1 {offsets = [0, 8], sizes = [24, 8], strides = [1, 1]} : vector<24x96xf32> to vector<24x8xf32>
    %cst_7 = arith.constant 0.353553385 : f32
    %25 = vector.broadcast %cst_7 : f32 to vector<24x8xf32>
    %26 = arith.mulf %24, %25 : vector<24x8xf32>
    %27 = vector.extract_strided_slice %1 {offsets = [0, 40], sizes = [24, 8], strides = [1, 1]} : vector<24x96xf32> to vector<24x8xf32>
    %28 = vector.extract_strided_slice %1 {offsets = [0, 72], sizes = [24, 8], strides = [1, 1]} : vector<24x96xf32> to vector<24x8xf32>
    %cst_8 = arith.constant dense<0.000000e+00> : vector<24x24xf32>
    %29 = tpu.matmul %26, %27, %cst_8 {dimension_numbers = #tpu.dot_dimension_numbers<[1], [1], [0], [0], [0, 0, 1, 0], [], []>} : vector<24x8xf32>, vector<24x8xf32>, vector<24x24xf32> -> vector<24x24xf32>
    %cst_9 = arith.constant -1.000000e+30 : f32
    %30 = vector.broadcast %cst_9 : f32 to vector<24x24xf32>
    %31 = arith.select %4, %29, %30 : vector<24x24xi1>, vector<24x24xf32>
    %cst_10 = arith.constant dense<0xFF800000> : vector<24xf32>
    %32 = vector.multi_reduction <maximumf>, %31, %cst_10 [1] : vector<24x24xf32> to vector<24xf32>
    %33 = vector.shape_cast %32 : vector<24xf32> to vector<24x1xf32>
    %34 = vector.broadcast %33 : vector<24x1xf32> to vector<24x24xf32>
    %35 = arith.subf %31, %34 : vector<24x24xf32>
    %36 = math.exp %35 : vector<24x24xf32>
    %cst_11 = arith.constant dense<0.000000e+00> : vector<24xf32>
    %37 = vector.multi_reduction <add>, %36, %cst_11 [1] : vector<24x24xf32> to vector<24xf32>
    %38 = vector.shape_cast %37 : vector<24xf32> to vector<24x1xf32>
    %39 = tpu.reciprocal %38 {approx = true} : vector<24x1xf32> -> vector<24x1xf32>
    %40 = vector.broadcast %39 : vector<24x1xf32> to vector<24x24xf32>
    %41 = arith.mulf %36, %40 : vector<24x24xf32>
    %cst_12 = arith.constant dense<0.000000e+00> : vector<24x8xf32>
    %42 = tpu.matmul %41, %28, %cst_12 {dimension_numbers = #tpu.dot_dimension_numbers<[1], [0], [0], [1], [0, 0, 1, 1], [], []>} : vector<24x24xf32>, vector<24x8xf32>, vector<24x8xf32> -> vector<24x8xf32>
    %43 = vector.extract_strided_slice %1 {offsets = [0, 16], sizes = [24, 8], strides = [1, 1]} : vector<24x96xf32> to vector<24x8xf32>
    %cst_13 = arith.constant 0.353553385 : f32
    %44 = vector.broadcast %cst_13 : f32 to vector<24x8xf32>
    %45 = arith.mulf %43, %44 : vector<24x8xf32>
    %46 = vector.extract_strided_slice %1 {offsets = [0, 48], sizes = [24, 8], strides = [1, 1]} : vector<24x96xf32> to vector<24x8xf32>
    %47 = vector.extract_strided_slice %1 {offsets = [0, 80], sizes = [24, 8], strides = [1, 1]} : vector<24x96xf32> to vector<24x8xf32>
    %cst_14 = arith.constant dense<0.000000e+00> : vector<24x24xf32>
    %48 = tpu.matmul %45, %46, %cst_14 {dimension_numbers = #tpu.dot_dimension_numbers<[1], [1], [0], [0], [0, 0, 1, 0], [], []>} : vector<24x8xf32>, vector<24x8xf32>, vector<24x24xf32> -> vector<24x24xf32>
    %cst_15 = arith.constant -1.000000e+30 : f32
    %49 = vector.broadcast %cst_15 : f32 to vector<24x24xf32>
    %50 = arith.select %4, %48, %49 : vector<24x24xi1>, vector<24x24xf32>
    %cst_16 = arith.constant dense<0xFF800000> : vector<24xf32>
    %51 = vector.multi_reduction <maximumf>, %50, %cst_16 [1] : vector<24x24xf32> to vector<24xf32>
    %52 = vector.shape_cast %51 : vector<24xf32> to vector<24x1xf32>
    %53 = vector.broadcast %52 : vector<24x1xf32> to vector<24x24xf32>
    %54 = arith.subf %50, %53 : vector<24x24xf32>
    %55 = math.exp %54 : vector<24x24xf32>
    %cst_17 = arith.constant dense<0.000000e+00> : vector<24xf32>
    %56 = vector.multi_reduction <add>, %55, %cst_17 [1] : vector<24x24xf32> to vector<24xf32>
    %57 = vector.shape_cast %56 : vector<24xf32> to vector<24x1xf32>
    %58 = tpu.reciprocal %57 {approx = true} : vector<24x1xf32> -> vector<24x1xf32>
    %59 = vector.broadcast %58 : vector<24x1xf32> to vector<24x24xf32>
    %60 = arith.mulf %55, %59 : vector<24x24xf32>
    %cst_18 = arith.constant dense<0.000000e+00> : vector<24x8xf32>
    %61 = tpu.matmul %60, %47, %cst_18 {dimension_numbers = #tpu.dot_dimension_numbers<[1], [0], [0], [1], [0, 0, 1, 1], [], []>} : vector<24x24xf32>, vector<24x8xf32>, vector<24x8xf32> -> vector<24x8xf32>
    %62 = vector.extract_strided_slice %1 {offsets = [0, 24], sizes = [24, 8], strides = [1, 1]} : vector<24x96xf32> to vector<24x8xf32>
    %cst_19 = arith.constant 0.353553385 : f32
    %63 = vector.broadcast %cst_19 : f32 to vector<24x8xf32>
    %64 = arith.mulf %62, %63 : vector<24x8xf32>
    %65 = vector.extract_strided_slice %1 {offsets = [0, 56], sizes = [24, 8], strides = [1, 1]} : vector<24x96xf32> to vector<24x8xf32>
    %66 = vector.extract_strided_slice %1 {offsets = [0, 88], sizes = [24, 8], strides = [1, 1]} : vector<24x96xf32> to vector<24x8xf32>
    %cst_20 = arith.constant dense<0.000000e+00> : vector<24x24xf32>
    %67 = tpu.matmul %64, %65, %cst_20 {dimension_numbers = #tpu.dot_dimension_numbers<[1], [1], [0], [0], [0, 0, 1, 0], [], []>} : vector<24x8xf32>, vector<24x8xf32>, vector<24x24xf32> -> vector<24x24xf32>
    %cst_21 = arith.constant -1.000000e+30 : f32
    %68 = vector.broadcast %cst_21 : f32 to vector<24x24xf32>
    %69 = arith.select %4, %67, %68 : vector<24x24xi1>, vector<24x24xf32>
    %cst_22 = arith.constant dense<0xFF800000> : vector<24xf32>
    %70 = vector.multi_reduction <maximumf>, %69, %cst_22 [1] : vector<24x24xf32> to vector<24xf32>
    %71 = vector.shape_cast %70 : vector<24xf32> to vector<24x1xf32>
    %72 = vector.broadcast %71 : vector<24x1xf32> to vector<24x24xf32>
    %73 = arith.subf %69, %72 : vector<24x24xf32>
    %74 = math.exp %73 : vector<24x24xf32>
    %cst_23 = arith.constant dense<0.000000e+00> : vector<24xf32>
    %75 = vector.multi_reduction <add>, %74, %cst_23 [1] : vector<24x24xf32> to vector<24xf32>
    %76 = vector.shape_cast %75 : vector<24xf32> to vector<24x1xf32>
    %77 = tpu.reciprocal %76 {approx = true} : vector<24x1xf32> -> vector<24x1xf32>
    %78 = vector.broadcast %77 : vector<24x1xf32> to vector<24x24xf32>
    %79 = arith.mulf %74, %78 : vector<24x24xf32>
    %cst_24 = arith.constant dense<0.000000e+00> : vector<24x8xf32>
    %80 = tpu.matmul %79, %66, %cst_24 {dimension_numbers = #tpu.dot_dimension_numbers<[1], [0], [0], [1], [0, 0, 1, 1], [], []>} : vector<24x24xf32>, vector<24x8xf32>, vector<24x8xf32> -> vector<24x8xf32>
    %81 = tpu.concatenate %23, %42, %61, %80 in 1 : vector<24x8xf32>, vector<24x8xf32>, vector<24x8xf32>, vector<24x8xf32> -> vector<24x32xf32>
    %c0_25 = arith.constant 0 : index
    %c0_26 = arith.constant 0 : index
    %c0_27 = arith.constant 0 : index
    %82 = vector.load %arg2[%c0_25, %c0_26, %c0_27] : memref<1x24x32xf32, #tpu.memory_space<vmem>>, vector<1x24x32xf32>
    %83 = vector.shape_cast %82 : vector<1x24x32xf32> to vector<24x32xf32>
    %84 = vector.shape_cast %81 : vector<24x32xf32> to vector<1x24x32xf32>
    tpu.vector_store %arg2[%c0_25, %c0_26, %c0_27], %84 {strides = array<i32>} : memref<1x24x32xf32, #tpu.memory_space<vmem>>, vector<1x24x32xf32>,
    return
  }
  func.func @transform_0(%arg0: i32) -> (i32, i32, i32) {
    %c0_i32 = arith.constant 0 : i32
    %c0_i32_0 = arith.constant 0 : i32
    %c0_i32_1 = arith.constant 0 : i32
    return %arg0, %c0_i32, %c0_i32_0 : i32, i32, i32
  }
  func.func @transform_1(%arg0: i32) -> (i32, i32, i32) {
    %c0_i32 = arith.constant 0 : i32
    %c0_i32_0 = arith.constant 0 : i32
    %c0_i32_1 = arith.constant 0 : i32
    return %arg0, %c0_i32, %c0_i32_0 : i32, i32, i32
  }
}

module attributes {stable_mosaic.version = 11 : i64} {
  func.func @_matmul_kernel(%arg0: i32, %arg1: i32, %arg2: i32, %arg3: memref<48x32xf32, #tpu.memory_space<vmem>>, %arg4: memref<32x32xf32, #tpu.memory_space<vmem>>, %arg5: memref<1x32xf32, #tpu.memory_space<vmem>>, %arg6: memref<48x32xf32, #tpu.memory_space<vmem>>, %arg7: memref<48x32xf32, #tpu.memory_space<vmem>>, %arg8: memref<48x32xf32, #tpu.memory_space<vmem>>) attributes {dimension_semantics = [#tpu.dimension_semantics<parallel>, #tpu.dimension_semantics<parallel>, #tpu.dimension_semantics<arbitrary>], iteration_bounds = array<i64: 1, 1, 1>, scalar_prefetch = 0 : i64, scratch_operands = 1 : i64, tpu.core_type = #tpu.core_type<tc>, window_params = [{transform_indices = @transform_0, window_bounds = array<i64: 48, 32>}, {transform_indices = @transform_1, window_bounds = array<i64: 32, 32>}, {transform_indices = @transform_2, window_bounds = array<i64: 1, 32>}, {transform_indices = @transform_3, window_bounds = array<i64: 48, 32>}, {transform_indices = @transform_4, window_bounds = array<i64: 48, 32>}]} {
    %c0_i32 = arith.constant 0 : i32
    %0 = arith.cmpi eq, %arg2, %c0_i32 : i32
    %1 = arith.extui %0 : i1 to i32
    %c0_i32_0 = arith.constant 0 : i32
    %2 = arith.cmpi ne, %1, %c0_i32_0 : i32
    scf.if %2 {
      %cst_10 = arith.constant 0.000000e+00 : f32
      %12 = vector.broadcast %cst_10 : f32 to vector<48x32xf32>
      %c0_11 = arith.constant 0 : index
      %c0_12 = arith.constant 0 : index
      %13 = vector.load %arg8[%c0_11, %c0_12] : memref<48x32xf32, #tpu.memory_space<vmem>>, vector<48x32xf32>
      tpu.vector_store %arg8[%c0_11, %c0_12], %12 {strides = array<i32>} : memref<48x32xf32, #tpu.memory_space<vmem>>, vector<48x32xf32>,
    } else {
    }
    %c0 = arith.constant 0 : index
    %c0_1 = arith.constant 0 : index
    %3 = vector.load %arg8[%c0, %c0_1] : memref<48x32xf32, #tpu.memory_space<vmem>>, vector<48x32xf32>
    %c0_2 = arith.constant 0 : index
    %c0_3 = arith.constant 0 : index
    %4 = vector.load %arg3[%c0_2, %c0_3] : memref<48x32xf32, #tpu.memory_space<vmem>>, vector<48x32xf32>
    %c0_4 = arith.constant 0 : index
    %c0_5 = arith.constant 0 : index
    %5 = vector.load %arg4[%c0_4, %c0_5] : memref<32x32xf32, #tpu.memory_space<vmem>>, vector<32x32xf32>
    %cst = arith.constant dense<0.000000e+00> : vector<48x32xf32>
    %6 = tpu.matmul %4, %5, %cst {dimension_numbers = #tpu.dot_dimension_numbers<[1], [0], [0], [1], [0, 0, 1, 1], [], []>} : vector<48x32xf32>, vector<32x32xf32>, vector<48x32xf32> -> vector<48x32xf32>
    %7 = arith.addf %3, %6 : vector<48x32xf32>
    %c0_6 = arith.constant 0 : index
    %c0_7 = arith.constant 0 : index
    %8 = vector.load %arg8[%c0_6, %c0_7] : memref<48x32xf32, #tpu.memory_space<vmem>>, vector<48x32xf32>
    tpu.vector_store %arg8[%c0_6, %c0_7], %7 {strides = array<i32>} : memref<48x32xf32, #tpu.memory_space<vmem>>, vector<48x32xf32>,
    %c0_i32_8 = arith.constant 0 : i32
    %9 = arith.cmpi eq, %arg2, %c0_i32_8 : i32
    %10 = arith.extui %9 : i1 to i32
    %c0_i32_9 = arith.constant 0 : i32
    %11 = arith.cmpi ne, %10, %c0_i32_9 : i32
    scf.if %11 {
      %c0_10 = arith.constant 0 : index
      %c0_11 = arith.constant 0 : index
      %12 = vector.load %arg8[%c0_10, %c0_11] : memref<48x32xf32, #tpu.memory_space<vmem>>, vector<48x32xf32>
      %c0_12 = arith.constant 0 : index
      %c0_13 = arith.constant 0 : index
      %13 = vector.load %arg5[%c0_12, %c0_13] : memref<1x32xf32, #tpu.memory_space<vmem>>, vector<1x32xf32>
      %14 = vector.broadcast %13 : vector<1x32xf32> to vector<48x32xf32>
      %15 = arith.addf %12, %14 : vector<48x32xf32>
      %c0_14 = arith.constant 0 : index
      %c0_15 = arith.constant 0 : index
      %16 = vector.load %arg6[%c0_14, %c0_15] : memref<48x32xf32, #tpu.memory_space<vmem>>, vector<48x32xf32>
      %17 = arith.addf %15, %16 : vector<48x32xf32>
      %c0_16 = arith.constant 0 : index
      %c0_17 = arith.constant 0 : index
      %18 = vector.load %arg7[%c0_16, %c0_17] : memref<48x32xf32, #tpu.memory_space<vmem>>, vector<48x32xf32>
      tpu.vector_store %arg7[%c0_16, %c0_17], %17 {strides = array<i32>} : memref<48x32xf32, #tpu.memory_space<vmem>>, vector<48x32xf32>,
    } else {
    }
    return
  }
  func.func @transform_0(%arg0: i32, %arg1: i32, %arg2: i32) -> (i32, i32) {
    %c0_i32 = arith.constant 0 : i32
    return %arg0, %arg2 : i32, i32
  }
  func.func @transform_1(%arg0: i32, %arg1: i32, %arg2: i32) -> (i32, i32) {
    %c0_i32 = arith.constant 0 : i32
    return %arg2, %arg1 : i32, i32
  }
  func.func @transform_2(%arg0: i32, %arg1: i32, %arg2: i32) -> (i32, i32) {
    %c0_i32 = arith.constant 0 : i32
    %c0_i32_0 = arith.constant 0 : i32
    return %c0_i32, %arg1 : i32, i32
  }
  func.func @transform_3(%arg0: i32, %arg1: i32, %arg2: i32) -> (i32, i32) {
    %c0_i32 = arith.constant 0 : i32
    return %arg0, %arg1 : i32, i32
  }
  func.func @transform_4(%arg0: i32, %arg1: i32, %arg2: i32) -> (i32, i32) {
    %c0_i32 = arith.constant 0 : i32
    return %arg0, %arg1 : i32, i32
  }
}

module attributes {stable_mosaic.version = 11 : i64} {
  func.func @_ln_matmul_kernel(%arg0: i32, %arg1: i32, %arg2: memref<48x32xf32, #tpu.memory_space<vmem>>, %arg3: memref<1x32xf32, #tpu.memory_space<vmem>>, %arg4: memref<1x32xf32, #tpu.memory_space<vmem>>, %arg5: memref<32x128xf32, #tpu.memory_space<vmem>>, %arg6: memref<1x128xf32, #tpu.memory_space<vmem>>, %arg7: memref<48x128xf32, #tpu.memory_space<vmem>>) attributes {dimension_semantics = [#tpu.dimension_semantics<parallel>, #tpu.dimension_semantics<parallel>], iteration_bounds = array<i64: 1, 1>, scalar_prefetch = 0 : i64, scratch_operands = 0 : i64, tpu.core_type = #tpu.core_type<tc>, window_params = [{transform_indices = @transform_0, window_bounds = array<i64: 48, 32>}, {pipeline_mode = #tpu.pipeline_mode<synchronous>, transform_indices = @transform_1, window_bounds = array<i64: 1, 32>}, {pipeline_mode = #tpu.pipeline_mode<synchronous>, transform_indices = @transform_2, window_bounds = array<i64: 1, 32>}, {transform_indices = @transform_3, window_bounds = array<i64: 32, 128>}, {transform_indices = @transform_4, window_bounds = array<i64: 1, 128>}, {transform_indices = @transform_5, window_bounds = array<i64: 48, 128>}]} {
    %c0 = arith.constant 0 : index
    %c0_0 = arith.constant 0 : index
    %0 = vector.load %arg2[%c0, %c0_0] : memref<48x32xf32, #tpu.memory_space<vmem>>, vector<48x32xf32>
    %cst = arith.constant dense<0.000000e+00> : vector<48xf32>
    %1 = vector.multi_reduction <add>, %0, %cst [1] : vector<48x32xf32> to vector<48xf32>
    %2 = vector.shape_cast %1 : vector<48xf32> to vector<48x1xf32>
    %cst_1 = arith.constant 3.200000e+01 : f32
    %3 = vector.broadcast %cst_1 : f32 to vector<48x1xf32>
    %4 = arith.divf %2, %3 : vector<48x1xf32>
    %5 = vector.broadcast %4 : vector<48x1xf32> to vector<48x32xf32>
    %6 = arith.subf %0, %5 : vector<48x32xf32>
    %7 = arith.mulf %6, %6 : vector<48x32xf32>
    %cst_2 = arith.constant dense<0.000000e+00> : vector<48xf32>
    %8 = vector.multi_reduction <add>, %7, %cst_2 [1] : vector<48x32xf32> to vector<48xf32>
    %9 = vector.shape_cast %8 : vector<48xf32> to vector<48x1xf32>
    %cst_3 = arith.constant 3.200000e+01 : f32
    %10 = vector.broadcast %cst_3 : f32 to vector<48x1xf32>
    %11 = arith.divf %9, %10 : vector<48x1xf32>
    %12 = vector.broadcast %4 : vector<48x1xf32> to vector<48x32xf32>
    %13 = arith.subf %0, %12 : vector<48x32xf32>
    %cst_4 = arith.constant 9.99999974E-6 : f32
    %14 = vector.broadcast %cst_4 : f32 to vector<48x1xf32>
    %15 = arith.addf %11, %14 : vector<48x1xf32>
    %16 = math.rsqrt %15 : vector<48x1xf32>
    %17 = vector.broadcast %16 : vector<48x1xf32> to vector<48x32xf32>
    %18 = arith.mulf %13, %17 : vector<48x32xf32>
    %c0_5 = arith.constant 0 : index
    %c0_6 = arith.constant 0 : index
    %19 = vector.load %arg3[%c0_5, %c0_6] : memref<1x32xf32, #tpu.memory_space<vmem>>, vector<1x32xf32>
    %20 = vector.broadcast %19 : vector<1x32xf32> to vector<48x32xf32>
    %21 = arith.mulf %18, %20 : vector<48x32xf32>
    %c0_7 = arith.constant 0 : index
    %c0_8 = arith.constant 0 : index
    %22 = vector.load %arg4[%c0_7, %c0_8] : memref<1x32xf32, #tpu.memory_space<vmem>>, vector<1x32xf32>
    %23 = vector.broadcast %22 : vector<1x32xf32> to vector<48x32xf32>
    %24 = arith.addf %21, %23 : vector<48x32xf32>
    %c0_9 = arith.constant 0 : index
    %c0_10 = arith.constant 0 : index
    %25 = vector.load %arg5[%c0_9, %c0_10] : memref<32x128xf32, #tpu.memory_space<vmem>>, vector<32x128xf32>
    %cst_11 = arith.constant dense<0.000000e+00> : vector<48x128xf32>
    %26 = tpu.matmul %24, %25, %cst_11 {dimension_numbers = #tpu.dot_dimension_numbers<[1], [0], [0], [1], [0, 0, 1, 1], [], []>} : vector<48x32xf32>, vector<32x128xf32>, vector<48x128xf32> -> vector<48x128xf32>
    %c0_12 = arith.constant 0 : index
    %c0_13 = arith.constant 0 : index
    %27 = vector.load %arg6[%c0_12, %c0_13] : memref<1x128xf32, #tpu.memory_space<vmem>>, vector<1x128xf32>
    %28 = vector.broadcast %27 : vector<1x128xf32> to vector<48x128xf32>
    %29 = arith.addf %26, %28 : vector<48x128xf32>
    %c0_14 = arith.constant 0 : index
    %c0_15 = arith.constant 0 : index
    %30 = vector.load %arg7[%c0_14, %c0_15] : memref<48x128xf32, #tpu.memory_space<vmem>>, vector<48x128xf32>
    tpu.vector_store %arg7[%c0_14, %c0_15], %29 {strides = array<i32>} : memref<48x128xf32, #tpu.memory_space<vmem>>, vector<48x128xf32>,
    return
  }
  func.func @transform_0(%arg0: i32, %arg1: i32) -> (i32, i32) {
    %c0_i32 = arith.constant 0 : i32
    %c0_i32_0 = arith.constant 0 : i32
    return %arg0, %c0_i32 : i32, i32
  }
  func.func @transform_1(%arg0: i32, %arg1: i32) -> (i32, i32) {
    %c0_i32 = arith.constant 0 : i32
    %c0_i32_0 = arith.constant 0 : i32
    %c0_i32_1 = arith.constant 0 : i32
    return %c0_i32, %c0_i32_0 : i32, i32
  }
  func.func @transform_2(%arg0: i32, %arg1: i32) -> (i32, i32) {
    %c0_i32 = arith.constant 0 : i32
    %c0_i32_0 = arith.constant 0 : i32
    %c0_i32_1 = arith.constant 0 : i32
    return %c0_i32, %c0_i32_0 : i32, i32
  }
  func.func @transform_3(%arg0: i32, %arg1: i32) -> (i32, i32) {
    %c0_i32 = arith.constant 0 : i32
    %c0_i32_0 = arith.constant 0 : i32
    return %c0_i32, %arg1 : i32, i32
  }
  func.func @transform_4(%arg0: i32, %arg1: i32) -> (i32, i32) {
    %c0_i32 = arith.constant 0 : i32
    %c0_i32_0 = arith.constant 0 : i32
    return %c0_i32, %arg1 : i32, i32
  }
  func.func @transform_5(%arg0: i32, %arg1: i32) -> (i32, i32) {
    %c0_i32 = arith.constant 0 : i32
    return %arg0, %arg1 : i32, i32
  }
}

module attributes {stable_mosaic.version = 11 : i64} {
  func.func @_matmul_kernel(%arg0: i32, %arg1: i32, %arg2: i32, %arg3: memref<48x128xf32, #tpu.memory_space<vmem>>, %arg4: memref<128x32xf32, #tpu.memory_space<vmem>>, %arg5: memref<1x32xf32, #tpu.memory_space<vmem>>, %arg6: memref<48x32xf32, #tpu.memory_space<vmem>>, %arg7: memref<48x32xf32, #tpu.memory_space<vmem>>, %arg8: memref<48x32xf32, #tpu.memory_space<vmem>>) attributes {dimension_semantics = [#tpu.dimension_semantics<parallel>, #tpu.dimension_semantics<parallel>, #tpu.dimension_semantics<arbitrary>], iteration_bounds = array<i64: 1, 1, 1>, scalar_prefetch = 0 : i64, scratch_operands = 1 : i64, tpu.core_type = #tpu.core_type<tc>, window_params = [{transform_indices = @transform_0, window_bounds = array<i64: 48, 128>}, {transform_indices = @transform_1, window_bounds = array<i64: 128, 32>}, {transform_indices = @transform_2, window_bounds = array<i64: 1, 32>}, {transform_indices = @transform_3, window_bounds = array<i64: 48, 32>}, {transform_indices = @transform_4, window_bounds = array<i64: 48, 32>}]} {
    %c0_i32 = arith.constant 0 : i32
    %0 = arith.cmpi eq, %arg2, %c0_i32 : i32
    %1 = arith.extui %0 : i1 to i32
    %c0_i32_0 = arith.constant 0 : i32
    %2 = arith.cmpi ne, %1, %c0_i32_0 : i32
    scf.if %2 {
      %cst_10 = arith.constant 0.000000e+00 : f32
      %12 = vector.broadcast %cst_10 : f32 to vector<48x32xf32>
      %c0_11 = arith.constant 0 : index
      %c0_12 = arith.constant 0 : index
      %13 = vector.load %arg8[%c0_11, %c0_12] : memref<48x32xf32, #tpu.memory_space<vmem>>, vector<48x32xf32>
      tpu.vector_store %arg8[%c0_11, %c0_12], %12 {strides = array<i32>} : memref<48x32xf32, #tpu.memory_space<vmem>>, vector<48x32xf32>,
    } else {
    }
    %c0 = arith.constant 0 : index
    %c0_1 = arith.constant 0 : index
    %3 = vector.load %arg8[%c0, %c0_1] : memref<48x32xf32, #tpu.memory_space<vmem>>, vector<48x32xf32>
    %c0_2 = arith.constant 0 : index
    %c0_3 = arith.constant 0 : index
    %4 = vector.load %arg3[%c0_2, %c0_3] : memref<48x128xf32, #tpu.memory_space<vmem>>, vector<48x128xf32>
    %c0_4 = arith.constant 0 : index
    %c0_5 = arith.constant 0 : index
    %5 = vector.load %arg4[%c0_4, %c0_5] : memref<128x32xf32, #tpu.memory_space<vmem>>, vector<128x32xf32>
    %cst = arith.constant dense<0.000000e+00> : vector<48x32xf32>
    %6 = tpu.matmul %4, %5, %cst {dimension_numbers = #tpu.dot_dimension_numbers<[1], [0], [0], [1], [0, 0, 1, 1], [], []>} : vector<48x128xf32>, vector<128x32xf32>, vector<48x32xf32> -> vector<48x32xf32>
    %7 = arith.addf %3, %6 : vector<48x32xf32>
    %c0_6 = arith.constant 0 : index
    %c0_7 = arith.constant 0 : index
    %8 = vector.load %arg8[%c0_6, %c0_7] : memref<48x32xf32, #tpu.memory_space<vmem>>, vector<48x32xf32>
    tpu.vector_store %arg8[%c0_6, %c0_7], %7 {strides = array<i32>} : memref<48x32xf32, #tpu.memory_space<vmem>>, vector<48x32xf32>,
    %c0_i32_8 = arith.constant 0 : i32
    %9 = arith.cmpi eq, %arg2, %c0_i32_8 : i32
    %10 = arith.extui %9 : i1 to i32
    %c0_i32_9 = arith.constant 0 : i32
    %11 = arith.cmpi ne, %10, %c0_i32_9 : i32
    scf.if %11 {
      %c0_10 = arith.constant 0 : index
      %c0_11 = arith.constant 0 : index
      %12 = vector.load %arg8[%c0_10, %c0_11] : memref<48x32xf32, #tpu.memory_space<vmem>>, vector<48x32xf32>
      %c0_12 = arith.constant 0 : index
      %c0_13 = arith.constant 0 : index
      %13 = vector.load %arg5[%c0_12, %c0_13] : memref<1x32xf32, #tpu.memory_space<vmem>>, vector<1x32xf32>
      %14 = vector.broadcast %13 : vector<1x32xf32> to vector<48x32xf32>
      %15 = arith.addf %12, %14 : vector<48x32xf32>
      %c0_14 = arith.constant 0 : index
      %c0_15 = arith.constant 0 : index
      %16 = vector.load %arg6[%c0_14, %c0_15] : memref<48x32xf32, #tpu.memory_space<vmem>>, vector<48x32xf32>
      %17 = arith.addf %15, %16 : vector<48x32xf32>
      %c0_16 = arith.constant 0 : index
      %c0_17 = arith.constant 0 : index
      %18 = vector.load %arg7[%c0_16, %c0_17] : memref<48x32xf32, #tpu.memory_space<vmem>>, vector<48x32xf32>
      tpu.vector_store %arg7[%c0_16, %c0_17], %17 {strides = array<i32>} : memref<48x32xf32, #tpu.memory_space<vmem>>, vector<48x32xf32>,
    } else {
    }
    return
  }
  func.func @transform_0(%arg0: i32, %arg1: i32, %arg2: i32) -> (i32, i32) {
    %c0_i32 = arith.constant 0 : i32
    return %arg0, %arg2 : i32, i32
  }
  func.func @transform_1(%arg0: i32, %arg1: i32, %arg2: i32) -> (i32, i32) {
    %c0_i32 = arith.constant 0 : i32
    return %arg2, %arg1 : i32, i32
  }
  func.func @transform_2(%arg0: i32, %arg1: i32, %arg2: i32) -> (i32, i32) {
    %c0_i32 = arith.constant 0 : i32
    %c0_i32_0 = arith.constant 0 : i32
    return %c0_i32, %arg1 : i32, i32
  }
  func.func @transform_3(%arg0: i32, %arg1: i32, %arg2: i32) -> (i32, i32) {
    %c0_i32 = arith.constant 0 : i32
    return %arg0, %arg1 : i32, i32
  }
  func.func @transform_4(%arg0: i32, %arg1: i32, %arg2: i32) -> (i32, i32) {
    %c0_i32 = arith.constant 0 : i32
    return %arg0, %arg1 : i32, i32
  }
}

module attributes {stable_mosaic.version = 11 : i64} {
  func.func @_ln_matmul_kernel(%arg0: i32, %arg1: i32, %arg2: memref<2x32xf32, #tpu.memory_space<vmem>>, %arg3: memref<1x32xf32, #tpu.memory_space<vmem>>, %arg4: memref<1x32xf32, #tpu.memory_space<vmem>>, %arg5: memref<32x8xf32, #tpu.memory_space<vmem>>, %arg6: memref<1x8xf32, #tpu.memory_space<vmem>>, %arg7: memref<2x8xf32, #tpu.memory_space<vmem>>) attributes {dimension_semantics = [#tpu.dimension_semantics<parallel>, #tpu.dimension_semantics<parallel>], iteration_bounds = array<i64: 1, 1>, scalar_prefetch = 0 : i64, scratch_operands = 0 : i64, tpu.core_type = #tpu.core_type<tc>, window_params = [{transform_indices = @transform_0, window_bounds = array<i64: 2, 32>}, {pipeline_mode = #tpu.pipeline_mode<synchronous>, transform_indices = @transform_1, window_bounds = array<i64: 1, 32>}, {pipeline_mode = #tpu.pipeline_mode<synchronous>, transform_indices = @transform_2, window_bounds = array<i64: 1, 32>}, {transform_indices = @transform_3, window_bounds = array<i64: 32, 8>}, {transform_indices = @transform_4, window_bounds = array<i64: 1, 8>}, {transform_indices = @transform_5, window_bounds = array<i64: 2, 8>}]} {
    %c0 = arith.constant 0 : index
    %c0_0 = arith.constant 0 : index
    %0 = vector.load %arg2[%c0, %c0_0] : memref<2x32xf32, #tpu.memory_space<vmem>>, vector<2x32xf32>
    %cst = arith.constant dense<0.000000e+00> : vector<2xf32>
    %1 = vector.multi_reduction <add>, %0, %cst [1] : vector<2x32xf32> to vector<2xf32>
    %2 = vector.shape_cast %1 : vector<2xf32> to vector<2x1xf32>
    %cst_1 = arith.constant 3.200000e+01 : f32
    %3 = vector.broadcast %cst_1 : f32 to vector<2x1xf32>
    %4 = arith.divf %2, %3 : vector<2x1xf32>
    %5 = vector.broadcast %4 : vector<2x1xf32> to vector<2x32xf32>
    %6 = arith.subf %0, %5 : vector<2x32xf32>
    %7 = arith.mulf %6, %6 : vector<2x32xf32>
    %cst_2 = arith.constant dense<0.000000e+00> : vector<2xf32>
    %8 = vector.multi_reduction <add>, %7, %cst_2 [1] : vector<2x32xf32> to vector<2xf32>
    %9 = vector.shape_cast %8 : vector<2xf32> to vector<2x1xf32>
    %cst_3 = arith.constant 3.200000e+01 : f32
    %10 = vector.broadcast %cst_3 : f32 to vector<2x1xf32>
    %11 = arith.divf %9, %10 : vector<2x1xf32>
    %12 = vector.broadcast %4 : vector<2x1xf32> to vector<2x32xf32>
    %13 = arith.subf %0, %12 : vector<2x32xf32>
    %cst_4 = arith.constant 9.99999974E-6 : f32
    %14 = vector.broadcast %cst_4 : f32 to vector<2x1xf32>
    %15 = arith.addf %11, %14 : vector<2x1xf32>
    %16 = math.rsqrt %15 : vector<2x1xf32>
    %17 = vector.broadcast %16 : vector<2x1xf32> to vector<2x32xf32>
    %18 = arith.mulf %13, %17 : vector<2x32xf32>
    %c0_5 = arith.constant 0 : index
    %c0_6 = arith.constant 0 : index
    %19 = vector.load %arg3[%c0_5, %c0_6] : memref<1x32xf32, #tpu.memory_space<vmem>>, vector<1x32xf32>
    %20 = vector.broadcast %19 : vector<1x32xf32> to vector<2x32xf32>
    %21 = arith.mulf %18, %20 : vector<2x32xf32>
    %c0_7 = arith.constant 0 : index
    %c0_8 = arith.constant 0 : index
    %22 = vector.load %arg4[%c0_7, %c0_8] : memref<1x32xf32, #tpu.memory_space<vmem>>, vector<1x32xf32>
    %23 = vector.broadcast %22 : vector<1x32xf32> to vector<2x32xf32>
    %24 = arith.addf %21, %23 : vector<2x32xf32>
    %c0_9 = arith.constant 0 : index
    %c0_10 = arith.constant 0 : index
    %25 = vector.load %arg5[%c0_9, %c0_10] : memref<32x8xf32, #tpu.memory_space<vmem>>, vector<32x8xf32>
    %cst_11 = arith.constant dense<0.000000e+00> : vector<2x8xf32>
    %26 = tpu.matmul %24, %25, %cst_11 {dimension_numbers = #tpu.dot_dimension_numbers<[1], [0], [0], [1], [0, 0, 1, 1], [], []>} : vector<2x32xf32>, vector<32x8xf32>, vector<2x8xf32> -> vector<2x8xf32>
    %c0_12 = arith.constant 0 : index
    %c0_13 = arith.constant 0 : index
    %27 = vector.load %arg6[%c0_12, %c0_13] : memref<1x8xf32, #tpu.memory_space<vmem>>, vector<1x8xf32>
    %28 = vector.broadcast %27 : vector<1x8xf32> to vector<2x8xf32>
    %29 = arith.addf %26, %28 : vector<2x8xf32>
    %c0_14 = arith.constant 0 : index
    %c0_15 = arith.constant 0 : index
    %30 = vector.load %arg7[%c0_14, %c0_15] : memref<2x8xf32, #tpu.memory_space<vmem>>, vector<2x8xf32>
    tpu.vector_store %arg7[%c0_14, %c0_15], %29 {strides = array<i32>} : memref<2x8xf32, #tpu.memory_space<vmem>>, vector<2x8xf32>,
    return
  }
  func.func @transform_0(%arg0: i32, %arg1: i32) -> (i32, i32) {
    %c0_i32 = arith.constant 0 : i32
    %c0_i32_0 = arith.constant 0 : i32
    return %arg0, %c0_i32 : i32, i32
  }
  func.func @transform_1(%arg0: i32, %arg1: i32) -> (i32, i32) {
    %c0_i32 = arith.constant 0 : i32
    %c0_i32_0 = arith.constant 0 : i32
    %c0_i32_1 = arith.constant 0 : i32
    return %c0_i32, %c0_i32_0 : i32, i32
  }
  func.func @transform_2(%arg0: i32, %arg1: i32) -> (i32, i32) {
    %c0_i32 = arith.constant 0 : i32
    %c0_i32_0 = arith.constant 0 : i32
    %c0_i32_1 = arith.constant 0 : i32
    return %c0_i32, %c0_i32_0 : i32, i32
  }
  func.func @transform_3(%arg0: i32, %arg1: i32) -> (i32, i32) {
    %c0_i32 = arith.constant 0 : i32
    %c0_i32_0 = arith.constant 0 : i32
    return %c0_i32, %arg1 : i32, i32
  }
  func.func @transform_4(%arg0: i32, %arg1: i32) -> (i32, i32) {
    %c0_i32 = arith.constant 0 : i32
    %c0_i32_0 = arith.constant 0 : i32
    return %c0_i32, %arg1 : i32, i32
  }
  func.func @transform_5(%arg0: i32, %arg1: i32) -> (i32, i32) {
    %c0_i32 = arith.constant 0 : i32
    return %arg0, %arg1 : i32, i32
  }
}

</mosaic_0001>

<llo_original>
// kernel: vit_forward.12
$region0: #{vit_forward.12}
  #allocation0 [shape = 'u32[]', space=smem, size = 0x4, offset = 0x4, fixed_abs, tag = 'smem constant byte address 0x4 - core index']
  #allocation1 [shape = 'u32[144,128]{1,0:T(1,128)}', space=vmem, size = 0x12000, scoped, tag = 'internal scratch']
  #allocation2 [shape = 'f32[32,32]{1,0:T(8,128)}', space=vmem, size = 0x4000, scoped, tag = 'scratch operand']
  %s0 = inlined_call_operand.vmem [shape: f32[32,64], index: 0, kind: input, shape index: {}]
  %s1 = inlined_call_operand.vmem [shape: f32[64,32], index: 1, kind: input, shape index: {}]
  %s2 = inlined_call_operand.vmem [shape: f32[1,32], index: 2, kind: input, shape index: {}]
  %s3 = inlined_call_operand.vmem [shape: f32[32,32], index: 3, kind: output, shape index: {}]
  %s4 = sld [smem:[#allocation0]]
  $region30: #{vit_forward.12} parent=0
    _
  %s6 = ssub.s32 1, %s4
  %s7 = scalar_select 0, %s6, %s4
  // Predicated region
  $region2: #{vit_forward.12} parent=0 // pred_check
    _
  $region3: #{vit_forward.12} parent=0 // pred_check_branch
    %9 = sbr.rel (0) target = $region5
  $region4: #{vit_forward.12} parent=0 // pred_region
    _
  $region5: #{vit_forward.12} parent=0 // pred_fallthru
    _
  // Predicated region
  $region6: #{vit_forward.12} parent=0 // pred_check
    _
  $region7: #{vit_forward.12} parent=0 // pred_check_branch
    %11 = sbr.rel (0) target = $region9
  $region8: #{vit_forward.12} parent=0 // pred_region
    _
  $region9: #{vit_forward.12} parent=0 // pred_fallthru
    _
  // Predicated region
  $region10: #{vit_forward.12} parent=0 // pred_check
    _
  $region11: #{vit_forward.12} parent=0 // pred_check_branch
    %13 = sbr.rel (0) target = $region13
  $region12: #{vit_forward.12} parent=0 // pred_region
    _
  $region13: #{vit_forward.12} parent=0 // pred_fallthru
    _
  %p14 = scmp.eq.s32.totalorder 0, 0
  // Predicated region
  $region14: #{vit_forward.12} parent=0 // pred_check
    %p15 = pneg %p14
  $region15: #{vit_forward.12} parent=0 // pred_check_branch
    %17 = sbr.rel (%p15) target = $region17
  $region16: #{vit_forward.12} parent=0 // pred_region
    %vm18 = vcmask 261120
    %19 = vst.msk [vmem:[#allocation2] sm:$0xff] %vm18, 0.0
    %20 = vst.msk [vmem:[#allocation2 + $0x8] sm:$0xff] %vm18, 0.0
    %21 = vst.msk [vmem:[#allocation2 + $0x10] sm:$0xff] %vm18, 0.0
    %22 = vst.msk [vmem:[#allocation2 + $0x18] sm:$0xff] %vm18, 0.0
  $region17: #{vit_forward.12} parent=0 // pred_fallthru
    _
  %v23 = vld [vmem:[#allocation2] sm:$0xff]
  %v24 = vld [vmem:[#allocation2 + $0x8] sm:$0xff]
  %v25 = vld [vmem:[#allocation2 + $0x10] sm:$0xff]
  %v26 = vld [vmem:[#allocation2 + $0x18] sm:$0xff]
  %v27 = vld [vmem:[%s0] sm:$0xff]
  %v28 = vld [vmem:[%s0 + $0x8] sm:$0xff]
  %v29 = vld [vmem:[%s0 + $0x10] sm:$0xff]
  %v30 = vld [vmem:[%s0 + $0x18] sm:$0xff]
  %v31 = vld [vmem:[%s1] sm:$0xff]
  %v32 = vld [vmem:[%s1 + $0x8] sm:$0xff]
  %v33 = vld [vmem:[%s1 + $0x10] sm:$0xff]
  %v34 = vld [vmem:[%s1 + $0x18] sm:$0xff]
  %v35 = vld [vmem:[%s1 + $0x20] sm:$0xff]
  %v36 = vld [vmem:[%s1 + $0x28] sm:$0xff]
  %v37 = vld [vmem:[%s1 + $0x30] sm:$0xff]
  %v38 = vld [vmem:[%s1 + $0x38] sm:$0xff]
  %vm39 = vcmask 523264
  %v41 = vsel %vm39, %v27, 0
  %v44 = vsel %vm39, %v28, 0
  %v47 = vsel %vm39, %v29, 0
  %v50 = vsel %vm39, %v30, 0
  %52 = vmatprep.subr.mxu0 0.0
  %53 = vmatpush1.msra.mxu0 %v31
  %54 = vmatprep.subr.mxu0 0.0
  %55 = vmatpush1.msra.mxu0 %v32
  %56 = vmatprep.subr.mxu0 0.0
  %57 = vmatpush1.msra.mxu0 %v33
  %58 = vmatprep.subr.mxu0 0.0
  %59 = vmatpush1.msra.mxu0 %v34
  %60 = vmatprep.subr.mxu0 0.0
  %61 = vmatpush1.msra.mxu0 %v35
  %62 = vmatprep.subr.mxu0 0.0
  %63 = vmatpush1.msra.mxu0 %v36
  %64 = vmatprep.subr.mxu0 0.0
  %65 = vmatpush1.msra.mxu0 %v37
  %66 = vmatprep.subr.mxu0 0.0
  %67 = vmatpush1.msra.mxu0 %v38
  %68 = vmatprep.subr.mxu0 0.0
  %69 = vmatpush1.msra.mxu0 0.0
  %70 = vmatprep.subr.mxu0 0.0
  %71 = vmatpush1.msra.mxu0 0.0
  %72 = vmatprep.subr.mxu0 0.0
  %73 = vmatpush1.msra.mxu0 0.0
  %74 = vmatprep.subr.mxu0 0.0
  %75 = vmatpush1.msra.mxu0 0.0
  %76 = vmatprep.subr.mxu0 0.0
  %77 = vmatpush1.msra.mxu0 0.0
  %78 = vmatprep.subr.mxu0 0.0
  %79 = vmatpush1.msra.mxu0 0.0
  %80 = vmatprep.subr.mxu0 0.0
  %81 = vmatpush1.msra.mxu0 0.0
  %82 = vmatprep.subr.mxu0 0.0
  %83 = vmatpush1.msra.mxu0 0.0
  %84 = vmatprep.subr.mxu0 0.0
  %85 = vmatpush1.msra.mxu0 0.0
  %86 = vmatprep.subr.mxu0 0.0
  %87 = vmatpush1.msra.mxu0 0.0
  %88 = vmatprep.subr.mxu0 0.0
  %89 = vmatpush1.msra.mxu0 0.0
  %90 = vmatprep.subr.mxu0 0.0
  %91 = vmatpush1.msra.mxu0 0.0
  %92 = vmatprep.subr.mxu0 0.0
  %93 = vmatpush1.msra.mxu0 0.0
  %94 = vmatprep.subr.mxu0 0.0
  %95 = vmatpush1.msra.mxu0 0.0
  %96 = vmatprep.subr.mxu0 0.0
  %97 = vmatpush1.msra.mxu0 0.0
  %98 = vmatprep.subr.mxu0 0.0
  %99 = vmatpush1.msra.mxu0 0.0
  %100 = vmatprep.subr.mxu0 0.0
  %101 = vmatpush1.msra.mxu0 0.0
  %102 = vmatprep.subr.mxu0 0.0
  %103 = vmatpush1.msra.mxu0 0.0
  %104 = vmatprep.subr.mxu0 0.0
  %105 = vmatpush1.msra.mxu0 0.0
  %106 = vmatprep.subr.mxu0 0.0
  %107 = vmatpush1.msra.mxu0 0.0
  %108 = vmatprep.subr.mxu0 0.0
  %109 = vmatpush1.msra.mxu0 0.0
  %110 = vmatprep.subr.mxu0 0.0
  %111 = vmatpush1.msra.mxu0 0.0
  %112 = vmatprep.subr.mxu0 0.0
  %113 = vmatpush1.msra.mxu0 0.0
  %114 = vmatprep.subr.mxu0 0.0
  %115 = vmatpush1.msra.mxu0 0.0
  %116 = vmatprep.mubr.f32.mxu0 0.0
  %117 = vmatmul.mubr.f32.gmra.mrb[0].mxu0 %v41
  %v118 = vpop.f32.mrb[0].mxu0
  %v119 = vadd.f32 0.0, %v118
  %v120 = vpop.f32.mrb[0].mxu0
  %121 = vmatprep.mubr.f32.mxu0 0.0
  %122 = vmatmul.mubr.f32.gmra.mrb[0].mxu0 %v44
  %v123 = vpop.f32.mrb[0].mxu0
  %v124 = vadd.f32 0.0, %v123
  %v125 = vpop.f32.mrb[0].mxu0
  %126 = vmatprep.mubr.f32.mxu0 0.0
  %127 = vmatmul.mubr.f32.gmra.mrb[0].mxu0 %v47
  %v128 = vpop.f32.mrb[0].mxu0
  %v129 = vadd.f32 0.0, %v128
  %v130 = vpop.f32.mrb[0].mxu0
  %131 = vmatprep.mubr.f32.mxu0 0.0
  %132 = vmatmul.mubr.f32.gmra.mrb[0].mxu0 %v50
  %v133 = vpop.f32.mrb[0].mxu0
  %v134 = vadd.f32 0.0, %v133
  %v135 = vpop.f32.mrb[0].mxu0
  %136 = vdwg.mxu0
  %v137 = vadd.f32 %v23, %v119
  %v138 = vadd.f32 %v24, %v124
  %v139 = vadd.f32 %v25, %v129
  %v140 = vadd.f32 %v26, %v134
  %vm141 = vcmask 261120
  %142 = vst.msk [vmem:[#allocation2] sm:$0xff] %vm141, %v137
  %143 = vst.msk [vmem:[#allocation2 + $0x8] sm:$0xff] %vm141, %v138
  %144 = vst.msk [vmem:[#allocation2 + $0x10] sm:$0xff] %vm141, %v139
  %145 = vst.msk [vmem:[#allocation2 + $0x18] sm:$0xff] %vm141, %v140
  // Predicated region
  $region18: #{vit_forward.12} parent=0 // pred_check
    %p146 = pneg %p14
  $region19: #{vit_forward.12} parent=0 // pred_check_branch
    %148 = sbr.rel (%p146) target = $region21
  $region20: #{vit_forward.12} parent=0 // pred_region
    %v149 = vld [vmem:[#allocation2] sm:$0xff]
    %v150 = vld [vmem:[#allocation2 + $0x8] sm:$0xff]
    %v151 = vld [vmem:[#allocation2 + $0x10] sm:$0xff]
    %v152 = vld [vmem:[#allocation2 + $0x18] sm:$0xff]
    %v153 = vld [vmem:[%s2] sm:$0x1]
    %v155 = vlaneseq
    %v156 = vshrl.u32 %v155, 7
    %v157 = vsub.s32 0, %v156
    %v158 = vrot.slane %v153, %v157
    %v160 = vadd.f32 %v149, %v158
    %v161 = vadd.f32 %v150, %v158
    %v162 = vadd.f32 %v151, %v158
    %v163 = vadd.f32 %v152, %v158
    %164 = vst.msk [vmem:[%s3] sm:$0xff] %vm141, %v160
    %165 = vst.msk [vmem:[%s3 + $0x8] sm:$0xff] %vm141, %v161
    %166 = vst.msk [vmem:[%s3 + $0x10] sm:$0xff] %vm141, %v162
    %167 = vst.msk [vmem:[%s3 + $0x18] sm:$0xff] %vm141, %v163
  $region21: #{vit_forward.12} parent=0 // pred_fallthru
    _
  // Predicated region
  $region22: #{vit_forward.12} parent=0 // pred_check
    _
  $region23: #{vit_forward.12} parent=0 // pred_check_branch
    %169 = sbr.rel (0) target = $region25
  $region24: #{vit_forward.12} parent=0 // pred_region
    _
  $region25: #{vit_forward.12} parent=0 // pred_fallthru
    _
  // Predicated region
  $region26: #{vit_forward.12} parent=0 // pred_check
    _
  $region27: #{vit_forward.12} parent=0 // pred_check_branch
    %171 = sbr.rel (0) target = $region29
  $region28: #{vit_forward.12} parent=0 // pred_region
    _
  $region29: #{vit_forward.12} parent=0 // pred_fallthru
    _

// kernel: vit_forward.13
$region0: #{vit_forward.13}
  #allocation0 [shape = 'u32[]', space=smem, size = 0x4, offset = 0x4, fixed_abs, tag = 'smem constant byte address 0x4 - core index']
  #allocation1 [shape = 'u32[144,128]{1,0:T(1,128)}', space=vmem, size = 0x12000, scoped, tag = 'internal scratch']
  %s0 = inlined_call_operand.vmem [shape: f32[48,32], index: 0, kind: input, shape index: {}]
  %s1 = inlined_call_operand.vmem [shape: f32[1,32], index: 1, kind: input, shape index: {}]
  %s2 = inlined_call_operand.vmem [shape: f32[1,32], index: 2, kind: input, shape index: {}]
  %s3 = inlined_call_operand.vmem [shape: f32[32,96], index: 3, kind: input, shape index: {}]
  %s4 = inlined_call_operand.vmem [shape: f32[1,96], index: 4, kind: input, shape index: {}]
  %s5 = inlined_call_operand.vmem [shape: f32[48,96], index: 5, kind: output, shape index: {}]
  %s6 = sld [smem:[#allocation0]]
  $region30: #{vit_forward.13} parent=0
    _
  %s8 = ssub.s32 1, %s6
  %s9 = scalar_select 0, %s8, %s6
  // Predicated region
  $region2: #{vit_forward.13} parent=0 // pred_check
    _
  $region3: #{vit_forward.13} parent=0 // pred_check_branch
    %11 = sbr.rel (0) target = $region5
  $region4: #{vit_forward.13} parent=0 // pred_region
    _
  $region5: #{vit_forward.13} parent=0 // pred_fallthru
    _
  // Predicated region
  $region6: #{vit_forward.13} parent=0 // pred_check
    _
  $region7: #{vit_forward.13} parent=0 // pred_check_branch
    %13 = sbr.rel (0) target = $region9
  $region8: #{vit_forward.13} parent=0 // pred_region
    _
  $region9: #{vit_forward.13} parent=0 // pred_fallthru
    _
  // Predicated region
  $region10: #{vit_forward.13} parent=0 // pred_check
    _
  $region11: #{vit_forward.13} parent=0 // pred_check_branch
    %15 = sbr.rel (0) target = $region13
  $region12: #{vit_forward.13} parent=0 // pred_region
    _
  $region13: #{vit_forward.13} parent=0 // pred_fallthru
    _
  // Predicated region
  $region14: #{vit_forward.13} parent=0 // pred_check
    _
  $region15: #{vit_forward.13} parent=0 // pred_check_branch
    %17 = sbr.rel (0) target = $region17
  $region16: #{vit_forward.13} parent=0 // pred_region
    _
  $region17: #{vit_forward.13} parent=0 // pred_fallthru
    _
  // Predicated region
  $region18: #{vit_forward.13} parent=0 // pred_check
    _
  $region19: #{vit_forward.13} parent=0 // pred_check_branch
    %19 = sbr.rel (0) target = $region21
  $region20: #{vit_forward.13} parent=0 // pred_region
    _
  $region21: #{vit_forward.13} parent=0 // pred_fallthru
    _
  %v20 = vld [vmem:[%s0] sm:$0xff]
  %v21 = vld [vmem:[%s0 + $0x8] sm:$0xff]
  %v22 = vld [vmem:[%s0 + $0x10] sm:$0xff]
  %v23 = vld [vmem:[%s0 + $0x18] sm:$0xff]
  %v24 = vld [vmem:[%s0 + $0x20] sm:$0xff]
  %v25 = vld [vmem:[%s0 + $0x28] sm:$0xff]
  %vm26 = vcmask 261120
  %v27 = vsel %vm26, %v20, 0.0
  %28 = vadd.xlane.f32.xlu0 %v27
  %v29 = vpop.xlane.xlu0 %28
  %v30 = vsel %vm26, %v21, 0.0
  %31 = vadd.xlane.f32.xlu0 %v30
  %v32 = vpop.xlane.xlu0 %31
  %v33 = vsel %vm26, %v22, 0.0
  %34 = vadd.xlane.f32.xlu0 %v33
  %v35 = vpop.xlane.xlu0 %34
  %v36 = vsel %vm26, %v23, 0.0
  %37 = vadd.xlane.f32.xlu0 %v36
  %v38 = vpop.xlane.xlu0 %37
  %v39 = vsel %vm26, %v24, 0.0
  %40 = vadd.xlane.f32.xlu0 %v39
  %v41 = vpop.xlane.xlu0 %40
  %v42 = vsel %vm26, %v25, 0.0
  %43 = vadd.xlane.f32.xlu0 %v42
  %v44 = vpop.xlane.xlu0 %43
  %v45 = vrcp.pop 32.0
  %v46 = vmul.f32 %v29, %v45
  %v47 = vmul.f32 %v32, %v45
  %v48 = vmul.f32 %v35, %v45
  %v49 = vmul.f32 %v38, %v45
  %v50 = vmul.f32 %v41, %v45
  %v51 = vmul.f32 %v44, %v45
  %v52 = vsub.f32 %v20, %v46
  %v53 = vsub.f32 %v21, %v47
  %v54 = vsub.f32 %v22, %v48
  %v55 = vsub.f32 %v23, %v49
  %v56 = vsub.f32 %v24, %v50
  %v57 = vsub.f32 %v25, %v51
  %v58 = vmul.f32 %v52, %v52
  %v59 = vmul.f32 %v53, %v53
  %v60 = vmul.f32 %v54, %v54
  %v61 = vmul.f32 %v55, %v55
  %v62 = vmul.f32 %v56, %v56
  %v63 = vmul.f32 %v57, %v57
  %v64 = vsel %vm26, %v58, 0.0
  %65 = vadd.xlane.f32.xlu0 %v64
  %v66 = vpop.xlane.xlu0 %65
  %v67 = vsel %vm26, %v59, 0.0
  %68 = vadd.xlane.f32.xlu0 %v67
  %v69 = vpop.xlane.xlu0 %68
  %v70 = vsel %vm26, %v60, 0.0
  %71 = vadd.xlane.f32.xlu0 %v70
  %v72 = vpop.xlane.xlu0 %71
  %v73 = vsel %vm26, %v61, 0.0
  %74 = vadd.xlane.f32.xlu0 %v73
  %v75 = vpop.xlane.xlu0 %74
  %v76 = vsel %vm26, %v62, 0.0
  %77 = vadd.xlane.f32.xlu0 %v76
  %v78 = vpop.xlane.xlu0 %77
  %v79 = vsel %vm26, %v63, 0.0
  %80 = vadd.xlane.f32.xlu0 %v79
  %v81 = vpop.xlane.xlu0 %80
  %v82 = vmul.f32 %v66, %v45
  %v83 = vmul.f32 %v69, %v45
  %v84 = vmul.f32 %v72, %v45
  %v85 = vmul.f32 %v75, %v45
  %v86 = vmul.f32 %v78, %v45
  %v87 = vmul.f32 %v81, %v45
  %v88 = vadd.f32 %v82, 1e-05
  %v89 = vadd.f32 %v83, 1e-05
  %v90 = vadd.f32 %v84, 1e-05
  %v91 = vadd.f32 %v85, 1e-05
  %v92 = vadd.f32 %v86, 1e-05
  %v93 = vadd.f32 %v87, 1e-05
  %v94 = vrsqrt.pop %v88
  %v95 = vrsqrt.pop %v89
  %v96 = vrsqrt.pop %v90
  %v97 = vrsqrt.pop %v91
  %v98 = vrsqrt.pop %v92
  %v99 = vrsqrt.pop %v93
  %v100 = vmul.f32 %v52, %v94
  %v101 = vmul.f32 %v53, %v95
  %v102 = vmul.f32 %v54, %v96
  %v103 = vmul.f32 %v55, %v97
  %v104 = vmul.f32 %v56, %v98
  %v105 = vmul.f32 %v57, %v99
  %v106 = vld [vmem:[%s1] sm:$0x1]
  %v108 = vlaneseq
  %v109 = vshrl.u32 %v108, 7
  %v110 = vsub.s32 0, %v109
  %v111 = vrot.slane %v106, %v110
  %v113 = vmul.f32 %v100, %v111
  %v114 = vmul.f32 %v101, %v111
  %v115 = vmul.f32 %v102, %v111
  %v116 = vmul.f32 %v103, %v111
  %v117 = vmul.f32 %v104, %v111
  %v118 = vmul.f32 %v105, %v111
  %v119 = vld [vmem:[%s2] sm:$0x1]
  %v121 = vlaneseq
  %v122 = vshrl.u32 %v121, 7
  %v123 = vsub.s32 0, %v122
  %v124 = vrot.slane %v119, %v123
  %v126 = vadd.f32 %v113, %v124
  %v127 = vadd.f32 %v114, %v124
  %v128 = vadd.f32 %v115, %v124
  %v129 = vadd.f32 %v116, %v124
  %v130 = vadd.f32 %v117, %v124
  %v131 = vadd.f32 %v118, %v124
  %v132 = vld [vmem:[%s3] sm:$0xff]
  %v133 = vld [vmem:[%s3 + $0x8] sm:$0xff]
  %v134 = vld [vmem:[%s3 + $0x10] sm:$0xff]
  %v135 = vld [vmem:[%s3 + $0x18] sm:$0xff]
  %v136 = vld [vmem:[%s4] sm:$0x1]
  %v138 = vlaneseq
  %v139 = vshrl.u32 %v138, 7
  %v140 = vsub.s32 0, %v139
  %v141 = vrot.slane %v136, %v140
  %v144 = vsel %vm26, %v126, 0
  %v147 = vsel %vm26, %v127, 0
  %v150 = vsel %vm26, %v128, 0
  %v153 = vsel %vm26, %v129, 0
  %v156 = vsel %vm26, %v130, 0
  %v159 = vsel %vm26, %v131, 0
  %161 = vmatprep.subr.mxu0 0.0
  %162 = vmatpush1.msra.mxu0 %v132
  %163 = vmatprep.subr.mxu0 0.0
  %164 = vmatpush1.msra.mxu0 %v133
  %165 = vmatprep.subr.mxu0 0.0
  %166 = vmatpush1.msra.mxu0 %v134
  %167 = vmatprep.subr.mxu0 0.0
  %168 = vmatpush1.msra.mxu0 %v135
  %169 = vmatprep.subr.mxu0 0.0
  %170 = vmatpush1.msra.mxu0 0.0
  %171 = vmatprep.subr.mxu0 0.0
  %172 = vmatpush1.msra.mxu0 0.0
  %173 = vmatprep.subr.mxu0 0.0
  %174 = vmatpush1.msra.mxu0 0.0
  %175 = vmatprep.subr.mxu0 0.0
  %176 = vmatpush1.msra.mxu0 0.0
  %177 = vmatprep.subr.mxu0 0.0
  %178 = vmatpush1.msra.mxu0 0.0
  %179 = vmatprep.subr.mxu0 0.0
  %180 = vmatpush1.msra.mxu0 0.0
  %181 = vmatprep.subr.mxu0 0.0
  %182 = vmatpush1.msra.mxu0 0.0
  %183 = vmatprep.subr.mxu0 0.0
  %184 = vmatpush1.msra.mxu0 0.0
  %185 = vmatprep.subr.mxu0 0.0
  %186 = vmatpush1.msra.mxu0 0.0
  %187 = vmatprep.subr.mxu0 0.0
  %188 = vmatpush1.msra.mxu0 0.0
  %189 = vmatprep.subr.mxu0 0.0
  %190 = vmatpush1.msra.mxu0 0.0
  %191 = vmatprep.subr.mxu0 0.0
  %192 = vmatpush1.msra.mxu0 0.0
  %193 = vmatprep.subr.mxu0 0.0
  %194 = vmatpush1.msra.mxu0 0.0
  %195 = vmatprep.subr.mxu0 0.0
  %196 = vmatpush1.msra.mxu0 0.0
  %197 = vmatprep.subr.mxu0 0.0
  %198 = vmatpush1.msra.mxu0 0.0
  %199 = vmatprep.subr.mxu0 0.0
  %200 = vmatpush1.msra.mxu0 0.0
  %201 = vmatprep.subr.mxu0 0.0
  %202 = vmatpush1.msra.mxu0 0.0
  %203 = vmatprep.subr.mxu0 0.0
  %204 = vmatpush1.msra.mxu0 0.0
  %205 = vmatprep.subr.mxu0 0.0
  %206 = vmatpush1.msra.mxu0 0.0
  %207 = vmatprep.subr.mxu0 0.0
  %208 = vmatpush1.msra.mxu0 0.0
  %209 = vmatprep.subr.mxu0 0.0
  %210 = vmatpush1.msra.mxu0 0.0
  %211 = vmatprep.subr.mxu0 0.0
  %212 = vmatpush1.msra.mxu0 0.0
  %213 = vmatprep.subr.mxu0 0.0
  %214 = vmatpush1.msra.mxu0 0.0
  %215 = vmatprep.subr.mxu0 0.0
  %216 = vmatpush1.msra.mxu0 0.0
  %217 = vmatprep.subr.mxu0 0.0
  %218 = vmatpush1.msra.mxu0 0.0
  %219 = vmatprep.subr.mxu0 0.0
  %220 = vmatpush1.msra.mxu0 0.0
  %221 = vmatprep.subr.mxu0 0.0
  %222 = vmatpush1.msra.mxu0 0.0
  %223 = vmatprep.subr.mxu0 0.0
  %224 = vmatpush1.msra.mxu0 0.0
  %225 = vmatprep.mubr.f32.mxu0 0.0
  %226 = vmatmul.mubr.f32.gmra.mrb[0].mxu0 %v144
  %v227 = vpop.f32.mrb[0].mxu0
  %v228 = vadd.f32 %v141, %v227
  %v229 = vpop.f32.mrb[0].mxu0
  %230 = vmatprep.mubr.f32.mxu0 0.0
  %231 = vmatmul.mubr.f32.gmra.mrb[0].mxu0 %v147
  %v232 = vpop.f32.mrb[0].mxu0
  %v233 = vadd.f32 %v141, %v232
  %v234 = vpop.f32.mrb[0].mxu0
  %235 = vmatprep.mubr.f32.mxu0 0.0
  %236 = vmatmul.mubr.f32.gmra.mrb[0].mxu0 %v150
  %v237 = vpop.f32.mrb[0].mxu0
  %v238 = vadd.f32 %v141, %v237
  %v239 = vpop.f32.mrb[0].mxu0
  %240 = vmatprep.mubr.f32.mxu0 0.0
  %241 = vmatmul.mubr.f32.gmra.mrb[0].mxu0 %v153
  %v242 = vpop.f32.mrb[0].mxu0
  %v243 = vadd.f32 %v141, %v242
  %v244 = vpop.f32.mrb[0].mxu0
  %245 = vmatprep.mubr.f32.mxu0 0.0
  %246 = vmatmul.mubr.f32.gmra.mrb[0].mxu0 %v156
  %v247 = vpop.f32.mrb[0].mxu0
  %v248 = vadd.f32 %v141, %v247
  %v249 = vpop.f32.mrb[0].mxu0
  %250 = vmatprep.mubr.f32.mxu0 0.0
  %251 = vmatmul.mubr.f32.gmra.mrb[0].mxu0 %v159
  %v252 = vpop.f32.mrb[0].mxu0
  %v253 = vadd.f32 %v141, %v252
  %v254 = vpop.f32.mrb[0].mxu0
  %255 = vdwg.mxu0
  %vm256 = vcmask 785408
  %257 = vst.msk [vmem:[%s5] sm:$0xff] %vm256, %v228
  %258 = vst.msk [vmem:[%s5 + $0x8] sm:$0xff] %vm256, %v233
  %259 = vst.msk [vmem:[%s5 + $0x10] sm:$0xff] %vm256, %v238
  %260 = vst.msk [vmem:[%s5 + $0x18] sm:$0xff] %vm256, %v243
  %261 = vst.msk [vmem:[%s5 + $0x20] sm:$0xff] %vm256, %v248
  %262 = vst.msk [vmem:[%s5 + $0x28] sm:$0xff] %vm256, %v253
  // Predicated region
  $region22: #{vit_forward.13} parent=0 // pred_check
    _
  $region23: #{vit_forward.13} parent=0 // pred_check_branch
    %264 = sbr.rel (0) target = $region25
  $region24: #{vit_forward.13} parent=0 // pred_region
    _
  $region25: #{vit_forward.13} parent=0 // pred_fallthru
    _
  // Predicated region
  $region26: #{vit_forward.13} parent=0 // pred_check
    _
  $region27: #{vit_forward.13} parent=0 // pred_check_branch
    %266 = sbr.rel (0) target = $region29
  $region28: #{vit_forward.13} parent=0 // pred_region
    _
  $region29: #{vit_forward.13} parent=0 // pred_fallthru
    _

// kernel: vit_forward.14
$region0: #{vit_forward.14}
  #allocation0 [shape = 'u32[]', space=smem, size = 0x4, offset = 0x4, fixed_abs, tag = 'smem constant byte address 0x4 - core index']
  #allocation1 [shape = 'u32[144,128]{1,0:T(1,128)}', space=vmem, size = 0x12000, scoped, tag = 'internal scratch']
  %s0 = inlined_call_operand.vmem [shape: f32[2,24,96], index: 0, kind: input, shape index: {}]
  %s1 = inlined_call_operand.vmem [shape: f32[2,24,32], index: 1, kind: output, shape index: {}]
  %s2 = sld [smem:[#allocation0]]
  $region37: #{vit_forward.14} parent=0
    _
  %s4 = ssub.s32 1, %s2
  %s5 = scalar_select 0, %s4, %s2
  loop: start=0, step=1, limit=4
  $region2: #{vit_forward.14} parent=0 // loop_pre_header
    _
  $region3: #{vit_forward.14} parent=0 // loop_header
    %s7 = sphi 0, %s11
    %p8 = scmp.ge.s32.totalorder %s7, 4
    %s17 = sphi 0, %s19
    %s20 = sphi 0, %s17
    %s21 = sphi 0, %s20
    %s37 = sphi 0, %s21
    %s43 = sphi 0, %s45
    %s46 = sphi 0, %s43
    %s47 = sphi 0, %s46
    %s63 = sphi 0, %s47
  $region4: #{vit_forward.14} parent=0 // loop_header_branch
    %10 = sbr.rel (%p8) target = $region8
  $region5: #{vit_forward.14} parent=0 // loop_body
    %s12 = ssub.s32 %s7, 1
    %s13 = ssub.s32 %s7, 2
    %s14 = sadd.s32 %s7, 1
    %s15 = ssub.s32 %s7, %s14
    %p16 = scmp.eq.s32.totalorder %s15, 0
    %s18 = sadd.s32 %s17, 1
    %s19 = scalar_select %p16, %s17, %s18
    %p22 = pneg %p16
    %p23 = scmp.eq.s32.totalorder %s7, 1
    %p24 = por %p22, %p23
    %p25 = scmp.ne.s32.totalorder %s17, %s20
    %p26 = scmp.eq.s32.totalorder %s7, 0
    %p27 = por %p25, %p26
    %p28 = scmp.ne.s32.totalorder %s17, %s20
    %p29 = scmp.eq.s32.totalorder %s12, 1
    %p30 = por %p28, %p29
    %p31 = scmp.ne.s32.totalorder %s20, %s21
    %p32 = scmp.eq.s32.totalorder %s12, 0
    %p33 = por %p31, %p32
    %p34 = scmp.ne.s32.totalorder %s20, %s21
    %p35 = scmp.eq.s32.totalorder %s13, 1
    %p36 = por %p34, %p35
    %p38 = scmp.ne.s32.totalorder %s21, %s37
    %p39 = scmp.eq.s32.totalorder %s13, 0
    %p40 = por %p38, %p39
    %s41 = ssub.s32 %s7, %s14
    %p42 = scmp.eq.s32.totalorder %s41, 0
    %s44 = sadd.s32 %s43, 1
    %s45 = scalar_select %p42, %s43, %s44
    %p48 = pneg %p42
    %p49 = scmp.eq.s32.totalorder %s7, 1
    %p50 = por %p48, %p49
    %p51 = scmp.ne.s32.totalorder %s43, %s46
    %p52 = scmp.eq.s32.totalorder %s7, 0
    %p53 = por %p51, %p52
    %p54 = scmp.ne.s32.totalorder %s43, %s46
    %p55 = scmp.eq.s32.totalorder %s12, 1
    %p56 = por %p54, %p55
    %p57 = scmp.ne.s32.totalorder %s46, %s47
    %p58 = scmp.eq.s32.totalorder %s12, 0
    %p59 = por %p57, %p58
    %p60 = scmp.ne.s32.totalorder %s46, %s47
    %p61 = scmp.eq.s32.totalorder %s13, 1
    %p62 = por %p60, %p61
    %p64 = scmp.ne.s32.totalorder %s47, %s63
    %p65 = scmp.eq.s32.totalorder %s13, 0
    %p66 = por %p64, %p65
    %p67 = scmp.le.s32.totalorder 1, %s7
    %p68 = scmp.lt.s32.totalorder %s7, 3
    %p69 = pnand %p67, %p68
    %p70 = pneg %p69
    // Predicated region
    $region9: #{vit_forward.14} parent=5 // pred_check
      _
    $region10: #{vit_forward.14} parent=5 // pred_check_branch
      %72 = sbr.rel (%p69) target = $region12
    $region11: #{vit_forward.14} parent=5 // pred_region
      %s73 = ssub.s32 %s7, 1
    $region12: #{vit_forward.14} parent=5 // pred_fallthru
      _
    %p74 = scmp.lt.s32.totalorder %s7, 2
    // Predicated region
    $region13: #{vit_forward.14} parent=5 // pred_check
      %p75 = pneg %p74
    $region14: #{vit_forward.14} parent=5 // pred_check_branch
      %77 = sbr.rel (%p75) target = $region16
    $region15: #{vit_forward.14} parent=5 // pred_region
      // Predicated region
      $region17: #{vit_forward.14} parent=15 // pred_check
        %p78 = pneg %p27
      $region18: #{vit_forward.14} parent=15 // pred_check_branch
        %80 = sbr.rel (%p78) target = $region20
      $region19: #{vit_forward.14} parent=15 // pred_region
        %p81 = scmp.lt.s32.totalorder %s7, 1
        %s82 = scalar_select %p81, %s7, 1
        %s83 = smul.addr %s82, 3
        %s84 = smul.addr %s83, 8
        %s85 = scalar_lea.vmem %s0, %s84
      $region20: #{vit_forward.14} parent=15 // pred_fallthru
        _
    $region16: #{vit_forward.14} parent=5 // pred_fallthru
      _
    %p86 = scmp.le.s32.totalorder 1, %s7
    %p87 = scmp.lt.s32.totalorder %s7, 3
    %p88 = pnand %p86, %p87
    %p89 = pneg %p88
    // Predicated region
    $region21: #{vit_forward.14} parent=5 // pred_check
      _
    $region22: #{vit_forward.14} parent=5 // pred_check_branch
      %91 = sbr.rel (%p88) target = $region24
    $region23: #{vit_forward.14} parent=5 // pred_region
      %s92 = ssub.s32 %s7, 1
      %p93 = scmp.lt.s32.totalorder %s12, 1
      %s94 = scalar_select %p93, %s12, 1
      %s95 = smul.addr %s94, 3
      %s96 = smul.addr %s95, 8
      %s97 = scalar_lea.vmem %s0, %s96
      %p98 = pneg %p33
      %p99 = pneg %p30
      %p100 = pneg %p59
      %p101 = pneg %p56
      %p102 = scmp.lt.s32.totalorder %s12, 1
      %s103 = scalar_select %p102, %s12, 1
      %s104 = smul.addr %s103, 3
      %s105 = smul.addr %s104, 8
      %s106 = scalar_lea.vmem %s1, %s105
      %p107 = scmp.lt.s32.totalorder %s12, 1
      %s108 = scalar_select %p107, %s12, 1
      %s109 = smul.addr %s108, 3
      %s110 = smul.addr %s109, 8
      %s111 = scalar_lea.vmem %s0, %s110
      %p112 = scmp.lt.s32.totalorder %s12, 1
      %s113 = scalar_select %p112, %s12, 1
      %s114 = smul.addr %s113, 3
      %s115 = smul.addr %s114, 8
      %s116 = scalar_lea.vmem %s1, %s115
      %v117 = vld [vmem:[%s111] sm:$0xff]
      %v118 = vld [vmem:[%s111 + $0x8] sm:$0xff]
      %v119 = vld [vmem:[%s111 + $0x10] sm:$0xff]
      %v120 = vlaneseq
      %v121 = vand.u32 %v120, 127
      %vm122 = vcmp.lt.s32.totalorder %v121, 17
      %v123 = vmul.f32 %v117, 0.35355338
      %v124 = vmul.f32 %v118, 0.35355338
      %v125 = vmul.f32 %v119, 0.35355338
      %129 = vrot.lane.b32.xlu0 %v117, 96
      %v130 = vpop.permute.xlu0 %129
      %131 = vrot.lane.b32.xlu0 %v118, 96
      %v132 = vpop.permute.xlu0 %131
      %133 = vrot.lane.b32.xlu0 %v119, 96
      %v134 = vpop.permute.xlu0 %133
      %vm135 = vcmask 64512
      %v137 = vsel %vm135, %v123, 0
      %v140 = vsel %vm135, %v124, 0
      %v143 = vsel %vm135, %v125, 0
      %v145 = vsel %vm135, %v130, 0
      %v147 = vsel %vm135, %v132, 0
      %v149 = vsel %vm135, %v134, 0
      %151 = vmatprep.subr.mxu0 0.0
      %152 = vmatpush1.xpose.msra.mxu0 %v145
      %153 = vmatprep.subr.mxu0 0.0
      %154 = vmatpush1.xpose.msra.mxu0 %v147
      %155 = vmatprep.subr.mxu0 0.0
      %156 = vmatpush1.xpose.msra.mxu0 %v149
      %157 = vmatprep.subr.mxu0 0.0
      %158 = vmatpush1.xpose.msra.mxu0 0.0
      %159 = vmatprep.subr.mxu0 0.0
      %160 = vmatpush1.xpose.msra.mxu0 0.0
      %161 = vmatprep.subr.mxu0 0.0
      %162 = vmatpush1.xpose.msra.mxu0 0.0
      %163 = vmatprep.subr.mxu0 0.0
      %164 = vmatpush1.xpose.msra.mxu0 0.0
      %165 = vmatprep.subr.mxu0 0.0
      %166 = vmatpush1.xpose.msra.mxu0 0.0
      %167 = vmatprep.subr.mxu0 0.0
      %168 = vmatpush1.xpose.msra.mxu0 0.0
      %169 = vmatprep.subr.mxu0 0.0
      %170 = vmatpush1.xpose.msra.mxu0 0.0
      %171 = vmatprep.subr.mxu0 0.0
      %172 = vmatpush1.xpose.msra.mxu0 0.0
      %173 = vmatprep.subr.mxu0 0.0
      %174 = vmatpush1.xpose.msra.mxu0 0.0
      %175 = vmatprep.subr.mxu0 0.0
      %176 = vmatpush1.xpose.msra.mxu0 0.0
      %177 = vmatprep.subr.mxu0 0.0
      %178 = vmatpush1.xpose.msra.mxu0 0.0
      %179 = vmatprep.subr.mxu0 0.0
      %180 = vmatpush1.xpose.msra.mxu0 0.0
      %181 = vmatprep.subr.mxu0 0.0
      %182 = vmatpush1.xpose.msra.mxu0 0.0
      %183 = vmatprep.subr.mxu0 0.0
      %184 = vmatpush1.xpose.msra.mxu0 0.0
      %185 = vmatprep.subr.mxu0 0.0
      %186 = vmatpush1.xpose.msra.mxu0 0.0
      %187 = vmatprep.subr.mxu0 0.0
      %188 = vmatpush1.xpose.msra.mxu0 0.0
      %189 = vmatprep.subr.mxu0 0.0
      %190 = vmatpush1.xpose.msra.mxu0 0.0
      %191 = vmatprep.subr.mxu0 0.0
      %192 = vmatpush1.xpose.msra.mxu0 0.0
      %193 = vmatprep.subr.mxu0 0.0
      %194 = vmatpush1.xpose.msra.mxu0 0.0
      %195 = vmatprep.subr.mxu0 0.0
      %196 = vmatpush1.xpose.msra.mxu0 0.0
      %197 = vmatprep.subr.mxu0 0.0
      %198 = vmatpush1.xpose.msra.mxu0 0.0
      %199 = vmatprep.subr.mxu0 0.0
      %200 = vmatpush1.xpose.msra.mxu0 0.0
      %201 = vmatprep.subr.mxu0 0.0
      %202 = vmatpush1.xpose.msra.mxu0 0.0
      %203 = vmatprep.subr.mxu0 0.0
      %204 = vmatpush1.xpose.msra.mxu0 0.0
      %205 = vmatprep.subr.mxu0 0.0
      %206 = vmatpush1.xpose.msra.mxu0 0.0
      %207 = vmatprep.subr.mxu0 0.0
      %208 = vmatpush1.xpose.msra.mxu0 0.0
      %209 = vmatprep.subr.mxu0 0.0
      %210 = vmatpush1.xpose.msra.mxu0 0.0
      %211 = vmatprep.subr.mxu0 0.0
      %212 = vmatpush1.xpose.msra.mxu0 0.0
      %213 = vmatprep.subr.mxu0 0.0
      %214 = vmatpush1.xpose.msra.mxu0 0.0
      %215 = vmatprep.mubr.f32.mxu0 0.0
      %216 = vmatmul.mubr.f32.gmra.mrb[0].mxu0 %v137
      %v217 = vpop.f32.mrb[0].mxu0
      %v218 = vadd.f32 0.0, %v217
      %v219 = vpop.f32.mrb[0].mxu0
      %220 = vmatprep.mubr.f32.mxu0 0.0
      %221 = vmatmul.mubr.f32.gmra.mrb[0].mxu0 %v140
      %v222 = vpop.f32.mrb[0].mxu0
      %v223 = vadd.f32 0.0, %v222
      %v224 = vpop.f32.mrb[0].mxu0
      %225 = vmatprep.mubr.f32.mxu0 0.0
      %226 = vmatmul.mubr.f32.gmra.mrb[0].mxu0 %v143
      %v227 = vpop.f32.mrb[0].mxu0
      %v228 = vadd.f32 0.0, %v227
      %v229 = vpop.f32.mrb[0].mxu0
      %230 = vdwg.mxu0
      %v231 = vsel %vm122, %v218, -1e+30
      %v232 = vsel %vm122, %v223, -1e+30
      %v233 = vsel %vm122, %v228, -1e+30
      %vm234 = vcmask 195584
      %v235 = vsel %vm234, %v231, -inf
      %236 = vmax.xlane.f32.xlu0 %v235
      %v237 = vpop.xlane.xlu0 %236
      %v238 = vsel %vm234, %v232, -inf
      %239 = vmax.xlane.f32.xlu0 %v238
      %v240 = vpop.xlane.xlu0 %239
      %v241 = vsel %vm234, %v233, -inf
      %242 = vmax.xlane.f32.xlu0 %v241
      %v243 = vpop.xlane.xlu0 %242
      %v244 = vsub.f32 %v231, %v237
      %v245 = vsub.f32 %v232, %v240
      %v246 = vsub.f32 %v233, %v243
      %v247 = vmul.f32 %v244, 1.442695
      %v248 = vpow.pop %v247
      %v249 = vmul.f32 %v245, 1.442695
      %v250 = vpow.pop %v249
      %v251 = vmul.f32 %v246, 1.442695
      %v252 = vpow.pop %v251
      %v253 = vsel %vm234, %v248, 0.0
      %254 = vadd.xlane.f32.xlu0 %v253
      %v255 = vpop.xlane.xlu0 %254
      %v256 = vsel %vm234, %v250, 0.0
      %257 = vadd.xlane.f32.xlu0 %v256
      %v258 = vpop.xlane.xlu0 %257
      %v259 = vsel %vm234, %v252, 0.0
      %260 = vadd.xlane.f32.xlu0 %v259
      %v261 = vpop.xlane.xlu0 %260
      %v262 = vrcp.pop %v255
      %v263 = vrcp.pop %v258
      %v264 = vrcp.pop %v261
      %v265 = vmul.f32 %v248, %v262
      %v266 = vmul.f32 %v250, %v263
      %v267 = vmul.f32 %v252, %v264
      %268 = vrot.lane.b32.xlu0 %v117, 64
      %v269 = vpop.permute.xlu0 %268
      %270 = vrot.lane.b32.xlu0 %v118, 64
      %v271 = vpop.permute.xlu0 %270
      %272 = vrot.lane.b32.xlu0 %v119, 64
      %v273 = vpop.permute.xlu0 %272
      %v278 = vsel %vm234, %v265, 0
      %v281 = vsel %vm234, %v266, 0
      %v284 = vsel %vm234, %v267, 0
      %286 = vmatprep.subr.mxu0 0.0
      %287 = vmatpush1.msra.mxu0 %v269
      %288 = vmatprep.subr.mxu0 0.0
      %289 = vmatpush1.msra.mxu0 %v271
      %290 = vmatprep.subr.mxu0 0.0
      %291 = vmatpush1.msra.mxu0 %v273
      %292 = vmatprep.subr.mxu0 0.0
      %293 = vmatpush1.msra.mxu0 0.0
      %294 = vmatprep.subr.mxu0 0.0
      %295 = vmatpush1.msra.mxu0 0.0
      %296 = vmatprep.subr.mxu0 0.0
      %297 = vmatpush1.msra.mxu0 0.0
      %298 = vmatprep.subr.mxu0 0.0
      %299 = vmatpush1.msra.mxu0 0.0
      %300 = vmatprep.subr.mxu0 0.0
      %301 = vmatpush1.msra.mxu0 0.0
      %302 = vmatprep.subr.mxu0 0.0
      %303 = vmatpush1.msra.mxu0 0.0
      %304 = vmatprep.subr.mxu0 0.0
      %305 = vmatpush1.msra.mxu0 0.0
      %306 = vmatprep.subr.mxu0 0.0
      %307 = vmatpush1.msra.mxu0 0.0
      %308 = vmatprep.subr.mxu0 0.0
      %309 = vmatpush1.msra.mxu0 0.0
      %310 = vmatprep.subr.mxu0 0.0
      %311 = vmatpush1.msra.mxu0 0.0
      %312 = vmatprep.subr.mxu0 0.0
      %313 = vmatpush1.msra.mxu0 0.0
      %314 = vmatprep.subr.mxu0 0.0
      %315 = vmatpush1.msra.mxu0 0.0
      %316 = vmatprep.subr.mxu0 0.0
      %317 = vmatpush1.msra.mxu0 0.0
      %318 = vmatprep.subr.mxu0 0.0
      %319 = vmatpush1.msra.mxu0 0.0
      %320 = vmatprep.subr.mxu0 0.0
      %321 = vmatpush1.msra.mxu0 0.0
      %322 = vmatprep.subr.mxu0 0.0
      %323 = vmatpush1.msra.mxu0 0.0
      %324 = vmatprep.subr.mxu0 0.0
      %325 = vmatpush1.msra.mxu0 0.0
      %326 = vmatprep.subr.mxu0 0.0
      %327 = vmatpush1.msra.mxu0 0.0
      %328 = vmatprep.subr.mxu0 0.0
      %329 = vmatpush1.msra.mxu0 0.0
      %330 = vmatprep.subr.mxu0 0.0
      %331 = vmatpush1.msra.mxu0 0.0
      %332 = vmatprep.subr.mxu0 0.0
      %333 = vmatpush1.msra.mxu0 0.0
      %334 = vmatprep.subr.mxu0 0.0
      %335 = vmatpush1.msra.mxu0 0.0
      %336 = vmatprep.subr.mxu0 0.0
      %337 = vmatpush1.msra.mxu0 0.0
      %338 = vmatprep.subr.mxu0 0.0
      %339 = vmatpush1.msra.mxu0 0.0
      %340 = vmatprep.subr.mxu0 0.0
      %341 = vmatpush1.msra.mxu0 0.0
      %342 = vmatprep.subr.mxu0 0.0
      %343 = vmatpush1.msra.mxu0 0.0
      %344 = vmatprep.subr.mxu0 0.0
      %345 = vmatpush1.msra.mxu0 0.0
      %346 = vmatprep.subr.mxu0 0.0
      %347 = vmatpush1.msra.mxu0 0.0
      %348 = vmatprep.subr.mxu0 0.0
      %349 = vmatpush1.msra.mxu0 0.0
      %350 = vmatprep.mubr.f32.mxu0 0.0
      %351 = vmatmul.mubr.f32.gmra.mrb[0].mxu0 %v278
      %v352 = vpop.f32.mrb[0].mxu0
      %v353 = vadd.f32 0.0, %v352
      %v354 = vpop.f32.mrb[0].mxu0
      %355 = vmatprep.mubr.f32.mxu0 0.0
      %356 = vmatmul.mubr.f32.gmra.mrb[0].mxu0 %v281
      %v357 = vpop.f32.mrb[0].mxu0
      %v358 = vadd.f32 0.0, %v357
      %v359 = vpop.f32.mrb[0].mxu0
      %360 = vmatprep.mubr.f32.mxu0 0.0
      %361 = vmatmul.mubr.f32.gmra.mrb[0].mxu0 %v284
      %v362 = vpop.f32.mrb[0].mxu0
      %v363 = vadd.f32 0.0, %v362
      %v364 = vpop.f32.mrb[0].mxu0
      %365 = vdwg.mxu0
      %366 = vrot.lane.b32.xlu0 %v123, 120
      %v367 = vpop.permute.xlu0 %366
      %368 = vrot.lane.b32.xlu0 %v124, 120
      %v369 = vpop.permute.xlu0 %368
      %370 = vrot.lane.b32.xlu0 %v125, 120
      %v371 = vpop.permute.xlu0 %370
      %372 = vrot.lane.b32.xlu0 %v117, 88
      %v373 = vpop.permute.xlu0 %372
      %374 = vrot.lane.b32.xlu0 %v118, 88
      %v375 = vpop.permute.xlu0 %374
      %376 = vrot.lane.b32.xlu0 %v119, 88
      %v377 = vpop.permute.xlu0 %376
      %v378 = vsel %vm135, %v367, 0
      %v380 = vsel %vm135, %v369, 0
      %v382 = vsel %vm135, %v371, 0
      %v384 = vsel %vm135, %v373, 0
      %v386 = vsel %vm135, %v375, 0
      %v388 = vsel %vm135, %v377, 0
      %390 = vmatprep.subr.mxu0 0.0
      %391 = vmatpush1.xpose.msra.mxu0 %v384
      %392 = vmatprep.subr.mxu0 0.0
      %393 = vmatpush1.xpose.msra.mxu0 %v386
      %394 = vmatprep.subr.mxu0 0.0
      %395 = vmatpush1.xpose.msra.mxu0 %v388
      %396 = vmatprep.subr.mxu0 0.0
      %397 = vmatpush1.xpose.msra.mxu0 0.0
      %398 = vmatprep.subr.mxu0 0.0
      %399 = vmatpush1.xpose.msra.mxu0 0.0
      %400 = vmatprep.subr.mxu0 0.0
      %401 = vmatpush1.xpose.msra.mxu0 0.0
      %402 = vmatprep.subr.mxu0 0.0
      %403 = vmatpush1.xpose.msra.mxu0 0.0
      %404 = vmatprep.subr.mxu0 0.0
      %405 = vmatpush1.xpose.msra.mxu0 0.0
      %406 = vmatprep.subr.mxu0 0.0
      %407 = vmatpush1.xpose.msra.mxu0 0.0
      %408 = vmatprep.subr.mxu0 0.0
      %409 = vmatpush1.xpose.msra.mxu0 0.0
      %410 = vmatprep.subr.mxu0 0.0
      %411 = vmatpush1.xpose.msra.mxu0 0.0
      %412 = vmatprep.subr.mxu0 0.0
      %413 = vmatpush1.xpose.msra.mxu0 0.0
      %414 = vmatprep.subr.mxu0 0.0
      %415 = vmatpush1.xpose.msra.mxu0 0.0
      %416 = vmatprep.subr.mxu0 0.0
      %417 = vmatpush1.xpose.msra.mxu0 0.0
      %418 = vmatprep.subr.mxu0 0.0
      %419 = vmatpush1.xpose.msra.mxu0 0.0
      %420 = vmatprep.subr.mxu0 0.0
      %421 = vmatpush1.xpose.msra.mxu0 0.0
      %422 = vmatprep.subr.mxu0 0.0
      %423 = vmatpush1.xpose.msra.mxu0 0.0
      %424 = vmatprep.subr.mxu0 0.0
      %425 = vmatpush1.xpose.msra.mxu0 0.0
      %426 = vmatprep.subr.mxu0 0.0
      %427 = vmatpush1.xpose.msra.mxu0 0.0
      %428 = vmatprep.subr.mxu0 0.0
      %429 = vmatpush1.xpose.msra.mxu0 0.0
      %430 = vmatprep.subr.mxu0 0.0
      %431 = vmatpush1.xpose.msra.mxu0 0.0
      %432 = vmatprep.subr.mxu0 0.0
      %433 = vmatpush1.xpose.msra.mxu0 0.0
      %434 = vmatprep.subr.mxu0 0.0
      %435 = vmatpush1.xpose.msra.mxu0 0.0
      %436 = vmatprep.subr.mxu0 0.0
      %437 = vmatpush1.xpose.msra.mxu0 0.0
      %438 = vmatprep.subr.mxu0 0.0
      %439 = vmatpush1.xpose.msra.mxu0 0.0
      %440 = vmatprep.subr.mxu0 0.0
      %441 = vmatpush1.xpose.msra.mxu0 0.0
      %442 = vmatprep.subr.mxu0 0.0
      %443 = vmatpush1.xpose.msra.mxu0 0.0
      %444 = vmatprep.subr.mxu0 0.0
      %445 = vmatpush1.xpose.msra.mxu0 0.0
      %446 = vmatprep.subr.mxu0 0.0
      %447 = vmatpush1.xpose.msra.mxu0 0.0
      %448 = vmatprep.subr.mxu0 0.0
      %449 = vmatpush1.xpose.msra.mxu0 0.0
      %450 = vmatprep.subr.mxu0 0.0
      %451 = vmatpush1.xpose.msra.mxu0 0.0
      %452 = vmatprep.subr.mxu0 0.0
      %453 = vmatpush1.xpose.msra.mxu0 0.0
      %454 = vmatprep.mubr.f32.mxu0 0.0
      %455 = vmatmul.mubr.f32.gmra.mrb[0].mxu0 %v378
      %v456 = vpop.f32.mrb[0].mxu0
      %v457 = vadd.f32 0.0, %v456
      %v458 = vpop.f32.mrb[0].mxu0
      %459 = vmatprep.mubr.f32.mxu0 0.0
      %460 = vmatmul.mubr.f32.gmra.mrb[0].mxu0 %v380
      %v461 = vpop.f32.mrb[0].mxu0
      %v462 = vadd.f32 0.0, %v461
      %v463 = vpop.f32.mrb[0].mxu0
      %464 = vmatprep.mubr.f32.mxu0 0.0
      %465 = vmatmul.mubr.f32.gmra.mrb[0].mxu0 %v382
      %v466 = vpop.f32.mrb[0].mxu0
      %v467 = vadd.f32 0.0, %v466
      %v468 = vpop.f32.mrb[0].mxu0
      %469 = vdwg.mxu0
      %v470 = vsel %vm122, %v457, -1e+30
      %v471 = vsel %vm122, %v462, -1e+30
      %v472 = vsel %vm122, %v467, -1e+30
      %v473 = vsel %vm234, %v470, -inf
      %474 = vmax.xlane.f32.xlu0 %v473
      %v475 = vpop.xlane.xlu0 %474
      %v476 = vsel %vm234, %v471, -inf
      %477 = vmax.xlane.f32.xlu0 %v476
      %v478 = vpop.xlane.xlu0 %477
      %v479 = vsel %vm234, %v472, -inf
      %480 = vmax.xlane.f32.xlu0 %v479
      %v481 = vpop.xlane.xlu0 %480
      %v482 = vsub.f32 %v470, %v475
      %v483 = vsub.f32 %v471, %v478
      %v484 = vsub.f32 %v472, %v481
      %v485 = vmul.f32 %v482, 1.442695
      %v486 = vpow.pop %v485
      %v487 = vmul.f32 %v483, 1.442695
      %v488 = vpow.pop %v487
      %v489 = vmul.f32 %v484, 1.442695
      %v490 = vpow.pop %v489
      %v491 = vsel %vm234, %v486, 0.0
      %492 = vadd.xlane.f32.xlu0 %v491
      %v493 = vpop.xlane.xlu0 %492
      %v494 = vsel %vm234, %v488, 0.0
      %495 = vadd.xlane.f32.xlu0 %v494
      %v496 = vpop.xlane.xlu0 %495
      %v497 = vsel %vm234, %v490, 0.0
      %498 = vadd.xlane.f32.xlu0 %v497
      %v499 = vpop.xlane.xlu0 %498
      %v500 = vrcp.pop %v493
      %v501 = vrcp.pop %v496
      %v502 = vrcp.pop %v499
      %v503 = vmul.f32 %v486, %v500
      %v504 = vmul.f32 %v488, %v501
      %v505 = vmul.f32 %v490, %v502
      %506 = vrot.lane.b32.xlu0 %v117, 56
      %v507 = vpop.permute.xlu0 %506
      %508 = vrot.lane.b32.xlu0 %v118, 56
      %v509 = vpop.permute.xlu0 %508
      %510 = vrot.lane.b32.xlu0 %v119, 56
      %v511 = vpop.permute.xlu0 %510
      %v516 = vsel %vm234, %v503, 0
      %v519 = vsel %vm234, %v504, 0
      %v522 = vsel %vm234, %v505, 0
      %524 = vmatprep.subr.mxu0 0.0
      %525 = vmatpush1.msra.mxu0 %v507
      %526 = vmatprep.subr.mxu0 0.0
      %527 = vmatpush1.msra.mxu0 %v509
      %528 = vmatprep.subr.mxu0 0.0
      %529 = vmatpush1.msra.mxu0 %v511
      %530 = vmatprep.subr.mxu0 0.0
      %531 = vmatpush1.msra.mxu0 0.0
      %532 = vmatprep.subr.mxu0 0.0
      %533 = vmatpush1.msra.mxu0 0.0
      %534 = vmatprep.subr.mxu0 0.0
      %535 = vmatpush1.msra.mxu0 0.0
      %536 = vmatprep.subr.mxu0 0.0
      %537 = vmatpush1.msra.mxu0 0.0
      %538 = vmatprep.subr.mxu0 0.0
      %539 = vmatpush1.msra.mxu0 0.0
      %540 = vmatprep.subr.mxu0 0.0
      %541 = vmatpush1.msra.mxu0 0.0
      %542 = vmatprep.subr.mxu0 0.0
      %543 = vmatpush1.msra.mxu0 0.0
      %544 = vmatprep.subr.mxu0 0.0
      %545 = vmatpush1.msra.mxu0 0.0
      %546 = vmatprep.subr.mxu0 0.0
      %547 = vmatpush1.msra.mxu0 0.0
      %548 = vmatprep.subr.mxu0 0.0
      %549 = vmatpush1.msra.mxu0 0.0
      %550 = vmatprep.subr.mxu0 0.0
      %551 = vmatpush1.msra.mxu0 0.0
      %552 = vmatprep.subr.mxu0 0.0
      %553 = vmatpush1.msra.mxu0 0.0
      %554 = vmatprep.subr.mxu0 0.0
      %555 = vmatpush1.msra.mxu0 0.0
      %556 = vmatprep.subr.mxu0 0.0
      %557 = vmatpush1.msra.mxu0 0.0
      %558 = vmatprep.subr.mxu0 0.0
      %559 = vmatpush1.msra.mxu0 0.0
      %560 = vmatprep.subr.mxu0 0.0
      %561 = vmatpush1.msra.mxu0 0.0
      %562 = vmatprep.subr.mxu0 0.0
      %563 = vmatpush1.msra.mxu0 0.0
      %564 = vmatprep.subr.mxu0 0.0
      %565 = vmatpush1.msra.mxu0 0.0
      %566 = vmatprep.subr.mxu0 0.0
      %567 = vmatpush1.msra.mxu0 0.0
      %568 = vmatprep.subr.mxu0 0.0
      %569 = vmatpush1.msra.mxu0 0.0
      %570 = vmatprep.subr.mxu0 0.0
      %571 = vmatpush1.msra.mxu0 0.0
      %572 = vmatprep.subr.mxu0 0.0
      %573 = vmatpush1.msra.mxu0 0.0
      %574 = vmatprep.subr.mxu0 0.0
      %575 = vmatpush1.msra.mxu0 0.0
      %576 = vmatprep.subr.mxu0 0.0
      %577 = vmatpush1.msra.mxu0 0.0
      %578 = vmatprep.subr.mxu0 0.0
      %579 = vmatpush1.msra.mxu0 0.0
      %580 = vmatprep.subr.mxu0 0.0
      %581 = vmatpush1.msra.mxu0 0.0
      %582 = vmatprep.subr.mxu0 0.0
      %583 = vmatpush1.msra.mxu0 0.0
      %584 = vmatprep.subr.mxu0 0.0
      %585 = vmatpush1.msra.mxu0 0.0
      %586 = vmatprep.subr.mxu0 0.0
      %587 = vmatpush1.msra.mxu0 0.0
      %588 = vmatprep.mubr.f32.mxu0 0.0
      %589 = vmatmul.mubr.f32.gmra.mrb[0].mxu0 %v516
      %v590 = vpop.f32.mrb[0].mxu0
      %v591 = vadd.f32 0.0, %v590
      %v592 = vpop.f32.mrb[0].mxu0
      %593 = vmatprep.mubr.f32.mxu0 0.0
      %594 = vmatmul.mubr.f32.gmra.mrb[0].mxu0 %v519
      %v595 = vpop.f32.mrb[0].mxu0
      %v596 = vadd.f32 0.0, %v595
      %v597 = vpop.f32.mrb[0].mxu0
      %598 = vmatprep.mubr.f32.mxu0 0.0
      %599 = vmatmul.mubr.f32.gmra.mrb[0].mxu0 %v522
      %v600 = vpop.f32.mrb[0].mxu0
      %v601 = vadd.f32 0.0, %v600
      %v602 = vpop.f32.mrb[0].mxu0
      %603 = vdwg.mxu0
      %604 = vrot.lane.b32.xlu0 %v123, 112
      %v605 = vpop.permute.xlu0 %604
      %606 = vrot.lane.b32.xlu0 %v124, 112
      %v607 = vpop.permute.xlu0 %606
      %608 = vrot.lane.b32.xlu0 %v125, 112
      %v609 = vpop.permute.xlu0 %608
      %610 = vrot.lane.b32.xlu0 %v117, 80
      %v611 = vpop.permute.xlu0 %610
      %612 = vrot.lane.b32.xlu0 %v118, 80
      %v613 = vpop.permute.xlu0 %612
      %614 = vrot.lane.b32.xlu0 %v119, 80
      %v615 = vpop.permute.xlu0 %614
      %v616 = vsel %vm135, %v605, 0
      %v618 = vsel %vm135, %v607, 0
      %v620 = vsel %vm135, %v609, 0
      %v622 = vsel %vm135, %v611, 0
      %v624 = vsel %vm135, %v613, 0
      %v626 = vsel %vm135, %v615, 0
      %628 = vmatprep.subr.mxu0 0.0
      %629 = vmatpush1.xpose.msra.mxu0 %v622
      %630 = vmatprep.subr.mxu0 0.0
      %631 = vmatpush1.xpose.msra.mxu0 %v624
      %632 = vmatprep.subr.mxu0 0.0
      %633 = vmatpush1.xpose.msra.mxu0 %v626
      %634 = vmatprep.subr.mxu0 0.0
      %635 = vmatpush1.xpose.msra.mxu0 0.0
      %636 = vmatprep.subr.mxu0 0.0
      %637 = vmatpush1.xpose.msra.mxu0 0.0
      %638 = vmatprep.subr.mxu0 0.0
      %639 = vmatpush1.xpose.msra.mxu0 0.0
      %640 = vmatprep.subr.mxu0 0.0
      %641 = vmatpush1.xpose.msra.mxu0 0.0
      %642 = vmatprep.subr.mxu0 0.0
      %643 = vmatpush1.xpose.msra.mxu0 0.0
      %644 = vmatprep.subr.mxu0 0.0
      %645 = vmatpush1.xpose.msra.mxu0 0.0
      %646 = vmatprep.subr.mxu0 0.0
      %647 = vmatpush1.xpose.msra.mxu0 0.0
      %648 = vmatprep.subr.mxu0 0.0
      %649 = vmatpush1.xpose.msra.mxu0 0.0
      %650 = vmatprep.subr.mxu0 0.0
      %651 = vmatpush1.xpose.msra.mxu0 0.0
      %652 = vmatprep.subr.mxu0 0.0
      %653 = vmatpush1.xpose.msra.mxu0 0.0
      %654 = vmatprep.subr.mxu0 0.0
      %655 = vmatpush1.xpose.msra.mxu0 0.0
      %656 = vmatprep.subr.mxu0 0.0
      %657 = vmatpush1.xpose.msra.mxu0 0.0
      %658 = vmatprep.subr.mxu0 0.0
      %659 = vmatpush1.xpose.msra.mxu0 0.0
      %660 = vmatprep.subr.mxu0 0.0
      %661 = vmatpush1.xpose.msra.mxu0 0.0
      %662 = vmatprep.subr.mxu0 0.0
      %663 = vmatpush1.xpose.msra.mxu0 0.0
      %664 = vmatprep.subr.mxu0 0.0
      %665 = vmatpush1.xpose.msra.mxu0 0.0
      %666 = vmatprep.subr.mxu0 0.0
      %667 = vmatpush1.xpose.msra.mxu0 0.0
      %668 = vmatprep.subr.mxu0 0.0
      %669 = vmatpush1.xpose.msra.mxu0 0.0
      %670 = vmatprep.subr.mxu0 0.0
      %671 = vmatpush1.xpose.msra.mxu0 0.0
      %672 = vmatprep.subr.mxu0 0.0
      %673 = vmatpush1.xpose.msra.mxu0 0.0
      %674 = vmatprep.subr.mxu0 0.0
      %675 = vmatpush1.xpose.msra.mxu0 0.0
      %676 = vmatprep.subr.mxu0 0.0
      %677 = vmatpush1.xpose.msra.mxu0 0.0
      %678 = vmatprep.subr.mxu0 0.0
      %679 = vmatpush1.xpose.msra.mxu0 0.0
      %680 = vmatprep.subr.mxu0 0.0
      %681 = vmatpush1.xpose.msra.mxu0 0.0
      %682 = vmatprep.subr.mxu0 0.0
      %683 = vmatpush1.xpose.msra.mxu0 0.0
      %684 = vmatprep.subr.mxu0 0.0
      %685 = vmatpush1.xpose.msra.mxu0 0.0
      %686 = vmatprep.subr.mxu0 0.0
      %687 = vmatpush1.xpose.msra.mxu0 0.0
      %688 = vmatprep.subr.mxu0 0.0
      %689 = vmatpush1.xpose.msra.mxu0 0.0
      %690 = vmatprep.subr.mxu0 0.0
      %691 = vmatpush1.xpose.msra.mxu0 0.0
      %692 = vmatprep.mubr.f32.mxu0 0.0
      %693 = vmatmul.mubr.f32.gmra.mrb[0].mxu0 %v616
      %v694 = vpop.f32.mrb[0].mxu0
      %v695 = vadd.f32 0.0, %v694
      %v696 = vpop.f32.mrb[0].mxu0
      %697 = vmatprep.mubr.f32.mxu0 0.0
      %698 = vmatmul.mubr.f32.gmra.mrb[0].mxu0 %v618
      %v699 = vpop.f32.mrb[0].mxu0
      %v700 = vadd.f32 0.0, %v699
      %v701 = vpop.f32.mrb[0].mxu0
      %702 = vmatprep.mubr.f32.mxu0 0.0
      %703 = vmatmul.mubr.f32.gmra.mrb[0].mxu0 %v620
      %v704 = vpop.f32.mrb[0].mxu0
      %v705 = vadd.f32 0.0, %v704
      %v706 = vpop.f32.mrb[0].mxu0
      %707 = vdwg.mxu0
      %v708 = vsel %vm122, %v695, -1e+30
      %v709 = vsel %vm122, %v700, -1e+30
      %v710 = vsel %vm122, %v705, -1e+30
      %v711 = vsel %vm234, %v708, -inf
      %712 = vmax.xlane.f32.xlu0 %v711
      %v713 = vpop.xlane.xlu0 %712
      %v714 = vsel %vm234, %v709, -inf
      %715 = vmax.xlane.f32.xlu0 %v714
      %v716 = vpop.xlane.xlu0 %715
      %v717 = vsel %vm234, %v710, -inf
      %718 = vmax.xlane.f32.xlu0 %v717
      %v719 = vpop.xlane.xlu0 %718
      %v720 = vsub.f32 %v708, %v713
      %v721 = vsub.f32 %v709, %v716
      %v722 = vsub.f32 %v710, %v719
      %v723 = vmul.f32 %v720, 1.442695
      %v724 = vpow.pop %v723
      %v725 = vmul.f32 %v721, 1.442695
      %v726 = vpow.pop %v725
      %v727 = vmul.f32 %v722, 1.442695
      %v728 = vpow.pop %v727
      %v729 = vsel %vm234, %v724, 0.0
      %730 = vadd.xlane.f32.xlu0 %v729
      %v731 = vpop.xlane.xlu0 %730
      %v732 = vsel %vm234, %v726, 0.0
      %733 = vadd.xlane.f32.xlu0 %v732
      %v734 = vpop.xlane.xlu0 %733
      %v735 = vsel %vm234, %v728, 0.0
      %736 = vadd.xlane.f32.xlu0 %v735
      %v737 = vpop.xlane.xlu0 %736
      %v738 = vrcp.pop %v731
      %v739 = vrcp.pop %v734
      %v740 = vrcp.pop %v737
      %v741 = vmul.f32 %v724, %v738
      %v742 = vmul.f32 %v726, %v739
      %v743 = vmul.f32 %v728, %v740
      %744 = vrot.lane.b32.xlu0 %v117, 48
      %v745 = vpop.permute.xlu0 %744
      %746 = vrot.lane.b32.xlu0 %v118, 48
      %v747 = vpop.permute.xlu0 %746
      %748 = vrot.lane.b32.xlu0 %v119, 48
      %v749 = vpop.permute.xlu0 %748
      %v754 = vsel %vm234, %v741, 0
      %v757 = vsel %vm234, %v742, 0
      %v760 = vsel %vm234, %v743, 0
      %762 = vmatprep.subr.mxu0 0.0
      %763 = vmatpush1.msra.mxu0 %v745
      %764 = vmatprep.subr.mxu0 0.0
      %765 = vmatpush1.msra.mxu0 %v747
      %766 = vmatprep.subr.mxu0 0.0
      %767 = vmatpush1.msra.mxu0 %v749
      %768 = vmatprep.subr.mxu0 0.0
      %769 = vmatpush1.msra.mxu0 0.0
      %770 = vmatprep.subr.mxu0 0.0
      %771 = vmatpush1.msra.mxu0 0.0
      %772 = vmatprep.subr.mxu0 0.0
      %773 = vmatpush1.msra.mxu0 0.0
      %774 = vmatprep.subr.mxu0 0.0
      %775 = vmatpush1.msra.mxu0 0.0
      %776 = vmatprep.subr.mxu0 0.0
      %777 = vmatpush1.msra.mxu0 0.0
      %778 = vmatprep.subr.mxu0 0.0
      %779 = vmatpush1.msra.mxu0 0.0
      %780 = vmatprep.subr.mxu0 0.0
      %781 = vmatpush1.msra.mxu0 0.0
      %782 = vmatprep.subr.mxu0 0.0
      %783 = vmatpush1.msra.mxu0 0.0
      %784 = vmatprep.subr.mxu0 0.0
      %785 = vmatpush1.msra.mxu0 0.0
      %786 = vmatprep.subr.mxu0 0.0
      %787 = vmatpush1.msra.mxu0 0.0
      %788 = vmatprep.subr.mxu0 0.0
      %789 = vmatpush1.msra.mxu0 0.0
      %790 = vmatprep.subr.mxu0 0.0
      %791 = vmatpush1.msra.mxu0 0.0
      %792 = vmatprep.subr.mxu0 0.0
      %793 = vmatpush1.msra.mxu0 0.0
      %794 = vmatprep.subr.mxu0 0.0
      %795 = vmatpush1.msra.mxu0 0.0
      %796 = vmatprep.subr.mxu0 0.0
      %797 = vmatpush1.msra.mxu0 0.0
      %798 = vmatprep.subr.mxu0 0.0
      %799 = vmatpush1.msra.mxu0 0.0
      %800 = vmatprep.subr.mxu0 0.0
      %801 = vmatpush1.msra.mxu0 0.0
      %802 = vmatprep.subr.mxu0 0.0
      %803 = vmatpush1.msra.mxu0 0.0
      %804 = vmatprep.subr.mxu0 0.0
      %805 = vmatpush1.msra.mxu0 0.0
      %806 = vmatprep.subr.mxu0 0.0
      %807 = vmatpush1.msra.mxu0 0.0
      %808 = vmatprep.subr.mxu0 0.0
      %809 = vmatpush1.msra.mxu0 0.0
      %810 = vmatprep.subr.mxu0 0.0
      %811 = vmatpush1.msra.mxu0 0.0
      %812 = vmatprep.subr.mxu0 0.0
      %813 = vmatpush1.msra.mxu0 0.0
      %814 = vmatprep.subr.mxu0 0.0
      %815 = vmatpush1.msra.mxu0 0.0
      %816 = vmatprep.subr.mxu0 0.0
      %817 = vmatpush1.msra.mxu0 0.0
      %818 = vmatprep.subr.mxu0 0.0
      %819 = vmatpush1.msra.mxu0 0.0
      %820 = vmatprep.subr.mxu0 0.0
      %821 = vmatpush1.msra.mxu0 0.0
      %822 = vmatprep.subr.mxu0 0.0
      %823 = vmatpush1.msra.mxu0 0.0
      %824 = vmatprep.subr.mxu0 0.0
      %825 = vmatpush1.msra.mxu0 0.0
      %826 = vmatprep.mubr.f32.mxu0 0.0
      %827 = vmatmul.mubr.f32.gmra.mrb[0].mxu0 %v754
      %v828 = vpop.f32.mrb[0].mxu0
      %v829 = vadd.f32 0.0, %v828
      %v830 = vpop.f32.mrb[0].mxu0
      %831 = vmatprep.mubr.f32.mxu0 0.0
      %832 = vmatmul.mubr.f32.gmra.mrb[0].mxu0 %v757
      %v833 = vpop.f32.mrb[0].mxu0
      %v834 = vadd.f32 0.0, %v833
      %v835 = vpop.f32.mrb[0].mxu0
      %836 = vmatprep.mubr.f32.mxu0 0.0
      %837 = vmatmul.mubr.f32.gmra.mrb[0].mxu0 %v760
      %v838 = vpop.f32.mrb[0].mxu0
      %v839 = vadd.f32 0.0, %v838
      %v840 = vpop.f32.mrb[0].mxu0
      %841 = vdwg.mxu0
      %842 = vrot.lane.b32.xlu0 %v123, 104
      %v843 = vpop.permute.xlu0 %842
      %844 = vrot.lane.b32.xlu0 %v124, 104
      %v845 = vpop.permute.xlu0 %844
      %846 = vrot.lane.b32.xlu0 %v125, 104
      %v847 = vpop.permute.xlu0 %846
      %848 = vrot.lane.b32.xlu0 %v117, 72
      %v849 = vpop.permute.xlu0 %848
      %850 = vrot.lane.b32.xlu0 %v118, 72
      %v851 = vpop.permute.xlu0 %850
      %852 = vrot.lane.b32.xlu0 %v119, 72
      %v853 = vpop.permute.xlu0 %852
      %v854 = vsel %vm135, %v843, 0
      %v856 = vsel %vm135, %v845, 0
      %v858 = vsel %vm135, %v847, 0
      %v860 = vsel %vm135, %v849, 0
      %v862 = vsel %vm135, %v851, 0
      %v864 = vsel %vm135, %v853, 0
      %866 = vmatprep.subr.mxu0 0.0
      %867 = vmatpush1.xpose.msra.mxu0 %v860
      %868 = vmatprep.subr.mxu0 0.0
      %869 = vmatpush1.xpose.msra.mxu0 %v862
      %870 = vmatprep.subr.mxu0 0.0
      %871 = vmatpush1.xpose.msra.mxu0 %v864
      %872 = vmatprep.subr.mxu0 0.0
      %873 = vmatpush1.xpose.msra.mxu0 0.0
      %874 = vmatprep.subr.mxu0 0.0
      %875 = vmatpush1.xpose.msra.mxu0 0.0
      %876 = vmatprep.subr.mxu0 0.0
      %877 = vmatpush1.xpose.msra.mxu0 0.0
      %878 = vmatprep.subr.mxu0 0.0
      %879 = vmatpush1.xpose.msra.mxu0 0.0
      %880 = vmatprep.subr.mxu0 0.0
      %881 = vmatpush1.xpose.msra.mxu0 0.0
      %882 = vmatprep.subr.mxu0 0.0
      %883 = vmatpush1.xpose.msra.mxu0 0.0
      %884 = vmatprep.subr.mxu0 0.0
      %885 = vmatpush1.xpose.msra.mxu0 0.0
      %886 = vmatprep.subr.mxu0 0.0
      %887 = vmatpush1.xpose.msra.mxu0 0.0
      %888 = vmatprep.subr.mxu0 0.0
      %889 = vmatpush1.xpose.msra.mxu0 0.0
      %890 = vmatprep.subr.mxu0 0.0
      %891 = vmatpush1.xpose.msra.mxu0 0.0
      %892 = vmatprep.subr.mxu0 0.0
      %893 = vmatpush1.xpose.msra.mxu0 0.0
      %894 = vmatprep.subr.mxu0 0.0
      %895 = vmatpush1.xpose.msra.mxu0 0.0
      %896 = vmatprep.subr.mxu0 0.0
      %897 = vmatpush1.xpose.msra.mxu0 0.0
      %898 = vmatprep.subr.mxu0 0.0
      %899 = vmatpush1.xpose.msra.mxu0 0.0
      %900 = vmatprep.subr.mxu0 0.0
      %901 = vmatpush1.xpose.msra.mxu0 0.0
      %902 = vmatprep.subr.mxu0 0.0
      %903 = vmatpush1.xpose.msra.mxu0 0.0
      %904 = vmatprep.subr.mxu0 0.0
      %905 = vmatpush1.xpose.msra.mxu0 0.0
      %906 = vmatprep.subr.mxu0 0.0
      %907 = vmatpush1.xpose.msra.mxu0 0.0
      %908 = vmatprep.subr.mxu0 0.0
      %909 = vmatpush1.xpose.msra.mxu0 0.0
      %910 = vmatprep.subr.mxu0 0.0
      %911 = vmatpush1.xpose.msra.mxu0 0.0
      %912 = vmatprep.subr.mxu0 0.0
      %913 = vmatpush1.xpose.msra.mxu0 0.0
      %914 = vmatprep.subr.mxu0 0.0
      %915 = vmatpush1.xpose.msra.mxu0 0.0
      %916 = vmatprep.subr.mxu0 0.0
      %917 = vmatpush1.xpose.msra.mxu0 0.0
      %918 = vmatprep.subr.mxu0 0.0
      %919 = vmatpush1.xpose.msra.mxu0 0.0
      %920 = vmatprep.subr.mxu0 0.0
      %921 = vmatpush1.xpose.msra.mxu0 0.0
      %922 = vmatprep.subr.mxu0 0.0
      %923 = vmatpush1.xpose.msra.mxu0 0.0
      %924 = vmatprep.subr.mxu0 0.0
      %925 = vmatpush1.xpose.msra.mxu0 0.0
      %926 = vmatprep.subr.mxu0 0.0
      %927 = vmatpush1.xpose.msra.mxu0 0.0
      %928 = vmatprep.subr.mxu0 0.0
      %929 = vmatpush1.xpose.msra.mxu0 0.0
      %930 = vmatprep.mubr.f32.mxu0 0.0
      %931 = vmatmul.mubr.f32.gmra.mrb[0].mxu0 %v854
      %v932 = vpop.f32.mrb[0].mxu0
      %v933 = vadd.f32 0.0, %v932
      %v934 = vpop.f32.mrb[0].mxu0
      %935 = vmatprep.mubr.f32.mxu0 0.0
      %936 = vmatmul.mubr.f32.gmra.mrb[0].mxu0 %v856
      %v937 = vpop.f32.mrb[0].mxu0
      %v938 = vadd.f32 0.0, %v937
      %v939 = vpop.f32.mrb[0].mxu0
      %940 = vmatprep.mubr.f32.mxu0 0.0
      %941 = vmatmul.mubr.f32.gmra.mrb[0].mxu0 %v858
      %v942 = vpop.f32.mrb[0].mxu0
      %v943 = vadd.f32 0.0, %v942
      %v944 = vpop.f32.mrb[0].mxu0
      %945 = vdwg.mxu0
      %v946 = vsel %vm122, %v933, -1e+30
      %v947 = vsel %vm122, %v938, -1e+30
      %v948 = vsel %vm122, %v943, -1e+30
      %v949 = vsel %vm234, %v946, -inf
      %950 = vmax.xlane.f32.xlu0 %v949
      %v951 = vpop.xlane.xlu0 %950
      %v952 = vsel %vm234, %v947, -inf
      %953 = vmax.xlane.f32.xlu0 %v952
      %v954 = vpop.xlane.xlu0 %953
      %v955 = vsel %vm234, %v948, -inf
      %956 = vmax.xlane.f32.xlu0 %v955
      %v957 = vpop.xlane.xlu0 %956
      %v958 = vsub.f32 %v946, %v951
      %v959 = vsub.f32 %v947, %v954
      %v960 = vsub.f32 %v948, %v957
      %v961 = vmul.f32 %v958, 1.442695
      %v962 = vpow.pop %v961
      %v963 = vmul.f32 %v959, 1.442695
      %v964 = vpow.pop %v963
      %v965 = vmul.f32 %v960, 1.442695
      %v966 = vpow.pop %v965
      %v967 = vsel %vm234, %v962, 0.0
      %968 = vadd.xlane.f32.xlu0 %v967
      %v969 = vpop.xlane.xlu0 %968
      %v970 = vsel %vm234, %v964, 0.0
      %971 = vadd.xlane.f32.xlu0 %v970
      %v972 = vpop.xlane.xlu0 %971
      %v973 = vsel %vm234, %v966, 0.0
      %974 = vadd.xlane.f32.xlu0 %v973
      %v975 = vpop.xlane.xlu0 %974
      %v976 = vrcp.pop %v969
      %v977 = vrcp.pop %v972
      %v978 = vrcp.pop %v975
      %v979 = vmul.f32 %v962, %v976
      %v980 = vmul.f32 %v964, %v977
      %v981 = vmul.f32 %v966, %v978
      %982 = vrot.lane.b32.xlu0 %v117, 40
      %v983 = vpop.permute.xlu0 %982
      %984 = vrot.lane.b32.xlu0 %v118, 40
      %v985 = vpop.permute.xlu0 %984
      %986 = vrot.lane.b32.xlu0 %v119, 40
      %v987 = vpop.permute.xlu0 %986
      %v992 = vsel %vm234, %v979, 0
      %v995 = vsel %vm234, %v980, 0
      %v998 = vsel %vm234, %v981, 0
      %1000 = vmatprep.subr.mxu0 0.0
      %1001 = vmatpush1.msra.mxu0 %v983
      %1002 = vmatprep.subr.mxu0 0.0
      %1003 = vmatpush1.msra.mxu0 %v985
      %1004 = vmatprep.subr.mxu0 0.0
      %1005 = vmatpush1.msra.mxu0 %v987
      %1006 = vmatprep.subr.mxu0 0.0
      %1007 = vmatpush1.msra.mxu0 0.0
      %1008 = vmatprep.subr.mxu0 0.0
      %1009 = vmatpush1.msra.mxu0 0.0
      %1010 = vmatprep.subr.mxu0 0.0
      %1011 = vmatpush1.msra.mxu0 0.0
      %1012 = vmatprep.subr.mxu0 0.0
      %1013 = vmatpush1.msra.mxu0 0.0
      %1014 = vmatprep.subr.mxu0 0.0
      %1015 = vmatpush1.msra.mxu0 0.0
      %1016 = vmatprep.subr.mxu0 0.0
      %1017 = vmatpush1.msra.mxu0 0.0
      %1018 = vmatprep.subr.mxu0 0.0
      %1019 = vmatpush1.msra.mxu0 0.0
      %1020 = vmatprep.subr.mxu0 0.0
      %1021 = vmatpush1.msra.mxu0 0.0
      %1022 = vmatprep.subr.mxu0 0.0
      %1023 = vmatpush1.msra.mxu0 0.0
      %1024 = vmatprep.subr.mxu0 0.0
      %1025 = vmatpush1.msra.mxu0 0.0
      %1026 = vmatprep.subr.mxu0 0.0
      %1027 = vmatpush1.msra.mxu0 0.0
      %1028 = vmatprep.subr.mxu0 0.0
      %1029 = vmatpush1.msra.mxu0 0.0
      %1030 = vmatprep.subr.mxu0 0.0
      %1031 = vmatpush1.msra.mxu0 0.0
      %1032 = vmatprep.subr.mxu0 0.0
      %1033 = vmatpush1.msra.mxu0 0.0
      %1034 = vmatprep.subr.mxu0 0.0
      %1035 = vmatpush1.msra.mxu0 0.0
      %1036 = vmatprep.subr.mxu0 0.0
      %1037 = vmatpush1.msra.mxu0 0.0
      %1038 = vmatprep.subr.mxu0 0.0
      %1039 = vmatpush1.msra.mxu0 0.0
      %1040 = vmatprep.subr.mxu0 0.0
      %1041 = vmatpush1.msra.mxu0 0.0
      %1042 = vmatprep.subr.mxu0 0.0
      %1043 = vmatpush1.msra.mxu0 0.0
      %1044 = vmatprep.subr.mxu0 0.0
      %1045 = vmatpush1.msra.mxu0 0.0
      %1046 = vmatprep.subr.mxu0 0.0
      %1047 = vmatpush1.msra.mxu0 0.0
      %1048 = vmatprep.subr.mxu0 0.0
      %1049 = vmatpush1.msra.mxu0 0.0
      %1050 = vmatprep.subr.mxu0 0.0
      %1051 = vmatpush1.msra.mxu0 0.0
      %1052 = vmatprep.subr.mxu0 0.0
      %1053 = vmatpush1.msra.mxu0 0.0
      %1054 = vmatprep.subr.mxu0 0.0
      %1055 = vmatpush1.msra.mxu0 0.0
      %1056 = vmatprep.subr.mxu0 0.0
      %1057 = vmatpush1.msra.mxu0 0.0
      %1058 = vmatprep.subr.mxu0 0.0
      %1059 = vmatpush1.msra.mxu0 0.0
      %1060 = vmatprep.subr.mxu0 0.0
      %1061 = vmatpush1.msra.mxu0 0.0
      %1062 = vmatprep.subr.mxu0 0.0
      %1063 = vmatpush1.msra.mxu0 0.0
      %1064 = vmatprep.mubr.f32.mxu0 0.0
      %1065 = vmatmul.mubr.f32.gmra.mrb[0].mxu0 %v992
      %v1066 = vpop.f32.mrb[0].mxu0
      %v1067 = vadd.f32 0.0, %v1066
      %v1068 = vpop.f32.mrb[0].mxu0
      %1069 = vmatprep.mubr.f32.mxu0 0.0
      %1070 = vmatmul.mubr.f32.gmra.mrb[0].mxu0 %v995
      %v1071 = vpop.f32.mrb[0].mxu0
      %v1072 = vadd.f32 0.0, %v1071
      %v1073 = vpop.f32.mrb[0].mxu0
      %1074 = vmatprep.mubr.f32.mxu0 0.0
      %1075 = vmatmul.mubr.f32.gmra.mrb[0].mxu0 %v998
      %v1076 = vpop.f32.mrb[0].mxu0
      %v1077 = vadd.f32 0.0, %v1076
      %v1078 = vpop.f32.mrb[0].mxu0
      %1079 = vdwg.mxu0
      %1083 = vrot.lane.b32.xlu0 %v591, 8
      %v1084 = vpop.permute.xlu0 %1083
      %1085 = vrot.lane.b32.xlu0 %v596, 8
      %v1086 = vpop.permute.xlu0 %1085
      %1087 = vrot.lane.b32.xlu0 %v601, 8
      %v1088 = vpop.permute.xlu0 %1087
      %1095 = vrot.lane.b32.xlu0 %v829, 16
      %v1096 = vpop.permute.xlu0 %1095
      %1097 = vrot.lane.b32.xlu0 %v834, 16
      %v1098 = vpop.permute.xlu0 %1097
      %1099 = vrot.lane.b32.xlu0 %v839, 16
      %v1100 = vpop.permute.xlu0 %1099
      %1107 = vrot.lane.b32.xlu0 %v1067, 24
      %v1108 = vpop.permute.xlu0 %1107
      %1109 = vrot.lane.b32.xlu0 %v1072, 24
      %v1110 = vpop.permute.xlu0 %1109
      %1111 = vrot.lane.b32.xlu0 %v1077, 24
      %v1112 = vpop.permute.xlu0 %1111
      %v1116 = vsel %vm135, %v353, %v1084
      %v1117 = vsel %vm135, %v358, %v1086
      %v1118 = vsel %vm135, %v363, %v1088
      %vm1119 = vcmask 130048
      %v1120 = vsel %vm1119, %v1116, %v1096
      %v1121 = vsel %vm1119, %v1117, %v1098
      %v1122 = vsel %vm1119, %v1118, %v1100
      %v1123 = vsel %vm234, %v1120, %v1108
      %v1124 = vsel %vm234, %v1121, %v1110
      %v1125 = vsel %vm234, %v1122, %v1112
      %vm1126 = vcmask 261120
      %1127 = vst.msk [vmem:[%s116] sm:$0xff] %vm1126, %v1123
      %1128 = vst.msk [vmem:[%s116 + $0x8] sm:$0xff] %vm1126, %v1124
      %1129 = vst.msk [vmem:[%s116 + $0x10] sm:$0xff] %vm1126, %v1125
      %p1130 = scmp.lt.s32.totalorder %s12, 1
      %s1131 = scalar_select %p1130, %s12, 1
      %s1132 = smul.addr %s1131, 3
      %s1133 = smul.addr %s1132, 8
      %s1134 = scalar_lea.vmem %s1, %s1133
      // Predicated region
      $region25: #{vit_forward.14} parent=23 // pred_check
        %p1135 = pneg %p56
      $region26: #{vit_forward.14} parent=23 // pred_check_branch
        %1137 = sbr.rel (%p1135) target = $region28
      $region27: #{vit_forward.14} parent=23 // pred_region
        _
      $region28: #{vit_forward.14} parent=23 // pred_fallthru
        _
    $region24: #{vit_forward.14} parent=5 // pred_fallthru
      _
    %p1138 = scmp.le.s32.totalorder 2, %s7
    // Predicated region
    $region29: #{vit_forward.14} parent=5 // pred_check
      %p1139 = pneg %p1138
    $region30: #{vit_forward.14} parent=5 // pred_check_branch
      %1141 = sbr.rel (%p1139) target = $region32
    $region31: #{vit_forward.14} parent=5 // pred_region
      %s1142 = ssub.s32 %s7, 2
      // Predicated region
      $region33: #{vit_forward.14} parent=31 // pred_check
        %p1143 = pneg %p62
      $region34: #{vit_forward.14} parent=31 // pred_check_branch
        %1145 = sbr.rel (%p1143) target = $region36
      $region35: #{vit_forward.14} parent=31 // pred_region
        %p1146 = scmp.lt.s32.totalorder %s13, 1
        %s1147 = scalar_select %p1146, %s13, 1
        %s1148 = smul.addr %s1147, 3
        %s1149 = smul.addr %s1148, 8
        %s1150 = scalar_lea.vmem %s1, %s1149
      $region36: #{vit_forward.14} parent=31 // pred_fallthru
        _
    $region32: #{vit_forward.14} parent=5 // pred_fallthru
      _
  $region6: #{vit_forward.14} parent=0 // loop_footer
    %s11 = sadd.s32 1, %s7
  $region7: #{vit_forward.14} parent=0 // loop_footer_branch
    %6 = sbr.rel target = $region3
  $region8: #{vit_forward.14} parent=0 // loop_exit
    _

// kernel: vit_forward.15
$region0: #{vit_forward.15}
  #allocation0 [shape = 'u32[]', space=smem, size = 0x4, offset = 0x4, fixed_abs, tag = 'smem constant byte address 0x4 - core index']
  #allocation1 [shape = 'u32[144,128]{1,0:T(1,128)}', space=vmem, size = 0x12000, scoped, tag = 'internal scratch']
  #allocation2 [shape = 'f32[48,32]{1,0:T(8,128)}', space=vmem, size = 0x6000, scoped, tag = 'scratch operand']
  %s0 = inlined_call_operand.vmem [shape: f32[48,32], index: 0, kind: input, shape index: {}]
  %s1 = inlined_call_operand.vmem [shape: f32[32,32], index: 1, kind: input, shape index: {}]
  %s2 = inlined_call_operand.vmem [shape: f32[1,32], index: 2, kind: input, shape index: {}]
  %s3 = inlined_call_operand.vmem [shape: f32[48,32], index: 3, kind: input, shape index: {}]
  %s4 = inlined_call_operand.vmem [shape: f32[48,32], index: 4, kind: output, shape index: {}]
  %s5 = sld [smem:[#allocation0]]
  $region34: #{vit_forward.15} parent=0
    _
  %s7 = ssub.s32 1, %s5
  %s8 = scalar_select 0, %s7, %s5
  // Predicated region
  $region2: #{vit_forward.15} parent=0 // pred_check
    _
  $region3: #{vit_forward.15} parent=0 // pred_check_branch
    %10 = sbr.rel (0) target = $region5
  $region4: #{vit_forward.15} parent=0 // pred_region
    _
  $region5: #{vit_forward.15} parent=0 // pred_fallthru
    _
  // Predicated region
  $region6: #{vit_forward.15} parent=0 // pred_check
    _
  $region7: #{vit_forward.15} parent=0 // pred_check_branch
    %12 = sbr.rel (0) target = $region9
  $region8: #{vit_forward.15} parent=0 // pred_region
    _
  $region9: #{vit_forward.15} parent=0 // pred_fallthru
    _
  // Predicated region
  $region10: #{vit_forward.15} parent=0 // pred_check
    _
  $region11: #{vit_forward.15} parent=0 // pred_check_branch
    %14 = sbr.rel (0) target = $region13
  $region12: #{vit_forward.15} parent=0 // pred_region
    _
  $region13: #{vit_forward.15} parent=0 // pred_fallthru
    _
  // Predicated region
  $region14: #{vit_forward.15} parent=0 // pred_check
    _
  $region15: #{vit_forward.15} parent=0 // pred_check_branch
    %16 = sbr.rel (0) target = $region17
  $region16: #{vit_forward.15} parent=0 // pred_region
    _
  $region17: #{vit_forward.15} parent=0 // pred_fallthru
    _
  %p17 = scmp.eq.s32.totalorder 0, 0
  // Predicated region
  $region18: #{vit_forward.15} parent=0 // pred_check
    %p18 = pneg %p17
  $region19: #{vit_forward.15} parent=0 // pred_check_branch
    %20 = sbr.rel (%p18) target = $region21
  $region20: #{vit_forward.15} parent=0 // pred_region
    %vm21 = vcmask 261120
    %22 = vst.msk [vmem:[#allocation2] sm:$0xff] %vm21, 0.0
    %23 = vst.msk [vmem:[#allocation2 + $0x8] sm:$0xff] %vm21, 0.0
    %24 = vst.msk [vmem:[#allocation2 + $0x10] sm:$0xff] %vm21, 0.0
    %25 = vst.msk [vmem:[#allocation2 + $0x18] sm:$0xff] %vm21, 0.0
    %26 = vst.msk [vmem:[#allocation2 + $0x20] sm:$0xff] %vm21, 0.0
    %27 = vst.msk [vmem:[#allocation2 + $0x28] sm:$0xff] %vm21, 0.0
  $region21: #{vit_forward.15} parent=0 // pred_fallthru
    _
  %v28 = vld [vmem:[#allocation2] sm:$0xff]
  %v29 = vld [vmem:[#allocation2 + $0x8] sm:$0xff]
  %v30 = vld [vmem:[#allocation2 + $0x10] sm:$0xff]
  %v31 = vld [vmem:[#allocation2 + $0x18] sm:$0xff]
  %v32 = vld [vmem:[#allocation2 + $0x20] sm:$0xff]
  %v33 = vld [vmem:[#allocation2 + $0x28] sm:$0xff]
  %v34 = vld [vmem:[%s0] sm:$0xff]
  %v35 = vld [vmem:[%s0 + $0x8] sm:$0xff]
  %v36 = vld [vmem:[%s0 + $0x10] sm:$0xff]
  %v37 = vld [vmem:[%s0 + $0x18] sm:$0xff]
  %v38 = vld [vmem:[%s0 + $0x20] sm:$0xff]
  %v39 = vld [vmem:[%s0 + $0x28] sm:$0xff]
  %v40 = vld [vmem:[%s1] sm:$0xff]
  %v41 = vld [vmem:[%s1 + $0x8] sm:$0xff]
  %v42 = vld [vmem:[%s1 + $0x10] sm:$0xff]
  %v43 = vld [vmem:[%s1 + $0x18] sm:$0xff]
  %vm44 = vcmask 261120
  %v46 = vsel %vm44, %v34, 0
  %v49 = vsel %vm44, %v35, 0
  %v52 = vsel %vm44, %v36, 0
  %v55 = vsel %vm44, %v37, 0
  %v58 = vsel %vm44, %v38, 0
  %v61 = vsel %vm44, %v39, 0
  %63 = vmatprep.subr.mxu0 0.0
  %64 = vmatpush1.msra.mxu0 %v40
  %65 = vmatprep.subr.mxu0 0.0
  %66 = vmatpush1.msra.mxu0 %v41
  %67 = vmatprep.subr.mxu0 0.0
  %68 = vmatpush1.msra.mxu0 %v42
  %69 = vmatprep.subr.mxu0 0.0
  %70 = vmatpush1.msra.mxu0 %v43
  %71 = vmatprep.subr.mxu0 0.0
  %72 = vmatpush1.msra.mxu0 0.0
  %73 = vmatprep.subr.mxu0 0.0
  %74 = vmatpush1.msra.mxu0 0.0
  %75 = vmatprep.subr.mxu0 0.0
  %76 = vmatpush1.msra.mxu0 0.0
  %77 = vmatprep.subr.mxu0 0.0
  %78 = vmatpush1.msra.mxu0 0.0
  %79 = vmatprep.subr.mxu0 0.0
  %80 = vmatpush1.msra.mxu0 0.0
  %81 = vmatprep.subr.mxu0 0.0
  %82 = vmatpush1.msra.mxu0 0.0
  %83 = vmatprep.subr.mxu0 0.0
  %84 = vmatpush1.msra.mxu0 0.0
  %85 = vmatprep.subr.mxu0 0.0
  %86 = vmatpush1.msra.mxu0 0.0
  %87 = vmatprep.subr.mxu0 0.0
  %88 = vmatpush1.msra.mxu0 0.0
  %89 = vmatprep.subr.mxu0 0.0
  %90 = vmatpush1.msra.mxu0 0.0
  %91 = vmatprep.subr.mxu0 0.0
  %92 = vmatpush1.msra.mxu0 0.0
  %93 = vmatprep.subr.mxu0 0.0
  %94 = vmatpush1.msra.mxu0 0.0
  %95 = vmatprep.subr.mxu0 0.0
  %96 = vmatpush1.msra.mxu0 0.0
  %97 = vmatprep.subr.mxu0 0.0
  %98 = vmatpush1.msra.mxu0 0.0
  %99 = vmatprep.subr.mxu0 0.0
  %100 = vmatpush1.msra.mxu0 0.0
  %101 = vmatprep.subr.mxu0 0.0
  %102 = vmatpush1.msra.mxu0 0.0
  %103 = vmatprep.subr.mxu0 0.0
  %104 = vmatpush1.msra.mxu0 0.0
  %105 = vmatprep.subr.mxu0 0.0
  %106 = vmatpush1.msra.mxu0 0.0
  %107 = vmatprep.subr.mxu0 0.0
  %108 = vmatpush1.msra.mxu0 0.0
  %109 = vmatprep.subr.mxu0 0.0
  %110 = vmatpush1.msra.mxu0 0.0
  %111 = vmatprep.subr.mxu0 0.0
  %112 = vmatpush1.msra.mxu0 0.0
  %113 = vmatprep.subr.mxu0 0.0
  %114 = vmatpush1.msra.mxu0 0.0
  %115 = vmatprep.subr.mxu0 0.0
  %116 = vmatpush1.msra.mxu0 0.0
  %117 = vmatprep.subr.mxu0 0.0
  %118 = vmatpush1.msra.mxu0 0.0
  %119 = vmatprep.subr.mxu0 0.0
  %120 = vmatpush1.msra.mxu0 0.0
  %121 = vmatprep.subr.mxu0 0.0
  %122 = vmatpush1.msra.mxu0 0.0
  %123 = vmatprep.subr.mxu0 0.0
  %124 = vmatpush1.msra.mxu0 0.0
  %125 = vmatprep.subr.mxu0 0.0
  %126 = vmatpush1.msra.mxu0 0.0
  %127 = vmatprep.mubr.f32.mxu0 0.0
  %128 = vmatmul.mubr.f32.gmra.mrb[0].mxu0 %v46
  %v129 = vpop.f32.mrb[0].mxu0
  %v130 = vadd.f32 0.0, %v129
  %v131 = vpop.f32.mrb[0].mxu0
  %132 = vmatprep.mubr.f32.mxu0 0.0
  %133 = vmatmul.mubr.f32.gmra.mrb[0].mxu0 %v49
  %v134 = vpop.f32.mrb[0].mxu0
  %v135 = vadd.f32 0.0, %v134
  %v136 = vpop.f32.mrb[0].mxu0
  %137 = vmatprep.mubr.f32.mxu0 0.0
  %138 = vmatmul.mubr.f32.gmra.mrb[0].mxu0 %v52
  %v139 = vpop.f32.mrb[0].mxu0
  %v140 = vadd.f32 0.0, %v139
  %v141 = vpop.f32.mrb[0].mxu0
  %142 = vmatprep.mubr.f32.mxu0 0.0
  %143 = vmatmul.mubr.f32.gmra.mrb[0].mxu0 %v55
  %v144 = vpop.f32.mrb[0].mxu0
  %v145 = vadd.f32 0.0, %v144
  %v146 = vpop.f32.mrb[0].mxu0
  %147 = vmatprep.mubr.f32.mxu0 0.0
  %148 = vmatmul.mubr.f32.gmra.mrb[0].mxu0 %v58
  %v149 = vpop.f32.mrb[0].mxu0
  %v150 = vadd.f32 0.0, %v149
  %v151 = vpop.f32.mrb[0].mxu0
  %152 = vmatprep.mubr.f32.mxu0 0.0
  %153 = vmatmul.mubr.f32.gmra.mrb[0].mxu0 %v61
  %v154 = vpop.f32.mrb[0].mxu0
  %v155 = vadd.f32 0.0, %v154
  %v156 = vpop.f32.mrb[0].mxu0
  %157 = vdwg.mxu0
  %v158 = vadd.f32 %v28, %v130
  %v159 = vadd.f32 %v29, %v135
  %v160 = vadd.f32 %v30, %v140
  %v161 = vadd.f32 %v31, %v145
  %v162 = vadd.f32 %v32, %v150
  %v163 = vadd.f32 %v33, %v155
  %164 = vst.msk [vmem:[#allocation2] sm:$0xff] %vm44, %v158
  %165 = vst.msk [vmem:[#allocation2 + $0x8] sm:$0xff] %vm44, %v159
  %166 = vst.msk [vmem:[#allocation2 + $0x10] sm:$0xff] %vm44, %v160
  %167 = vst.msk [vmem:[#allocation2 + $0x18] sm:$0xff] %vm44, %v161
  %168 = vst.msk [vmem:[#allocation2 + $0x20] sm:$0xff] %vm44, %v162
  %169 = vst.msk [vmem:[#allocation2 + $0x28] sm:$0xff] %vm44, %v163
  // Predicated region
  $region22: #{vit_forward.15} parent=0 // pred_check
    %p170 = pneg %p17
  $region23: #{vit_forward.15} parent=0 // pred_check_branch
    %172 = sbr.rel (%p170) target = $region25
  $region24: #{vit_forward.15} parent=0 // pred_region
    %v173 = vld [vmem:[#allocation2] sm:$0xff]
    %v174 = vld [vmem:[#allocation2 + $0x8] sm:$0xff]
    %v175 = vld [vmem:[#allocation2 + $0x10] sm:$0xff]
    %v176 = vld [vmem:[#allocation2 + $0x18] sm:$0xff]
    %v177 = vld [vmem:[#allocation2 + $0x20] sm:$0xff]
    %v178 = vld [vmem:[#allocation2 + $0x28] sm:$0xff]
    %v179 = vld [vmem:[%s2] sm:$0x1]
    %v181 = vlaneseq
    %v182 = vshrl.u32 %v181, 7
    %v183 = vsub.s32 0, %v182
    %v184 = vrot.slane %v179, %v183
    %v186 = vadd.f32 %v173, %v184
    %v187 = vadd.f32 %v174, %v184
    %v188 = vadd.f32 %v175, %v184
    %v189 = vadd.f32 %v176, %v184
    %v190 = vadd.f32 %v177, %v184
    %v191 = vadd.f32 %v178, %v184
    %v192 = vld [vmem:[%s3] sm:$0xff]
    %v193 = vld [vmem:[%s3 + $0x8] sm:$0xff]
    %v194 = vld [vmem:[%s3 + $0x10] sm:$0xff]
    %v195 = vld [vmem:[%s3 + $0x18] sm:$0xff]
    %v196 = vld [vmem:[%s3 + $0x20] sm:$0xff]
    %v197 = vld [vmem:[%s3 + $0x28] sm:$0xff]
    %v198 = vadd.f32 %v186, %v192
    %v199 = vadd.f32 %v187, %v193
    %v200 = vadd.f32 %v188, %v194
    %v201 = vadd.f32 %v189, %v195
    %v202 = vadd.f32 %v190, %v196
    %v203 = vadd.f32 %v191, %v197
    %204 = vst.msk [vmem:[%s4] sm:$0xff] %vm44, %v198
    %205 = vst.msk [vmem:[%s4 + $0x8] sm:$0xff] %vm44, %v199
    %206 = vst.msk [vmem:[%s4 + $0x10] sm:$0xff] %vm44, %v200
    %207 = vst.msk [vmem:[%s4 + $0x18] sm:$0xff] %vm44, %v201
    %208 = vst.msk [vmem:[%s4 + $0x20] sm:$0xff] %vm44, %v202
    %209 = vst.msk [vmem:[%s4 + $0x28] sm:$0xff] %vm44, %v203
  $region25: #{vit_forward.15} parent=0 // pred_fallthru
    _
  // Predicated region
  $region26: #{vit_forward.15} parent=0 // pred_check
    _
  $region27: #{vit_forward.15} parent=0 // pred_check_branch
    %211 = sbr.rel (0) target = $region29
  $region28: #{vit_forward.15} parent=0 // pred_region
    _
  $region29: #{vit_forward.15} parent=0 // pred_fallthru
    _
  // Predicated region
  $region30: #{vit_forward.15} parent=0 // pred_check
    _
  $region31: #{vit_forward.15} parent=0 // pred_check_branch
    %213 = sbr.rel (0) target = $region33
  $region32: #{vit_forward.15} parent=0 // pred_region
    _
  $region33: #{vit_forward.15} parent=0 // pred_fallthru
    _

// kernel: vit_forward.16
$region0: #{vit_forward.16}
  #allocation0 [shape = 'u32[]', space=smem, size = 0x4, offset = 0x4, fixed_abs, tag = 'smem constant byte address 0x4 - core index']
  #allocation1 [shape = 'u32[144,128]{1,0:T(1,128)}', space=vmem, size = 0x12000, scoped, tag = 'internal scratch']
  %s0 = inlined_call_operand.vmem [shape: f32[48,32], index: 0, kind: input, shape index: {}]
  %s1 = inlined_call_operand.vmem [shape: f32[1,32], index: 1, kind: input, shape index: {}]
  %s2 = inlined_call_operand.vmem [shape: f32[1,32], index: 2, kind: input, shape index: {}]
  %s3 = inlined_call_operand.vmem [shape: f32[32,128], index: 3, kind: input, shape index: {}]
  %s4 = inlined_call_operand.vmem [shape: f32[1,128], index: 4, kind: input, shape index: {}]
  %s5 = inlined_call_operand.vmem [shape: f32[48,128], index: 5, kind: output, shape index: {}]
  %s6 = sld [smem:[#allocation0]]
  $region30: #{vit_forward.16} parent=0
    _
  %s8 = ssub.s32 1, %s6
  %s9 = scalar_select 0, %s8, %s6
  // Predicated region
  $region2: #{vit_forward.16} parent=0 // pred_check
    _
  $region3: #{vit_forward.16} parent=0 // pred_check_branch
    %11 = sbr.rel (0) target = $region5
  $region4: #{vit_forward.16} parent=0 // pred_region
    _
  $region5: #{vit_forward.16} parent=0 // pred_fallthru
    _
  // Predicated region
  $region6: #{vit_forward.16} parent=0 // pred_check
    _
  $region7: #{vit_forward.16} parent=0 // pred_check_branch
    %13 = sbr.rel (0) target = $region9
  $region8: #{vit_forward.16} parent=0 // pred_region
    _
  $region9: #{vit_forward.16} parent=0 // pred_fallthru
    _
  // Predicated region
  $region10: #{vit_forward.16} parent=0 // pred_check
    _
  $region11: #{vit_forward.16} parent=0 // pred_check_branch
    %15 = sbr.rel (0) target = $region13
  $region12: #{vit_forward.16} parent=0 // pred_region
    _
  $region13: #{vit_forward.16} parent=0 // pred_fallthru
    _
  // Predicated region
  $region14: #{vit_forward.16} parent=0 // pred_check
    _
  $region15: #{vit_forward.16} parent=0 // pred_check_branch
    %17 = sbr.rel (0) target = $region17
  $region16: #{vit_forward.16} parent=0 // pred_region
    _
  $region17: #{vit_forward.16} parent=0 // pred_fallthru
    _
  // Predicated region
  $region18: #{vit_forward.16} parent=0 // pred_check
    _
  $region19: #{vit_forward.16} parent=0 // pred_check_branch
    %19 = sbr.rel (0) target = $region21
  $region20: #{vit_forward.16} parent=0 // pred_region
    _
  $region21: #{vit_forward.16} parent=0 // pred_fallthru
    _
  %v20 = vld [vmem:[%s0] sm:$0xff]
  %v21 = vld [vmem:[%s0 + $0x8] sm:$0xff]
  %v22 = vld [vmem:[%s0 + $0x10] sm:$0xff]
  %v23 = vld [vmem:[%s0 + $0x18] sm:$0xff]
  %v24 = vld [vmem:[%s0 + $0x20] sm:$0xff]
  %v25 = vld [vmem:[%s0 + $0x28] sm:$0xff]
  %vm26 = vcmask 261120
  %v27 = vsel %vm26, %v20, 0.0
  %28 = vadd.xlane.f32.xlu0 %v27
  %v29 = vpop.xlane.xlu0 %28
  %v30 = vsel %vm26, %v21, 0.0
  %31 = vadd.xlane.f32.xlu0 %v30
  %v32 = vpop.xlane.xlu0 %31
  %v33 = vsel %vm26, %v22, 0.0
  %34 = vadd.xlane.f32.xlu0 %v33
  %v35 = vpop.xlane.xlu0 %34
  %v36 = vsel %vm26, %v23, 0.0
  %37 = vadd.xlane.f32.xlu0 %v36
  %v38 = vpop.xlane.xlu0 %37
  %v39 = vsel %vm26, %v24, 0.0
  %40 = vadd.xlane.f32.xlu0 %v39
  %v41 = vpop.xlane.xlu0 %40
  %v42 = vsel %vm26, %v25, 0.0
  %43 = vadd.xlane.f32.xlu0 %v42
  %v44 = vpop.xlane.xlu0 %43
  %v45 = vrcp.pop 32.0
  %v46 = vmul.f32 %v29, %v45
  %v47 = vmul.f32 %v32, %v45
  %v48 = vmul.f32 %v35, %v45
  %v49 = vmul.f32 %v38, %v45
  %v50 = vmul.f32 %v41, %v45
  %v51 = vmul.f32 %v44, %v45
  %v52 = vsub.f32 %v20, %v46
  %v53 = vsub.f32 %v21, %v47
  %v54 = vsub.f32 %v22, %v48
  %v55 = vsub.f32 %v23, %v49
  %v56 = vsub.f32 %v24, %v50
  %v57 = vsub.f32 %v25, %v51
  %v58 = vmul.f32 %v52, %v52
  %v59 = vmul.f32 %v53, %v53
  %v60 = vmul.f32 %v54, %v54
  %v61 = vmul.f32 %v55, %v55
  %v62 = vmul.f32 %v56, %v56
  %v63 = vmul.f32 %v57, %v57
  %v64 = vsel %vm26, %v58, 0.0
  %65 = vadd.xlane.f32.xlu0 %v64
  %v66 = vpop.xlane.xlu0 %65
  %v67 = vsel %vm26, %v59, 0.0
  %68 = vadd.xlane.f32.xlu0 %v67
  %v69 = vpop.xlane.xlu0 %68
  %v70 = vsel %vm26, %v60, 0.0
  %71 = vadd.xlane.f32.xlu0 %v70
  %v72 = vpop.xlane.xlu0 %71
  %v73 = vsel %vm26, %v61, 0.0
  %74 = vadd.xlane.f32.xlu0 %v73
  %v75 = vpop.xlane.xlu0 %74
  %v76 = vsel %vm26, %v62, 0.0
  %77 = vadd.xlane.f32.xlu0 %v76
  %v78 = vpop.xlane.xlu0 %77
  %v79 = vsel %vm26, %v63, 0.0
  %80 = vadd.xlane.f32.xlu0 %v79
  %v81 = vpop.xlane.xlu0 %80
  %v82 = vmul.f32 %v66, %v45
  %v83 = vmul.f32 %v69, %v45
  %v84 = vmul.f32 %v72, %v45
  %v85 = vmul.f32 %v75, %v45
  %v86 = vmul.f32 %v78, %v45
  %v87 = vmul.f32 %v81, %v45
  %v88 = vadd.f32 %v82, 1e-05
  %v89 = vadd.f32 %v83, 1e-05
  %v90 = vadd.f32 %v84, 1e-05
  %v91 = vadd.f32 %v85, 1e-05
  %v92 = vadd.f32 %v86, 1e-05
  %v93 = vadd.f32 %v87, 1e-05
  %v94 = vrsqrt.pop %v88
  %v95 = vrsqrt.pop %v89
  %v96 = vrsqrt.pop %v90
  %v97 = vrsqrt.pop %v91
  %v98 = vrsqrt.pop %v92
  %v99 = vrsqrt.pop %v93
  %v100 = vmul.f32 %v52, %v94
  %v101 = vmul.f32 %v53, %v95
  %v102 = vmul.f32 %v54, %v96
  %v103 = vmul.f32 %v55, %v97
  %v104 = vmul.f32 %v56, %v98
  %v105 = vmul.f32 %v57, %v99
  %v106 = vld [vmem:[%s1] sm:$0x1]
  %v108 = vlaneseq
  %v109 = vshrl.u32 %v108, 7
  %v110 = vsub.s32 0, %v109
  %v111 = vrot.slane %v106, %v110
  %v113 = vmul.f32 %v100, %v111
  %v114 = vmul.f32 %v101, %v111
  %v115 = vmul.f32 %v102, %v111
  %v116 = vmul.f32 %v103, %v111
  %v117 = vmul.f32 %v104, %v111
  %v118 = vmul.f32 %v105, %v111
  %v119 = vld [vmem:[%s2] sm:$0x1]
  %v121 = vlaneseq
  %v122 = vshrl.u32 %v121, 7
  %v123 = vsub.s32 0, %v122
  %v124 = vrot.slane %v119, %v123
  %v126 = vadd.f32 %v113, %v124
  %v127 = vadd.f32 %v114, %v124
  %v128 = vadd.f32 %v115, %v124
  %v129 = vadd.f32 %v116, %v124
  %v130 = vadd.f32 %v117, %v124
  %v131 = vadd.f32 %v118, %v124
  %v132 = vld [vmem:[%s3] sm:$0xff]
  %v133 = vld [vmem:[%s3 + $0x8] sm:$0xff]
  %v134 = vld [vmem:[%s3 + $0x10] sm:$0xff]
  %v135 = vld [vmem:[%s3 + $0x18] sm:$0xff]
  %v136 = vld [vmem:[%s4] sm:$0x1]
  %v138 = vlaneseq
  %v139 = vshrl.u32 %v138, 7
  %v140 = vsub.s32 0, %v139
  %v141 = vrot.slane %v136, %v140
  %v144 = vsel %vm26, %v126, 0
  %v147 = vsel %vm26, %v127, 0
  %v150 = vsel %vm26, %v128, 0
  %v153 = vsel %vm26, %v129, 0
  %v156 = vsel %vm26, %v130, 0
  %v159 = vsel %vm26, %v131, 0
  %161 = vmatprep.subr.mxu0 0.0
  %162 = vmatpush1.msra.mxu0 %v132
  %163 = vmatprep.subr.mxu0 0.0
  %164 = vmatpush1.msra.mxu0 %v133
  %165 = vmatprep.subr.mxu0 0.0
  %166 = vmatpush1.msra.mxu0 %v134
  %167 = vmatprep.subr.mxu0 0.0
  %168 = vmatpush1.msra.mxu0 %v135
  %169 = vmatprep.subr.mxu0 0.0
  %170 = vmatpush1.msra.mxu0 0.0
  %171 = vmatprep.subr.mxu0 0.0
  %172 = vmatpush1.msra.mxu0 0.0
  %173 = vmatprep.subr.mxu0 0.0
  %174 = vmatpush1.msra.mxu0 0.0
  %175 = vmatprep.subr.mxu0 0.0
  %176 = vmatpush1.msra.mxu0 0.0
  %177 = vmatprep.subr.mxu0 0.0
  %178 = vmatpush1.msra.mxu0 0.0
  %179 = vmatprep.subr.mxu0 0.0
  %180 = vmatpush1.msra.mxu0 0.0
  %181 = vmatprep.subr.mxu0 0.0
  %182 = vmatpush1.msra.mxu0 0.0
  %183 = vmatprep.subr.mxu0 0.0
  %184 = vmatpush1.msra.mxu0 0.0
  %185 = vmatprep.subr.mxu0 0.0
  %186 = vmatpush1.msra.mxu0 0.0
  %187 = vmatprep.subr.mxu0 0.0
  %188 = vmatpush1.msra.mxu0 0.0
  %189 = vmatprep.subr.mxu0 0.0
  %190 = vmatpush1.msra.mxu0 0.0
  %191 = vmatprep.subr.mxu0 0.0
  %192 = vmatpush1.msra.mxu0 0.0
  %193 = vmatprep.subr.mxu0 0.0
  %194 = vmatpush1.msra.mxu0 0.0
  %195 = vmatprep.subr.mxu0 0.0
  %196 = vmatpush1.msra.mxu0 0.0
  %197 = vmatprep.subr.mxu0 0.0
  %198 = vmatpush1.msra.mxu0 0.0
  %199 = vmatprep.subr.mxu0 0.0
  %200 = vmatpush1.msra.mxu0 0.0
  %201 = vmatprep.subr.mxu0 0.0
  %202 = vmatpush1.msra.mxu0 0.0
  %203 = vmatprep.subr.mxu0 0.0
  %204 = vmatpush1.msra.mxu0 0.0
  %205 = vmatprep.subr.mxu0 0.0
  %206 = vmatpush1.msra.mxu0 0.0
  %207 = vmatprep.subr.mxu0 0.0
  %208 = vmatpush1.msra.mxu0 0.0
  %209 = vmatprep.subr.mxu0 0.0
  %210 = vmatpush1.msra.mxu0 0.0
  %211 = vmatprep.subr.mxu0 0.0
  %212 = vmatpush1.msra.mxu0 0.0
  %213 = vmatprep.subr.mxu0 0.0
  %214 = vmatpush1.msra.mxu0 0.0
  %215 = vmatprep.subr.mxu0 0.0
  %216 = vmatpush1.msra.mxu0 0.0
  %217 = vmatprep.subr.mxu0 0.0
  %218 = vmatpush1.msra.mxu0 0.0
  %219 = vmatprep.subr.mxu0 0.0
  %220 = vmatpush1.msra.mxu0 0.0
  %221 = vmatprep.subr.mxu0 0.0
  %222 = vmatpush1.msra.mxu0 0.0
  %223 = vmatprep.subr.mxu0 0.0
  %224 = vmatpush1.msra.mxu0 0.0
  %225 = vmatprep.mubr.f32.mxu0 0.0
  %226 = vmatmul.mubr.f32.gmra.mrb[0].mxu0 %v144
  %v227 = vpop.f32.mrb[0].mxu0
  %v228 = vadd.f32 %v141, %v227
  %v229 = vpop.f32.mrb[0].mxu0
  %230 = vmatprep.mubr.f32.mxu0 0.0
  %231 = vmatmul.mubr.f32.gmra.mrb[0].mxu0 %v147
  %v232 = vpop.f32.mrb[0].mxu0
  %v233 = vadd.f32 %v141, %v232
  %v234 = vpop.f32.mrb[0].mxu0
  %235 = vmatprep.mubr.f32.mxu0 0.0
  %236 = vmatmul.mubr.f32.gmra.mrb[0].mxu0 %v150
  %v237 = vpop.f32.mrb[0].mxu0
  %v238 = vadd.f32 %v141, %v237
  %v239 = vpop.f32.mrb[0].mxu0
  %240 = vmatprep.mubr.f32.mxu0 0.0
  %241 = vmatmul.mubr.f32.gmra.mrb[0].mxu0 %v153
  %v242 = vpop.f32.mrb[0].mxu0
  %v243 = vadd.f32 %v141, %v242
  %v244 = vpop.f32.mrb[0].mxu0
  %245 = vmatprep.mubr.f32.mxu0 0.0
  %246 = vmatmul.mubr.f32.gmra.mrb[0].mxu0 %v156
  %v247 = vpop.f32.mrb[0].mxu0
  %v248 = vadd.f32 %v141, %v247
  %v249 = vpop.f32.mrb[0].mxu0
  %250 = vmatprep.mubr.f32.mxu0 0.0
  %251 = vmatmul.mubr.f32.gmra.mrb[0].mxu0 %v159
  %v252 = vpop.f32.mrb[0].mxu0
  %v253 = vadd.f32 %v141, %v252
  %v254 = vpop.f32.mrb[0].mxu0
  %255 = vdwg.mxu0
  %256 = vst [vmem:[%s5] sm:$0xff] %v228
  %257 = vst [vmem:[%s5 + $0x8] sm:$0xff] %v233
  %258 = vst [vmem:[%s5 + $0x10] sm:$0xff] %v238
  %259 = vst [vmem:[%s5 + $0x18] sm:$0xff] %v243
  %260 = vst [vmem:[%s5 + $0x20] sm:$0xff] %v248
  %261 = vst [vmem:[%s5 + $0x28] sm:$0xff] %v253
  // Predicated region
  $region22: #{vit_forward.16} parent=0 // pred_check
    _
  $region23: #{vit_forward.16} parent=0 // pred_check_branch
    %263 = sbr.rel (0) target = $region25
  $region24: #{vit_forward.16} parent=0 // pred_region
    _
  $region25: #{vit_forward.16} parent=0 // pred_fallthru
    _
  // Predicated region
  $region26: #{vit_forward.16} parent=0 // pred_check
    _
  $region27: #{vit_forward.16} parent=0 // pred_check_branch
    %265 = sbr.rel (0) target = $region29
  $region28: #{vit_forward.16} parent=0 // pred_region
    _
  $region29: #{vit_forward.16} parent=0 // pred_fallthru
    _

// kernel: vit_forward.17
$region0: #{vit_forward.17}
  #allocation0 [shape = 'u32[]', space=smem, size = 0x4, offset = 0x4, fixed_abs, tag = 'smem constant byte address 0x4 - core index']
  #allocation1 [shape = 'u32[144,128]{1,0:T(1,128)}', space=vmem, size = 0x12000, scoped, tag = 'internal scratch']
  #allocation2 [shape = 'f32[48,32]{1,0:T(8,128)}', space=vmem, size = 0x6000, scoped, tag = 'scratch operand']
  %s0 = inlined_call_operand.vmem [shape: f32[48,128], index: 0, kind: input, shape index: {}]
  %s1 = inlined_call_operand.vmem [shape: f32[128,32], index: 1, kind: input, shape index: {}]
  %s2 = inlined_call_operand.vmem [shape: f32[1,32], index: 2, kind: input, shape index: {}]
  %s3 = inlined_call_operand.vmem [shape: f32[48,32], index: 3, kind: input, shape index: {}]
  %s4 = inlined_call_operand.vmem [shape: f32[48,32], index: 4, kind: output, shape index: {}]
  %s5 = sld [smem:[#allocation0]]
  $region34: #{vit_forward.17} parent=0
    _
  %s7 = ssub.s32 1, %s5
  %s8 = scalar_select 0, %s7, %s5
  // Predicated region
  $region2: #{vit_forward.17} parent=0 // pred_check
    _
  $region3: #{vit_forward.17} parent=0 // pred_check_branch
    %10 = sbr.rel (0) target = $region5
  $region4: #{vit_forward.17} parent=0 // pred_region
    _
  $region5: #{vit_forward.17} parent=0 // pred_fallthru
    _
  // Predicated region
  $region6: #{vit_forward.17} parent=0 // pred_check
    _
  $region7: #{vit_forward.17} parent=0 // pred_check_branch
    %12 = sbr.rel (0) target = $region9
  $region8: #{vit_forward.17} parent=0 // pred_region
    _
  $region9: #{vit_forward.17} parent=0 // pred_fallthru
    _
  // Predicated region
  $region10: #{vit_forward.17} parent=0 // pred_check
    _
  $region11: #{vit_forward.17} parent=0 // pred_check_branch
    %14 = sbr.rel (0) target = $region13
  $region12: #{vit_forward.17} parent=0 // pred_region
    _
  $region13: #{vit_forward.17} parent=0 // pred_fallthru
    _
  // Predicated region
  $region14: #{vit_forward.17} parent=0 // pred_check
    _
  $region15: #{vit_forward.17} parent=0 // pred_check_branch
    %16 = sbr.rel (0) target = $region17
  $region16: #{vit_forward.17} parent=0 // pred_region
    _
  $region17: #{vit_forward.17} parent=0 // pred_fallthru
    _
  %p17 = scmp.eq.s32.totalorder 0, 0
  // Predicated region
  $region18: #{vit_forward.17} parent=0 // pred_check
    %p18 = pneg %p17
  $region19: #{vit_forward.17} parent=0 // pred_check_branch
    %20 = sbr.rel (%p18) target = $region21
  $region20: #{vit_forward.17} parent=0 // pred_region
    %vm21 = vcmask 261120
    %22 = vst.msk [vmem:[#allocation2] sm:$0xff] %vm21, 0.0
    %23 = vst.msk [vmem:[#allocation2 + $0x8] sm:$0xff] %vm21, 0.0
    %24 = vst.msk [vmem:[#allocation2 + $0x10] sm:$0xff] %vm21, 0.0
    %25 = vst.msk [vmem:[#allocation2 + $0x18] sm:$0xff] %vm21, 0.0
    %26 = vst.msk [vmem:[#allocation2 + $0x20] sm:$0xff] %vm21, 0.0
    %27 = vst.msk [vmem:[#allocation2 + $0x28] sm:$0xff] %vm21, 0.0
  $region21: #{vit_forward.17} parent=0 // pred_fallthru
    _
  %v28 = vld [vmem:[#allocation2] sm:$0xff]
  %v29 = vld [vmem:[#allocation2 + $0x8] sm:$0xff]
  %v30 = vld [vmem:[#allocation2 + $0x10] sm:$0xff]
  %v31 = vld [vmem:[#allocation2 + $0x18] sm:$0xff]
  %v32 = vld [vmem:[#allocation2 + $0x20] sm:$0xff]
  %v33 = vld [vmem:[#allocation2 + $0x28] sm:$0xff]
  %v34 = vld [vmem:[%s0] sm:$0xff]
  %v35 = vld [vmem:[%s0 + $0x8] sm:$0xff]
  %v36 = vld [vmem:[%s0 + $0x10] sm:$0xff]
  %v37 = vld [vmem:[%s0 + $0x18] sm:$0xff]
  %v38 = vld [vmem:[%s0 + $0x20] sm:$0xff]
  %v39 = vld [vmem:[%s0 + $0x28] sm:$0xff]
  %v40 = vld [vmem:[%s1] sm:$0xff]
  %v41 = vld [vmem:[%s1 + $0x8] sm:$0xff]
  %v42 = vld [vmem:[%s1 + $0x10] sm:$0xff]
  %v43 = vld [vmem:[%s1 + $0x18] sm:$0xff]
  %v44 = vld [vmem:[%s1 + $0x20] sm:$0xff]
  %v45 = vld [vmem:[%s1 + $0x28] sm:$0xff]
  %v46 = vld [vmem:[%s1 + $0x30] sm:$0xff]
  %v47 = vld [vmem:[%s1 + $0x38] sm:$0xff]
  %v48 = vld [vmem:[%s1 + $0x40] sm:$0xff]
  %v49 = vld [vmem:[%s1 + $0x48] sm:$0xff]
  %v50 = vld [vmem:[%s1 + $0x50] sm:$0xff]
  %v51 = vld [vmem:[%s1 + $0x58] sm:$0xff]
  %v52 = vld [vmem:[%s1 + $0x60] sm:$0xff]
  %v53 = vld [vmem:[%s1 + $0x68] sm:$0xff]
  %v54 = vld [vmem:[%s1 + $0x70] sm:$0xff]
  %v55 = vld [vmem:[%s1 + $0x78] sm:$0xff]
  %56 = vmatprep.subr.mxu0 0.0
  %57 = vmatpush1.msra.mxu0 %v40
  %58 = vmatprep.subr.mxu0 0.0
  %59 = vmatpush1.msra.mxu0 %v41
  %60 = vmatprep.subr.mxu0 0.0
  %61 = vmatpush1.msra.mxu0 %v42
  %62 = vmatprep.subr.mxu0 0.0
  %63 = vmatpush1.msra.mxu0 %v43
  %64 = vmatprep.subr.mxu0 0.0
  %65 = vmatpush1.msra.mxu0 %v44
  %66 = vmatprep.subr.mxu0 0.0
  %67 = vmatpush1.msra.mxu0 %v45
  %68 = vmatprep.subr.mxu0 0.0
  %69 = vmatpush1.msra.mxu0 %v46
  %70 = vmatprep.subr.mxu0 0.0
  %71 = vmatpush1.msra.mxu0 %v47
  %72 = vmatprep.subr.mxu0 0.0
  %73 = vmatpush1.msra.mxu0 %v48
  %74 = vmatprep.subr.mxu0 0.0
  %75 = vmatpush1.msra.mxu0 %v49
  %76 = vmatprep.subr.mxu0 0.0
  %77 = vmatpush1.msra.mxu0 %v50
  %78 = vmatprep.subr.mxu0 0.0
  %79 = vmatpush1.msra.mxu0 %v51
  %80 = vmatprep.subr.mxu0 0.0
  %81 = vmatpush1.msra.mxu0 %v52
  %82 = vmatprep.subr.mxu0 0.0
  %83 = vmatpush1.msra.mxu0 %v53
  %84 = vmatprep.subr.mxu0 0.0
  %85 = vmatpush1.msra.mxu0 %v54
  %86 = vmatprep.subr.mxu0 0.0
  %87 = vmatpush1.msra.mxu0 %v55
  %88 = vmatprep.subr.mxu0 0.0
  %89 = vmatpush1.msra.mxu0 0.0
  %90 = vmatprep.subr.mxu0 0.0
  %91 = vmatpush1.msra.mxu0 0.0
  %92 = vmatprep.subr.mxu0 0.0
  %93 = vmatpush1.msra.mxu0 0.0
  %94 = vmatprep.subr.mxu0 0.0
  %95 = vmatpush1.msra.mxu0 0.0
  %96 = vmatprep.subr.mxu0 0.0
  %97 = vmatpush1.msra.mxu0 0.0
  %98 = vmatprep.subr.mxu0 0.0
  %99 = vmatpush1.msra.mxu0 0.0
  %100 = vmatprep.subr.mxu0 0.0
  %101 = vmatpush1.msra.mxu0 0.0
  %102 = vmatprep.subr.mxu0 0.0
  %103 = vmatpush1.msra.mxu0 0.0
  %104 = vmatprep.subr.mxu0 0.0
  %105 = vmatpush1.msra.mxu0 0.0
  %106 = vmatprep.subr.mxu0 0.0
  %107 = vmatpush1.msra.mxu0 0.0
  %108 = vmatprep.subr.mxu0 0.0
  %109 = vmatpush1.msra.mxu0 0.0
  %110 = vmatprep.subr.mxu0 0.0
  %111 = vmatpush1.msra.mxu0 0.0
  %112 = vmatprep.subr.mxu0 0.0
  %113 = vmatpush1.msra.mxu0 0.0
  %114 = vmatprep.subr.mxu0 0.0
  %115 = vmatpush1.msra.mxu0 0.0
  %116 = vmatprep.subr.mxu0 0.0
  %117 = vmatpush1.msra.mxu0 0.0
  %118 = vmatprep.subr.mxu0 0.0
  %119 = vmatpush1.msra.mxu0 0.0
  %120 = vmatprep.mubr.f32.mxu0 0.0
  %121 = vmatmul.mubr.f32.gmra.mrb[0].mxu0 %v34
  %v122 = vpop.f32.mrb[0].mxu0
  %v123 = vadd.f32 0.0, %v122
  %v124 = vpop.f32.mrb[0].mxu0
  %125 = vmatprep.mubr.f32.mxu0 0.0
  %126 = vmatmul.mubr.f32.gmra.mrb[0].mxu0 %v35
  %v127 = vpop.f32.mrb[0].mxu0
  %v128 = vadd.f32 0.0, %v127
  %v129 = vpop.f32.mrb[0].mxu0
  %130 = vmatprep.mubr.f32.mxu0 0.0
  %131 = vmatmul.mubr.f32.gmra.mrb[0].mxu0 %v36
  %v132 = vpop.f32.mrb[0].mxu0
  %v133 = vadd.f32 0.0, %v132
  %v134 = vpop.f32.mrb[0].mxu0
  %135 = vmatprep.mubr.f32.mxu0 0.0
  %136 = vmatmul.mubr.f32.gmra.mrb[0].mxu0 %v37
  %v137 = vpop.f32.mrb[0].mxu0
  %v138 = vadd.f32 0.0, %v137
  %v139 = vpop.f32.mrb[0].mxu0
  %140 = vmatprep.mubr.f32.mxu0 0.0
  %141 = vmatmul.mubr.f32.gmra.mrb[0].mxu0 %v38
  %v142 = vpop.f32.mrb[0].mxu0
  %v143 = vadd.f32 0.0, %v142
  %v144 = vpop.f32.mrb[0].mxu0
  %145 = vmatprep.mubr.f32.mxu0 0.0
  %146 = vmatmul.mubr.f32.gmra.mrb[0].mxu0 %v39
  %v147 = vpop.f32.mrb[0].mxu0
  %v148 = vadd.f32 0.0, %v147
  %v149 = vpop.f32.mrb[0].mxu0
  %150 = vdwg.mxu0
  %v151 = vadd.f32 %v28, %v123
  %v152 = vadd.f32 %v29, %v128
  %v153 = vadd.f32 %v30, %v133
  %v154 = vadd.f32 %v31, %v138
  %v155 = vadd.f32 %v32, %v143
  %v156 = vadd.f32 %v33, %v148
  %vm157 = vcmask 261120
  %158 = vst.msk [vmem:[#allocation2] sm:$0xff] %vm157, %v151
  %159 = vst.msk [vmem:[#allocation2 + $0x8] sm:$0xff] %vm157, %v152
  %160 = vst.msk [vmem:[#allocation2 + $0x10] sm:$0xff] %vm157, %v153
  %161 = vst.msk [vmem:[#allocation2 + $0x18] sm:$0xff] %vm157, %v154
  %162 = vst.msk [vmem:[#allocation2 + $0x20] sm:$0xff] %vm157, %v155
  %163 = vst.msk [vmem:[#allocation2 + $0x28] sm:$0xff] %vm157, %v156
  // Predicated region
  $region22: #{vit_forward.17} parent=0 // pred_check
    %p164 = pneg %p17
  $region23: #{vit_forward.17} parent=0 // pred_check_branch
    %166 = sbr.rel (%p164) target = $region25
  $region24: #{vit_forward.17} parent=0 // pred_region
    %v167 = vld [vmem:[#allocation2] sm:$0xff]
    %v168 = vld [vmem:[#allocation2 + $0x8] sm:$0xff]
    %v169 = vld [vmem:[#allocation2 + $0x10] sm:$0xff]
    %v170 = vld [vmem:[#allocation2 + $0x18] sm:$0xff]
    %v171 = vld [vmem:[#allocation2 + $0x20] sm:$0xff]
    %v172 = vld [vmem:[#allocation2 + $0x28] sm:$0xff]
    %v173 = vld [vmem:[%s2] sm:$0x1]
    %v175 = vlaneseq
    %v176 = vshrl.u32 %v175, 7
    %v177 = vsub.s32 0, %v176
    %v178 = vrot.slane %v173, %v177
    %v180 = vadd.f32 %v167, %v178
    %v181 = vadd.f32 %v168, %v178
    %v182 = vadd.f32 %v169, %v178
    %v183 = vadd.f32 %v170, %v178
    %v184 = vadd.f32 %v171, %v178
    %v185 = vadd.f32 %v172, %v178
    %v186 = vld [vmem:[%s3] sm:$0xff]
    %v187 = vld [vmem:[%s3 + $0x8] sm:$0xff]
    %v188 = vld [vmem:[%s3 + $0x10] sm:$0xff]
    %v189 = vld [vmem:[%s3 + $0x18] sm:$0xff]
    %v190 = vld [vmem:[%s3 + $0x20] sm:$0xff]
    %v191 = vld [vmem:[%s3 + $0x28] sm:$0xff]
    %v192 = vadd.f32 %v180, %v186
    %v193 = vadd.f32 %v181, %v187
    %v194 = vadd.f32 %v182, %v188
    %v195 = vadd.f32 %v183, %v189
    %v196 = vadd.f32 %v184, %v190
    %v197 = vadd.f32 %v185, %v191
    %198 = vst.msk [vmem:[%s4] sm:$0xff] %vm157, %v192
    %199 = vst.msk [vmem:[%s4 + $0x8] sm:$0xff] %vm157, %v193
    %200 = vst.msk [vmem:[%s4 + $0x10] sm:$0xff] %vm157, %v194
    %201 = vst.msk [vmem:[%s4 + $0x18] sm:$0xff] %vm157, %v195
    %202 = vst.msk [vmem:[%s4 + $0x20] sm:$0xff] %vm157, %v196
    %203 = vst.msk [vmem:[%s4 + $0x28] sm:$0xff] %vm157, %v197
  $region25: #{vit_forward.17} parent=0 // pred_fallthru
    _
  // Predicated region
  $region26: #{vit_forward.17} parent=0 // pred_check
    _
  $region27: #{vit_forward.17} parent=0 // pred_check_branch
    %205 = sbr.rel (0) target = $region29
  $region28: #{vit_forward.17} parent=0 // pred_region
    _
  $region29: #{vit_forward.17} parent=0 // pred_fallthru
    _
  // Predicated region
  $region30: #{vit_forward.17} parent=0 // pred_check
    _
  $region31: #{vit_forward.17} parent=0 // pred_check_branch
    %207 = sbr.rel (0) target = $region33
  $region32: #{vit_forward.17} parent=0 // pred_region
    _
  $region33: #{vit_forward.17} parent=0 // pred_fallthru
    _

// kernel: vit_forward.23
$region0: #{vit_forward.23}
  #allocation0 [shape = 'u32[]', space=smem, size = 0x4, offset = 0x4, fixed_abs, tag = 'smem constant byte address 0x4 - core index']
  #allocation1 [shape = 'u32[144,128]{1,0:T(1,128)}', space=vmem, size = 0x12000, scoped, tag = 'internal scratch']
  %s0 = inlined_call_operand.vmem [shape: f32[2,32], index: 0, kind: input, shape index: {}]
  %s1 = inlined_call_operand.vmem [shape: f32[1,32], index: 1, kind: input, shape index: {}]
  %s2 = inlined_call_operand.vmem [shape: f32[1,32], index: 2, kind: input, shape index: {}]
  %s3 = inlined_call_operand.vmem [shape: f32[32,8], index: 3, kind: input, shape index: {}]
  %s4 = inlined_call_operand.vmem [shape: f32[1,8], index: 4, kind: input, shape index: {}]
  %s5 = inlined_call_operand.hbm [shape: f32[2,8], index: 5, kind: output, shape index: {}]
  %s6 = sld [smem:[#allocation0]]
  $region30: #{vit_forward.23} parent=0
    _
  %s8 = ssub.s32 1, %s6
  %s9 = scalar_select 0, %s8, %s6
  $region1: #{vit_forward.23} parent=0
    #allocation2 [shape = 'u8[1024]{0}', space=vmem, size = 0x400, scoped, tag = 'output window, operand 0, single buffered']
    #allocation3 [shape = 's32[1]{0}', space=sflag, size = 0x4, scoped, tag = 'scoped memory for vit_forward.23']
    %10 = vsyncpa [#allocation3], 0
    // Predicated region
    $region2: #{vit_forward.23} parent=1 // pred_check
      _
    $region3: #{vit_forward.23} parent=1 // pred_check_branch
      %12 = sbr.rel (0) target = $region5
    $region4: #{vit_forward.23} parent=1 // pred_region
      _
    $region5: #{vit_forward.23} parent=1 // pred_fallthru
      _
    // Predicated region
    $region6: #{vit_forward.23} parent=1 // pred_check
      _
    $region7: #{vit_forward.23} parent=1 // pred_check_branch
      %14 = sbr.rel (0) target = $region9
    $region8: #{vit_forward.23} parent=1 // pred_region
      _
    $region9: #{vit_forward.23} parent=1 // pred_fallthru
      _
    // Predicated region
    $region10: #{vit_forward.23} parent=1 // pred_check
      _
    $region11: #{vit_forward.23} parent=1 // pred_check_branch
      %16 = sbr.rel (0) target = $region13
    $region12: #{vit_forward.23} parent=1 // pred_region
      _
    $region13: #{vit_forward.23} parent=1 // pred_fallthru
      _
    // Predicated region
    $region14: #{vit_forward.23} parent=1 // pred_check
      _
    $region15: #{vit_forward.23} parent=1 // pred_check_branch
      %18 = sbr.rel (0) target = $region17
    $region16: #{vit_forward.23} parent=1 // pred_region
      _
    $region17: #{vit_forward.23} parent=1 // pred_fallthru
      _
    // Predicated region
    $region18: #{vit_forward.23} parent=1 // pred_check
      _
    $region19: #{vit_forward.23} parent=1 // pred_check_branch
      %20 = sbr.rel (0) target = $region21
    $region20: #{vit_forward.23} parent=1 // pred_region
      _
    $region21: #{vit_forward.23} parent=1 // pred_fallthru
      _
    %v21 = vld [vmem:[%s0] sm:$0x3]
    %vm22 = vcmask 254976
    %v23 = vsel %vm22, %v21, 0.0
    %24 = vadd.xlane.f32.xlu0 %v23
    %v25 = vpop.xlane.xlu0 %24
    %v26 = vrcp.pop 32.0
    %v27 = vmul.f32 %v25, %v26
    %v28 = vsub.f32 %v21, %v27
    %v29 = vmul.f32 %v28, %v28
    %v30 = vsel %vm22, %v29, 0.0
    %31 = vadd.xlane.f32.xlu0 %v30
    %v32 = vpop.xlane.xlu0 %31
    %v33 = vmul.f32 %v32, %v26
    %v34 = vadd.f32 %v33, 1e-05
    %v35 = vrsqrt.pop %v34
    %v36 = vmul.f32 %v28, %v35
    %v37 = vld [vmem:[%s1] sm:$0x1]
    %v39 = vlaneseq
    %v40 = vshrl.u32 %v39, 7
    %v41 = vsub.s32 0, %v40
    %v42 = vrot.slane %v37, %v41
    %v44 = vmul.f32 %v36, %v42
    %v45 = vld [vmem:[%s2] sm:$0x1]
    %v47 = vlaneseq
    %v48 = vshrl.u32 %v47, 7
    %v49 = vsub.s32 0, %v48
    %v50 = vrot.slane %v45, %v49
    %v52 = vadd.f32 %v44, %v50
    %v53 = vld [vmem:[%s3] sm:$0xff]
    %v54 = vld [vmem:[%s3 + $0x8] sm:$0xff]
    %v55 = vld [vmem:[%s3 + $0x10] sm:$0xff]
    %v56 = vld [vmem:[%s3 + $0x18] sm:$0xff]
    %v57 = vld [vmem:[%s4] sm:$0x1]
    %v59 = vlaneseq
    %v60 = vshrl.u32 %v59, 7
    %v61 = vsub.s32 0, %v60
    %v62 = vrot.slane %v57, %v61
    %vm64 = vcmask 261120
    %v66 = vsel %vm64, %v52, 0
    %68 = vmatprep.subr.mxu0 0.0
    %69 = vmatpush1.msra.mxu0 %v53
    %70 = vmatprep.subr.mxu0 0.0
    %71 = vmatpush1.msra.mxu0 %v54
    %72 = vmatprep.subr.mxu0 0.0
    %73 = vmatpush1.msra.mxu0 %v55
    %74 = vmatprep.subr.mxu0 0.0
    %75 = vmatpush1.msra.mxu0 %v56
    %76 = vmatprep.subr.mxu0 0.0
    %77 = vmatpush1.msra.mxu0 0.0
    %78 = vmatprep.subr.mxu0 0.0
    %79 = vmatpush1.msra.mxu0 0.0
    %80 = vmatprep.subr.mxu0 0.0
    %81 = vmatpush1.msra.mxu0 0.0
    %82 = vmatprep.subr.mxu0 0.0
    %83 = vmatpush1.msra.mxu0 0.0
    %84 = vmatprep.subr.mxu0 0.0
    %85 = vmatpush1.msra.mxu0 0.0
    %86 = vmatprep.subr.mxu0 0.0
    %87 = vmatpush1.msra.mxu0 0.0
    %88 = vmatprep.subr.mxu0 0.0
    %89 = vmatpush1.msra.mxu0 0.0
    %90 = vmatprep.subr.mxu0 0.0
    %91 = vmatpush1.msra.mxu0 0.0
    %92 = vmatprep.subr.mxu0 0.0
    %93 = vmatpush1.msra.mxu0 0.0
    %94 = vmatprep.subr.mxu0 0.0
    %95 = vmatpush1.msra.mxu0 0.0
    %96 = vmatprep.subr.mxu0 0.0
    %97 = vmatpush1.msra.mxu0 0.0
    %98 = vmatprep.subr.mxu0 0.0
    %99 = vmatpush1.msra.mxu0 0.0
    %100 = vmatprep.subr.mxu0 0.0
    %101 = vmatpush1.msra.mxu0 0.0
    %102 = vmatprep.subr.mxu0 0.0
    %103 = vmatpush1.msra.mxu0 0.0
    %104 = vmatprep.subr.mxu0 0.0
    %105 = vmatpush1.msra.mxu0 0.0
    %106 = vmatprep.subr.mxu0 0.0
    %107 = vmatpush1.msra.mxu0 0.0
    %108 = vmatprep.subr.mxu0 0.0
    %109 = vmatpush1.msra.mxu0 0.0
    %110 = vmatprep.subr.mxu0 0.0
    %111 = vmatpush1.msra.mxu0 0.0
    %112 = vmatprep.subr.mxu0 0.0
    %113 = vmatpush1.msra.mxu0 0.0
    %114 = vmatprep.subr.mxu0 0.0
    %115 = vmatpush1.msra.mxu0 0.0
    %116 = vmatprep.subr.mxu0 0.0
    %117 = vmatpush1.msra.mxu0 0.0
    %118 = vmatprep.subr.mxu0 0.0
    %119 = vmatpush1.msra.mxu0 0.0
    %120 = vmatprep.subr.mxu0 0.0
    %121 = vmatpush1.msra.mxu0 0.0
    %122 = vmatprep.subr.mxu0 0.0
    %123 = vmatpush1.msra.mxu0 0.0
    %124 = vmatprep.subr.mxu0 0.0
    %125 = vmatpush1.msra.mxu0 0.0
    %126 = vmatprep.subr.mxu0 0.0
    %127 = vmatpush1.msra.mxu0 0.0
    %128 = vmatprep.subr.mxu0 0.0
    %129 = vmatpush1.msra.mxu0 0.0
    %130 = vmatprep.subr.mxu0 0.0
    %131 = vmatpush1.msra.mxu0 0.0
    %132 = vmatprep.mubr.f32.mxu0 0.0
    %133 = vmatmul.mubr.f32.gmra.mrb[0].mxu0 %v66
    %v134 = vpop.f32.mrb[0].mxu0
    %v135 = vadd.f32 %v62, %v134
    %v136 = vpop.f32.mrb[0].mxu0
    %137 = vdwg.mxu0
    %vm138 = vcmask 58368
    %139 = vst.msk [vmem:[#allocation2] sm:$0x3] %vm138, %v135
    // Predicated region
    $region22: #{vit_forward.23} parent=1 // pred_check
      _
    $region23: #{vit_forward.23} parent=1 // pred_check_branch
      %141 = sbr.rel (0) target = $region25
    $region24: #{vit_forward.23} parent=1 // pred_region
      %s143 = ssub.s32 32, 32
      %144 = vsyncadd [#allocation3], %s143
      %s146 = sshll.u32 [#allocation2], 4
      %s147 = int_to_ptr.vmem [resolvable:$true] %s146
      %149 = dma.vmem_to_hbm [thread:$0]  %s147, 32, %s5, [#allocation3]
    $region25: #{vit_forward.23} parent=1 // pred_fallthru
      _
    // Predicated region
    $region26: #{vit_forward.23} parent=1 // pred_check
      _
    $region27: #{vit_forward.23} parent=1 // pred_check_branch
      %151 = sbr.rel (0) target = $region29
    $region28: #{vit_forward.23} parent=1 // pred_region
      %152 = dma.done [#allocation3], 32
    $region29: #{vit_forward.23} parent=1 // pred_fallthru
      _
    %153 = vsyncpa [#allocation3], 1

</llo_original>
